<compile_context>
chip_gen: v7x
topology: tpu7x:2x2x1
jax: 0.10.0
libtpu: 0.0.40
codegen_flags: <defaults>
</compile_context>

<pallas_src>
import functools

import jax
import jax.numpy as jnp
from jax import lax
from jax.experimental import pallas as pl
from jax.experimental.pallas import tpu as pltpu


N_OUT = 2      # fc output features
LANES = 128    # lane-padded fc output width


# ----------------------------------------------------------------------------
# Pallas kernel (single invocation, no grid)
# ----------------------------------------------------------------------------
def _corner_lstm_kernel(
    x_ref,      # (T*Bp, D_in) bf16  time-major: step t is rows [t*Bp, (t+1)*Bp)
    wih1_ref,   # (D_in, 4H)   bf16
    b1_ref,     # (1, 4H)      f32   b_ih + b_hh, layer 1
    whh1_ref,   # (H, 4H)      bf16
    whh2_ref,   # (H, 4H)      bf16
    wih2_ref,   # (H, 4H)      bf16
    b2_ref,     # (1, 4H)      f32   b_ih + b_hh, layer 2
    wfc_ref,    # (2H, 128)    f32   fc weight, 128-lane padded; rows H:2H
                #                    pre-scaled by 1/T (mean-pool fold)
    bfc_ref,    # (1, 128)     f32
    out_ref,    # (Bp, 128)    f32
    g1_scr,     # (T*Bp, 4H)   f32   VMEM scratch: hoisted layer-1 projection
    *, T: int,
):
    Bp = out_ref.shape[0]
    H = whh1_ref.shape[0]

    # Hoisted layer-1 input projection for all time steps, parked in VMEM
    # scratch so it is not a 32-vreg live value across the unrolled loop.
    g1_scr[...] = (
        jnp.dot(x_ref[...], wih1_ref[...], preferred_element_type=jnp.float32)
        + b1_ref[...]
    )

    # Hoisted broadcast (JAX does not CSE broadcast_in_dim across unrolled
    # iterations).
    b2 = jnp.broadcast_to(b2_ref[...], (Bp, 4 * H))

    def sigmoid(x):
        # Exact identity: sigmoid(x) == 0.5 * tanh(x/2) + 0.5  (single EUP op).
        return 0.5 * jnp.tanh(0.5 * x) + 0.5

    def gates(pre):
        # PyTorch gate ordering: i, f, g, o
        i = sigmoid(pre[:, 0 * H:1 * H])
        f = sigmoid(pre[:, 1 * H:2 * H])
        g = jnp.tanh(pre[:, 2 * H:3 * H])
        o = sigmoid(pre[:, 3 * H:4 * H])
        return i, f, g, o

    h1 = jnp.zeros((Bp, H), jnp.float32)
    c1 = jnp.zeros((Bp, H), jnp.float32)
    h2 = jnp.zeros((Bp, H), jnp.float32)
    c2 = jnp.zeros((Bp, H), jnp.float32)
    hsum = jnp.zeros((Bp, H), jnp.float32)

    # Fully unrolled time loop (T is a Python constant): state stays in vregs.
    for t in range(T):
        # Aligned static slice of the precomputed layer-1 projection.
        g1_t = g1_scr[t * Bp:(t + 1) * Bp, :]

        # Layer 1: recurrent matmul against previous-step h1.
        g_hh1 = jnp.dot(h1.astype(jnp.bfloat16), whh1_ref[...],
                        preferred_element_type=jnp.float32)
        pre1 = g1_t + g_hh1
        i1, f1, gg1, o1 = gates(pre1)
        c1 = f1 * c1 + i1 * gg1
        h1 = o1 * jnp.tanh(c1)

        # Layer 2 (inter-layer dropout skipped: eval mode); recurrent matmul
        # uses previous-step h2.
        g_hh2 = jnp.dot(h2.astype(jnp.bfloat16), whh2_ref[...],
                        preferred_element_type=jnp.float32)
        pre2 = (
            jnp.dot(h1.astype(jnp.bfloat16), wih2_ref[...],
                    preferred_element_type=jnp.float32)
            + g_hh2
            + b2
        )
        i2, f2, gg2, o2 = gates(pre2)
        c2 = f2 * c2 + i2 * gg2
        h2 = o2 * jnp.tanh(c2)

        hsum = hsum + h2

    # 1/T mean-pool scale is folded into wfc rows [H:2H) at pack time, so the
    # raw running sum is used directly.
    concat = jnp.concatenate([h2, hsum], axis=1)  # (Bp, 2H)
    out_ref[...] = (
        jnp.dot(concat, wfc_ref[...], preferred_element_type=jnp.float32)
        + bfc_ref[...]
    )


# ----------------------------------------------------------------------------
# One-time parameter packing (keep out of the per-call jitted path)
# ----------------------------------------------------------------------------
def pack_params(params, T):
    H = params["whh1"].shape[0]

    # 128-lane-padded fc; fold the 1/T mean-pool scale into the bottom half.
    wfc = jnp.zeros((2 * H, LANES), jnp.float32)
    wfc = wfc.at[:H, :N_OUT].set(params["wfc"][:H])
    wfc = wfc.at[H:, :N_OUT].set(params["wfc"][H:] * (1.0 / T))
    bfc = jnp.zeros((1, LANES), jnp.float32).at[:, :N_OUT].set(params["bfc"])

    return {
        "wih1": params["wih1"].astype(jnp.bfloat16),
        "b1": params["b1"],
        "whh1": params["whh1"].astype(jnp.bfloat16),
        "whh2": params["whh2"].astype(jnp.bfloat16),
        "wih2": params["wih2"].astype(jnp.bfloat16),
        "b2": params["b2"],
        "wfc": wfc,
        "bfc": bfc,
    }


# ----------------------------------------------------------------------------
# Per-call wrapper
# ----------------------------------------------------------------------------
@jax.jit
def corner_lstm_pallas(x_btd, packed):
    """x_btd: (B, T, D_in) float32 (batch_first, like the PyTorch module)."""
    B, T, D_in = x_btd.shape
    H = packed["whh1"].shape[0]

    # Pad batch to a multiple of the f32 sublane tile (8) so every per-step
    # row slice and the final store are tile-aligned.
    Bp = -(-B // 8) * 8
    if Bp != B:
        x_btd = jnp.pad(x_btd, ((0, Bp - B), (0, 0), (0, 0)))

    # Time-major, flattened: step t occupies rows [t*Bp, (t+1)*Bp).
    x_flat = (
        jnp.transpose(x_btd, (1, 0, 2)).reshape(T * Bp, D_in).astype(jnp.bfloat16)
    )

    out = pl.pallas_call(
        functools.partial(_corner_lstm_kernel, T=T),
        out_shape=jax.ShapeDtypeStruct((Bp, LANES), jnp.float32),
        scratch_shapes=[pltpu.VMEM((T * Bp, 4 * H), jnp.float32)],
        compiler_params=pltpu.CompilerParams(vmem_limit_bytes=4 * 1024 * 1024),
    )(
        x_flat,
        packed["wih1"], packed["b1"],
        packed["whh1"], packed["whh2"],
        packed["wih2"], packed["b2"],
        packed["wfc"], packed["bfc"],
    )

    return out[:B, :N_OUT]


# ----------------------------------------------------------------------------
# Pure-JAX f32 reference (for verification)
# ----------------------------------------------------------------------------
def corner_lstm_ref(x_btd, params):
    B, T, D_in = x_btd.shape
    H = params["whh1"].shape[0]

    def cell(x_in, h, c, wih, whh, b):
        gates = x_in @ wih + h @ whh + b
        i = jax.nn.sigmoid(gates[:, 0 * H:1 * H])
        f = jax.nn.sigmoid(gates[:, 1 * H:2 * H])
        g = jnp.tanh(gates[:, 2 * H:3 * H])
        o = jax.nn.sigmoid(gates[:, 3 * H:4 * H])
        c_new = f * c + i * g
        return o * jnp.tanh(c_new), c_new

    def step(carry, x_t):
        h1, c1, h2, c2 = carry
        h1, c1 = cell(x_t, h1, c1, params["wih1"], params["whh1"], params["b1"])
        h2, c2 = cell(h1, h2, c2, params["wih2"], params["whh2"], params["b2"])
        return (h1, c1, h2, c2), h2

    zeros = jnp.zeros((B, H), jnp.float32)
    x_tbd = jnp.transpose(x_btd, (1, 0, 2))
    (_, _, h2_last, _), h2_seq = lax.scan(step, (zeros,) * 4, x_tbd)
    concat = jnp.concatenate([h2_last, h2_seq.mean(axis=0)], axis=1)
    return concat @ params["wfc"] + params["bfc"]


# ----------------------------------------------------------------------------
# Deterministic parameter init (PyTorch-style uniform(-1/sqrt(H), 1/sqrt(H)))
# ----------------------------------------------------------------------------
def init_params(key, input_size, hidden_size):
    H = hidden_size
    k_lstm = 1.0 / jnp.sqrt(H)
    k_fc = 1.0 / jnp.sqrt(2 * H)
    keys = jax.random.split(key, 12)

    def u(k, shape, bound):
        return jax.random.uniform(k, shape, jnp.float32, -bound, bound)

    return {
        # stored pre-transposed: (in_features, 4H)
        "wih1": u(keys[0], (input_size, 4 * H), k_lstm),
        "whh1": u(keys[1], (H, 4 * H), k_lstm),
        "b1": u(keys[2], (1, 4 * H), k_lstm) + u(keys[3], (1, 4 * H), k_lstm),
        "wih2": u(keys[4], (H, 4 * H), k_lstm),
        "whh2": u(keys[5], (H, 4 * H), k_lstm),
        "b2": u(keys[6], (1, 4 * H), k_lstm) + u(keys[7], (1, 4 * H), k_lstm),
        "wfc": u(keys[8], (2 * H, N_OUT), k_fc),
        "bfc": u(keys[9], (1, N_OUT), k_fc),
    }


if __name__ == "__main__":
    B, T = 4, 8
    INPUT_SIZE, HIDDEN_SIZE = 20, 128

    key = jax.random.PRNGKey(0)
    k_x, k_p = jax.random.split(key)
    x = jax.random.normal(k_x, (B, T, INPUT_SIZE), jnp.float32)
    params = init_params(k_p, INPUT_SIZE, HIDDEN_SIZE)

    # One-time parameter packing (bf16 casts, fc padding, 1/T fold).
    packed = jax.tree_util.tree_map(jnp.asarray, pack_params(params, T))

    out = corner_lstm_pallas(x, packed)
    out = jax.block_until_ready(out)

    ref = corner_lstm_ref(x, params)
    assert out.shape == (B, N_OUT), out.shape
    # bf16 weights on the MXU (f32 accumulation) vs pure-f32 reference:
    # expected max-abs error is a few 1e-3; 5e-2 tolerance catches real bugs.
    err = float(jnp.max(jnp.abs(out - ref)))
    assert err < 5e-2, f"mismatch: max abs err {err}"
    print("KERNEL_OK")
</pallas_src>

<mosaic_0001>
module attributes {stable_mosaic.version = 11 : i64} {
  func.func @_corner_lstm_kernel(%arg0: memref<64x20xbf16, #tpu.memory_space<vmem>>, %arg1: memref<20x512xbf16, #tpu.memory_space<vmem>>, %arg2: memref<1x512xf32, #tpu.memory_space<vmem>>, %arg3: memref<128x512xbf16, #tpu.memory_space<vmem>>, %arg4: memref<128x512xbf16, #tpu.memory_space<vmem>>, %arg5: memref<128x512xbf16, #tpu.memory_space<vmem>>, %arg6: memref<1x512xf32, #tpu.memory_space<vmem>>, %arg7: memref<256x128xf32, #tpu.memory_space<vmem>>, %arg8: memref<1x128xf32, #tpu.memory_space<vmem>>, %arg9: memref<8x128xf32, #tpu.memory_space<vmem>>, %arg10: memref<64x512xf32, #tpu.memory_space<vmem>>) attributes {dimension_semantics = [], scalar_prefetch = 0 : i64, scratch_operands = 1 : i64, tpu.core_type = #tpu.core_type<tc>} {
    %c0 = arith.constant 0 : index
    %c0_0 = arith.constant 0 : index
    %0 = vector.load %arg0[%c0, %c0_0] : memref<64x20xbf16, #tpu.memory_space<vmem>>, vector<64x20xbf16>
    %c0_1 = arith.constant 0 : index
    %c0_2 = arith.constant 0 : index
    %1 = vector.load %arg1[%c0_1, %c0_2] : memref<20x512xbf16, #tpu.memory_space<vmem>>, vector<20x512xbf16>
    %cst = arith.constant dense<0.000000e+00> : vector<64x512xf32>
    %2 = tpu.matmul %0, %1, %cst {dimension_numbers = #tpu.dot_dimension_numbers<[1], [0], [0], [1], [0, 0, 1, 1], [], []>} : vector<64x20xbf16>, vector<20x512xbf16>, vector<64x512xf32> -> vector<64x512xf32>
    %c0_3 = arith.constant 0 : index
    %c0_4 = arith.constant 0 : index
    %3 = vector.load %arg2[%c0_3, %c0_4] : memref<1x512xf32, #tpu.memory_space<vmem>>, vector<1x512xf32>
    %4 = vector.broadcast %3 : vector<1x512xf32> to vector<64x512xf32>
    %5 = arith.addf %2, %4 : vector<64x512xf32>
    %c0_5 = arith.constant 0 : index
    %c0_6 = arith.constant 0 : index
    %6 = vector.load %arg10[%c0_5, %c0_6] : memref<64x512xf32, #tpu.memory_space<vmem>>, vector<64x512xf32>
    tpu.vector_store %arg10[%c0_5, %c0_6], %5 {strides = array<i32>} : memref<64x512xf32, #tpu.memory_space<vmem>>, vector<64x512xf32>,
    %c0_7 = arith.constant 0 : index
    %c0_8 = arith.constant 0 : index
    %7 = vector.load %arg6[%c0_7, %c0_8] : memref<1x512xf32, #tpu.memory_space<vmem>>, vector<1x512xf32>
    %8 = vector.shape_cast %7 : vector<1x512xf32> to vector<1x512xf32>
    %9 = vector.broadcast %8 : vector<1x512xf32> to vector<8x512xf32>
    %cst_9 = arith.constant 0.000000e+00 : f32
    %10 = vector.broadcast %cst_9 : f32 to vector<8x128xf32>
    %cst_10 = arith.constant 0.000000e+00 : f32
    %11 = vector.broadcast %cst_10 : f32 to vector<8x128xf32>
    %cst_11 = arith.constant 0.000000e+00 : f32
    %12 = vector.broadcast %cst_11 : f32 to vector<8x128xf32>
    %cst_12 = arith.constant 0.000000e+00 : f32
    %13 = vector.broadcast %cst_12 : f32 to vector<8x128xf32>
    %cst_13 = arith.constant 0.000000e+00 : f32
    %14 = vector.broadcast %cst_13 : f32 to vector<8x128xf32>
    %c0_14 = arith.constant 0 : index
    %c0_15 = arith.constant 0 : index
    %15 = vector.load %arg10[%c0_14, %c0_15] : memref<64x512xf32, #tpu.memory_space<vmem>>, vector<8x512xf32>
    %16 = arith.truncf %10 : vector<8x128xf32> to vector<8x128xbf16>
    %c0_16 = arith.constant 0 : index
    %c0_17 = arith.constant 0 : index
    %17 = vector.load %arg3[%c0_16, %c0_17] : memref<128x512xbf16, #tpu.memory_space<vmem>>, vector<128x512xbf16>
    %cst_18 = arith.constant dense<0.000000e+00> : vector<8x512xf32>
    %18 = tpu.matmul %16, %17, %cst_18 {dimension_numbers = #tpu.dot_dimension_numbers<[1], [0], [0], [1], [0, 0, 1, 1], [], []>} : vector<8x128xbf16>, vector<128x512xbf16>, vector<8x512xf32> -> vector<8x512xf32>
    %19 = arith.addf %15, %18 : vector<8x512xf32>
    %20 = vector.extract_strided_slice %19 {offsets = [0, 0], sizes = [8, 128], strides = [1, 1]} : vector<8x512xf32> to vector<8x128xf32>
    %cst_19 = arith.constant 5.000000e-01 : f32
    %21 = vector.broadcast %cst_19 : f32 to vector<8x128xf32>
    %22 = arith.mulf %21, %20 : vector<8x128xf32>
    %23 = math.tanh %22 : vector<8x128xf32>
    %cst_20 = arith.constant 5.000000e-01 : f32
    %24 = vector.broadcast %cst_20 : f32 to vector<8x128xf32>
    %25 = arith.mulf %24, %23 : vector<8x128xf32>
    %cst_21 = arith.constant 5.000000e-01 : f32
    %26 = vector.broadcast %cst_21 : f32 to vector<8x128xf32>
    %27 = arith.addf %25, %26 : vector<8x128xf32>
    %28 = vector.extract_strided_slice %19 {offsets = [0, 128], sizes = [8, 128], strides = [1, 1]} : vector<8x512xf32> to vector<8x128xf32>
    %cst_22 = arith.constant 5.000000e-01 : f32
    %29 = vector.broadcast %cst_22 : f32 to vector<8x128xf32>
    %30 = arith.mulf %29, %28 : vector<8x128xf32>
    %31 = math.tanh %30 : vector<8x128xf32>
    %cst_23 = arith.constant 5.000000e-01 : f32
    %32 = vector.broadcast %cst_23 : f32 to vector<8x128xf32>
    %33 = arith.mulf %32, %31 : vector<8x128xf32>
    %cst_24 = arith.constant 5.000000e-01 : f32
    %34 = vector.broadcast %cst_24 : f32 to vector<8x128xf32>
    %35 = arith.addf %33, %34 : vector<8x128xf32>
    %36 = vector.extract_strided_slice %19 {offsets = [0, 256], sizes = [8, 128], strides = [1, 1]} : vector<8x512xf32> to vector<8x128xf32>
    %37 = math.tanh %36 : vector<8x128xf32>
    %38 = vector.extract_strided_slice %19 {offsets = [0, 384], sizes = [8, 128], strides = [1, 1]} : vector<8x512xf32> to vector<8x128xf32>
    %cst_25 = arith.constant 5.000000e-01 : f32
    %39 = vector.broadcast %cst_25 : f32 to vector<8x128xf32>
    %40 = arith.mulf %39, %38 : vector<8x128xf32>
    %41 = math.tanh %40 : vector<8x128xf32>
    %cst_26 = arith.constant 5.000000e-01 : f32
    %42 = vector.broadcast %cst_26 : f32 to vector<8x128xf32>
    %43 = arith.mulf %42, %41 : vector<8x128xf32>
    %cst_27 = arith.constant 5.000000e-01 : f32
    %44 = vector.broadcast %cst_27 : f32 to vector<8x128xf32>
    %45 = arith.addf %43, %44 : vector<8x128xf32>
    %46 = arith.mulf %35, %11 : vector<8x128xf32>
    %47 = arith.mulf %27, %37 : vector<8x128xf32>
    %48 = arith.addf %46, %47 : vector<8x128xf32>
    %49 = math.tanh %48 : vector<8x128xf32>
    %50 = arith.mulf %45, %49 : vector<8x128xf32>
    %51 = arith.truncf %12 : vector<8x128xf32> to vector<8x128xbf16>
    %c0_28 = arith.constant 0 : index
    %c0_29 = arith.constant 0 : index
    %52 = vector.load %arg4[%c0_28, %c0_29] : memref<128x512xbf16, #tpu.memory_space<vmem>>, vector<128x512xbf16>
    %cst_30 = arith.constant dense<0.000000e+00> : vector<8x512xf32>
    %53 = tpu.matmul %51, %52, %cst_30 {dimension_numbers = #tpu.dot_dimension_numbers<[1], [0], [0], [1], [0, 0, 1, 1], [], []>} : vector<8x128xbf16>, vector<128x512xbf16>, vector<8x512xf32> -> vector<8x512xf32>
    %54 = arith.truncf %50 : vector<8x128xf32> to vector<8x128xbf16>
    %c0_31 = arith.constant 0 : index
    %c0_32 = arith.constant 0 : index
    %55 = vector.load %arg5[%c0_31, %c0_32] : memref<128x512xbf16, #tpu.memory_space<vmem>>, vector<128x512xbf16>
    %cst_33 = arith.constant dense<0.000000e+00> : vector<8x512xf32>
    %56 = tpu.matmul %54, %55, %cst_33 {dimension_numbers = #tpu.dot_dimension_numbers<[1], [0], [0], [1], [0, 0, 1, 1], [], []>} : vector<8x128xbf16>, vector<128x512xbf16>, vector<8x512xf32> -> vector<8x512xf32>
    %57 = arith.addf %56, %53 : vector<8x512xf32>
    %58 = arith.addf %57, %9 : vector<8x512xf32>
    %59 = vector.extract_strided_slice %58 {offsets = [0, 0], sizes = [8, 128], strides = [1, 1]} : vector<8x512xf32> to vector<8x128xf32>
    %cst_34 = arith.constant 5.000000e-01 : f32
    %60 = vector.broadcast %cst_34 : f32 to vector<8x128xf32>
    %61 = arith.mulf %60, %59 : vector<8x128xf32>
    %62 = math.tanh %61 : vector<8x128xf32>
    %cst_35 = arith.constant 5.000000e-01 : f32
    %63 = vector.broadcast %cst_35 : f32 to vector<8x128xf32>
    %64 = arith.mulf %63, %62 : vector<8x128xf32>
    %cst_36 = arith.constant 5.000000e-01 : f32
    %65 = vector.broadcast %cst_36 : f32 to vector<8x128xf32>
    %66 = arith.addf %64, %65 : vector<8x128xf32>
    %67 = vector.extract_strided_slice %58 {offsets = [0, 128], sizes = [8, 128], strides = [1, 1]} : vector<8x512xf32> to vector<8x128xf32>
    %cst_37 = arith.constant 5.000000e-01 : f32
    %68 = vector.broadcast %cst_37 : f32 to vector<8x128xf32>
    %69 = arith.mulf %68, %67 : vector<8x128xf32>
    %70 = math.tanh %69 : vector<8x128xf32>
    %cst_38 = arith.constant 5.000000e-01 : f32
    %71 = vector.broadcast %cst_38 : f32 to vector<8x128xf32>
    %72 = arith.mulf %71, %70 : vector<8x128xf32>
    %cst_39 = arith.constant 5.000000e-01 : f32
    %73 = vector.broadcast %cst_39 : f32 to vector<8x128xf32>
    %74 = arith.addf %72, %73 : vector<8x128xf32>
    %75 = vector.extract_strided_slice %58 {offsets = [0, 256], sizes = [8, 128], strides = [1, 1]} : vector<8x512xf32> to vector<8x128xf32>
    %76 = math.tanh %75 : vector<8x128xf32>
    %77 = vector.extract_strided_slice %58 {offsets = [0, 384], sizes = [8, 128], strides = [1, 1]} : vector<8x512xf32> to vector<8x128xf32>
    %cst_40 = arith.constant 5.000000e-01 : f32
    %78 = vector.broadcast %cst_40 : f32 to vector<8x128xf32>
    %79 = arith.mulf %78, %77 : vector<8x128xf32>
    %80 = math.tanh %79 : vector<8x128xf32>
    %cst_41 = arith.constant 5.000000e-01 : f32
    %81 = vector.broadcast %cst_41 : f32 to vector<8x128xf32>
    %82 = arith.mulf %81, %80 : vector<8x128xf32>
    %cst_42 = arith.constant 5.000000e-01 : f32
    %83 = vector.broadcast %cst_42 : f32 to vector<8x128xf32>
    %84 = arith.addf %82, %83 : vector<8x128xf32>
    %85 = arith.mulf %74, %13 : vector<8x128xf32>
    %86 = arith.mulf %66, %76 : vector<8x128xf32>
    %87 = arith.addf %85, %86 : vector<8x128xf32>
    %88 = math.tanh %87 : vector<8x128xf32>
    %89 = arith.mulf %84, %88 : vector<8x128xf32>
    %90 = arith.addf %14, %89 : vector<8x128xf32>
    %c8 = arith.constant 8 : index
    %c0_43 = arith.constant 0 : index
    %91 = vector.load %arg10[%c8, %c0_43] : memref<64x512xf32, #tpu.memory_space<vmem>>, vector<8x512xf32>
    %92 = arith.truncf %50 : vector<8x128xf32> to vector<8x128xbf16>
    %c0_44 = arith.constant 0 : index
    %c0_45 = arith.constant 0 : index
    %93 = vector.load %arg3[%c0_44, %c0_45] : memref<128x512xbf16, #tpu.memory_space<vmem>>, vector<128x512xbf16>
    %cst_46 = arith.constant dense<0.000000e+00> : vector<8x512xf32>
    %94 = tpu.matmul %92, %93, %cst_46 {dimension_numbers = #tpu.dot_dimension_numbers<[1], [0], [0], [1], [0, 0, 1, 1], [], []>} : vector<8x128xbf16>, vector<128x512xbf16>, vector<8x512xf32> -> vector<8x512xf32>
    %95 = arith.addf %91, %94 : vector<8x512xf32>
    %96 = vector.extract_strided_slice %95 {offsets = [0, 0], sizes = [8, 128], strides = [1, 1]} : vector<8x512xf32> to vector<8x128xf32>
    %cst_47 = arith.constant 5.000000e-01 : f32
    %97 = vector.broadcast %cst_47 : f32 to vector<8x128xf32>
    %98 = arith.mulf %97, %96 : vector<8x128xf32>
    %99 = math.tanh %98 : vector<8x128xf32>
    %cst_48 = arith.constant 5.000000e-01 : f32
    %100 = vector.broadcast %cst_48 : f32 to vector<8x128xf32>
    %101 = arith.mulf %100, %99 : vector<8x128xf32>
    %cst_49 = arith.constant 5.000000e-01 : f32
    %102 = vector.broadcast %cst_49 : f32 to vector<8x128xf32>
    %103 = arith.addf %101, %102 : vector<8x128xf32>
    %104 = vector.extract_strided_slice %95 {offsets = [0, 128], sizes = [8, 128], strides = [1, 1]} : vector<8x512xf32> to vector<8x128xf32>
    %cst_50 = arith.constant 5.000000e-01 : f32
    %105 = vector.broadcast %cst_50 : f32 to vector<8x128xf32>
    %106 = arith.mulf %105, %104 : vector<8x128xf32>
    %107 = math.tanh %106 : vector<8x128xf32>
    %cst_51 = arith.constant 5.000000e-01 : f32
    %108 = vector.broadcast %cst_51 : f32 to vector<8x128xf32>
    %109 = arith.mulf %108, %107 : vector<8x128xf32>
    %cst_52 = arith.constant 5.000000e-01 : f32
    %110 = vector.broadcast %cst_52 : f32 to vector<8x128xf32>
    %111 = arith.addf %109, %110 : vector<8x128xf32>
    %112 = vector.extract_strided_slice %95 {offsets = [0, 256], sizes = [8, 128], strides = [1, 1]} : vector<8x512xf32> to vector<8x128xf32>
    %113 = math.tanh %112 : vector<8x128xf32>
    %114 = vector.extract_strided_slice %95 {offsets = [0, 384], sizes = [8, 128], strides = [1, 1]} : vector<8x512xf32> to vector<8x128xf32>
    %cst_53 = arith.constant 5.000000e-01 : f32
    %115 = vector.broadcast %cst_53 : f32 to vector<8x128xf32>
    %116 = arith.mulf %115, %114 : vector<8x128xf32>
    %117 = math.tanh %116 : vector<8x128xf32>
    %cst_54 = arith.constant 5.000000e-01 : f32
    %118 = vector.broadcast %cst_54 : f32 to vector<8x128xf32>
    %119 = arith.mulf %118, %117 : vector<8x128xf32>
    %cst_55 = arith.constant 5.000000e-01 : f32
    %120 = vector.broadcast %cst_55 : f32 to vector<8x128xf32>
    %121 = arith.addf %119, %120 : vector<8x128xf32>
    %122 = arith.mulf %111, %48 : vector<8x128xf32>
    %123 = arith.mulf %103, %113 : vector<8x128xf32>
    %124 = arith.addf %122, %123 : vector<8x128xf32>
    %125 = math.tanh %124 : vector<8x128xf32>
    %126 = arith.mulf %121, %125 : vector<8x128xf32>
    %127 = arith.truncf %89 : vector<8x128xf32> to vector<8x128xbf16>
    %c0_56 = arith.constant 0 : index
    %c0_57 = arith.constant 0 : index
    %128 = vector.load %arg4[%c0_56, %c0_57] : memref<128x512xbf16, #tpu.memory_space<vmem>>, vector<128x512xbf16>
    %cst_58 = arith.constant dense<0.000000e+00> : vector<8x512xf32>
    %129 = tpu.matmul %127, %128, %cst_58 {dimension_numbers = #tpu.dot_dimension_numbers<[1], [0], [0], [1], [0, 0, 1, 1], [], []>} : vector<8x128xbf16>, vector<128x512xbf16>, vector<8x512xf32> -> vector<8x512xf32>
    %130 = arith.truncf %126 : vector<8x128xf32> to vector<8x128xbf16>
    %c0_59 = arith.constant 0 : index
    %c0_60 = arith.constant 0 : index
    %131 = vector.load %arg5[%c0_59, %c0_60] : memref<128x512xbf16, #tpu.memory_space<vmem>>, vector<128x512xbf16>
    %cst_61 = arith.constant dense<0.000000e+00> : vector<8x512xf32>
    %132 = tpu.matmul %130, %131, %cst_61 {dimension_numbers = #tpu.dot_dimension_numbers<[1], [0], [0], [1], [0, 0, 1, 1], [], []>} : vector<8x128xbf16>, vector<128x512xbf16>, vector<8x512xf32> -> vector<8x512xf32>
    %133 = arith.addf %132, %129 : vector<8x512xf32>
    %134 = arith.addf %133, %9 : vector<8x512xf32>
    %135 = vector.extract_strided_slice %134 {offsets = [0, 0], sizes = [8, 128], strides = [1, 1]} : vector<8x512xf32> to vector<8x128xf32>
    %cst_62 = arith.constant 5.000000e-01 : f32
    %136 = vector.broadcast %cst_62 : f32 to vector<8x128xf32>
    %137 = arith.mulf %136, %135 : vector<8x128xf32>
    %138 = math.tanh %137 : vector<8x128xf32>
    %cst_63 = arith.constant 5.000000e-01 : f32
    %139 = vector.broadcast %cst_63 : f32 to vector<8x128xf32>
    %140 = arith.mulf %139, %138 : vector<8x128xf32>
    %cst_64 = arith.constant 5.000000e-01 : f32
    %141 = vector.broadcast %cst_64 : f32 to vector<8x128xf32>
    %142 = arith.addf %140, %141 : vector<8x128xf32>
    %143 = vector.extract_strided_slice %134 {offsets = [0, 128], sizes = [8, 128], strides = [1, 1]} : vector<8x512xf32> to vector<8x128xf32>
    %cst_65 = arith.constant 5.000000e-01 : f32
    %144 = vector.broadcast %cst_65 : f32 to vector<8x128xf32>
    %145 = arith.mulf %144, %143 : vector<8x128xf32>
    %146 = math.tanh %145 : vector<8x128xf32>
    %cst_66 = arith.constant 5.000000e-01 : f32
    %147 = vector.broadcast %cst_66 : f32 to vector<8x128xf32>
    %148 = arith.mulf %147, %146 : vector<8x128xf32>
    %cst_67 = arith.constant 5.000000e-01 : f32
    %149 = vector.broadcast %cst_67 : f32 to vector<8x128xf32>
    %150 = arith.addf %148, %149 : vector<8x128xf32>
    %151 = vector.extract_strided_slice %134 {offsets = [0, 256], sizes = [8, 128], strides = [1, 1]} : vector<8x512xf32> to vector<8x128xf32>
    %152 = math.tanh %151 : vector<8x128xf32>
    %153 = vector.extract_strided_slice %134 {offsets = [0, 384], sizes = [8, 128], strides = [1, 1]} : vector<8x512xf32> to vector<8x128xf32>
    %cst_68 = arith.constant 5.000000e-01 : f32
    %154 = vector.broadcast %cst_68 : f32 to vector<8x128xf32>
    %155 = arith.mulf %154, %153 : vector<8x128xf32>
    %156 = math.tanh %155 : vector<8x128xf32>
    %cst_69 = arith.constant 5.000000e-01 : f32
    %157 = vector.broadcast %cst_69 : f32 to vector<8x128xf32>
    %158 = arith.mulf %157, %156 : vector<8x128xf32>
    %cst_70 = arith.constant 5.000000e-01 : f32
    %159 = vector.broadcast %cst_70 : f32 to vector<8x128xf32>
    %160 = arith.addf %158, %159 : vector<8x128xf32>
    %161 = arith.mulf %150, %87 : vector<8x128xf32>
    %162 = arith.mulf %142, %152 : vector<8x128xf32>
    %163 = arith.addf %161, %162 : vector<8x128xf32>
    %164 = math.tanh %163 : vector<8x128xf32>
    %165 = arith.mulf %160, %164 : vector<8x128xf32>
    %166 = arith.addf %90, %165 : vector<8x128xf32>
    %c16 = arith.constant 16 : index
    %c0_71 = arith.constant 0 : index
    %167 = vector.load %arg10[%c16, %c0_71] : memref<64x512xf32, #tpu.memory_space<vmem>>, vector<8x512xf32>
    %168 = arith.truncf %126 : vector<8x128xf32> to vector<8x128xbf16>
    %c0_72 = arith.constant 0 : index
    %c0_73 = arith.constant 0 : index
    %169 = vector.load %arg3[%c0_72, %c0_73] : memref<128x512xbf16, #tpu.memory_space<vmem>>, vector<128x512xbf16>
    %cst_74 = arith.constant dense<0.000000e+00> : vector<8x512xf32>
    %170 = tpu.matmul %168, %169, %cst_74 {dimension_numbers = #tpu.dot_dimension_numbers<[1], [0], [0], [1], [0, 0, 1, 1], [], []>} : vector<8x128xbf16>, vector<128x512xbf16>, vector<8x512xf32> -> vector<8x512xf32>
    %171 = arith.addf %167, %170 : vector<8x512xf32>
    %172 = vector.extract_strided_slice %171 {offsets = [0, 0], sizes = [8, 128], strides = [1, 1]} : vector<8x512xf32> to vector<8x128xf32>
    %cst_75 = arith.constant 5.000000e-01 : f32
    %173 = vector.broadcast %cst_75 : f32 to vector<8x128xf32>
    %174 = arith.mulf %173, %172 : vector<8x128xf32>
    %175 = math.tanh %174 : vector<8x128xf32>
    %cst_76 = arith.constant 5.000000e-01 : f32
    %176 = vector.broadcast %cst_76 : f32 to vector<8x128xf32>
    %177 = arith.mulf %176, %175 : vector<8x128xf32>
    %cst_77 = arith.constant 5.000000e-01 : f32
    %178 = vector.broadcast %cst_77 : f32 to vector<8x128xf32>
    %179 = arith.addf %177, %178 : vector<8x128xf32>
    %180 = vector.extract_strided_slice %171 {offsets = [0, 128], sizes = [8, 128], strides = [1, 1]} : vector<8x512xf32> to vector<8x128xf32>
    %cst_78 = arith.constant 5.000000e-01 : f32
    %181 = vector.broadcast %cst_78 : f32 to vector<8x128xf32>
    %182 = arith.mulf %181, %180 : vector<8x128xf32>
    %183 = math.tanh %182 : vector<8x128xf32>
    %cst_79 = arith.constant 5.000000e-01 : f32
    %184 = vector.broadcast %cst_79 : f32 to vector<8x128xf32>
    %185 = arith.mulf %184, %183 : vector<8x128xf32>
    %cst_80 = arith.constant 5.000000e-01 : f32
    %186 = vector.broadcast %cst_80 : f32 to vector<8x128xf32>
    %187 = arith.addf %185, %186 : vector<8x128xf32>
    %188 = vector.extract_strided_slice %171 {offsets = [0, 256], sizes = [8, 128], strides = [1, 1]} : vector<8x512xf32> to vector<8x128xf32>
    %189 = math.tanh %188 : vector<8x128xf32>
    %190 = vector.extract_strided_slice %171 {offsets = [0, 384], sizes = [8, 128], strides = [1, 1]} : vector<8x512xf32> to vector<8x128xf32>
    %cst_81 = arith.constant 5.000000e-01 : f32
    %191 = vector.broadcast %cst_81 : f32 to vector<8x128xf32>
    %192 = arith.mulf %191, %190 : vector<8x128xf32>
    %193 = math.tanh %192 : vector<8x128xf32>
    %cst_82 = arith.constant 5.000000e-01 : f32
    %194 = vector.broadcast %cst_82 : f32 to vector<8x128xf32>
    %195 = arith.mulf %194, %193 : vector<8x128xf32>
    %cst_83 = arith.constant 5.000000e-01 : f32
    %196 = vector.broadcast %cst_83 : f32 to vector<8x128xf32>
    %197 = arith.addf %195, %196 : vector<8x128xf32>
    %198 = arith.mulf %187, %124 : vector<8x128xf32>
    %199 = arith.mulf %179, %189 : vector<8x128xf32>
    %200 = arith.addf %198, %199 : vector<8x128xf32>
    %201 = math.tanh %200 : vector<8x128xf32>
    %202 = arith.mulf %197, %201 : vector<8x128xf32>
    %203 = arith.truncf %165 : vector<8x128xf32> to vector<8x128xbf16>
    %c0_84 = arith.constant 0 : index
    %c0_85 = arith.constant 0 : index
    %204 = vector.load %arg4[%c0_84, %c0_85] : memref<128x512xbf16, #tpu.memory_space<vmem>>, vector<128x512xbf16>
    %cst_86 = arith.constant dense<0.000000e+00> : vector<8x512xf32>
    %205 = tpu.matmul %203, %204, %cst_86 {dimension_numbers = #tpu.dot_dimension_numbers<[1], [0], [0], [1], [0, 0, 1, 1], [], []>} : vector<8x128xbf16>, vector<128x512xbf16>, vector<8x512xf32> -> vector<8x512xf32>
    %206 = arith.truncf %202 : vector<8x128xf32> to vector<8x128xbf16>
    %c0_87 = arith.constant 0 : index
    %c0_88 = arith.constant 0 : index
    %207 = vector.load %arg5[%c0_87, %c0_88] : memref<128x512xbf16, #tpu.memory_space<vmem>>, vector<128x512xbf16>
    %cst_89 = arith.constant dense<0.000000e+00> : vector<8x512xf32>
    %208 = tpu.matmul %206, %207, %cst_89 {dimension_numbers = #tpu.dot_dimension_numbers<[1], [0], [0], [1], [0, 0, 1, 1], [], []>} : vector<8x128xbf16>, vector<128x512xbf16>, vector<8x512xf32> -> vector<8x512xf32>
    %209 = arith.addf %208, %205 : vector<8x512xf32>
    %210 = arith.addf %209, %9 : vector<8x512xf32>
    %211 = vector.extract_strided_slice %210 {offsets = [0, 0], sizes = [8, 128], strides = [1, 1]} : vector<8x512xf32> to vector<8x128xf32>
    %cst_90 = arith.constant 5.000000e-01 : f32
    %212 = vector.broadcast %cst_90 : f32 to vector<8x128xf32>
    %213 = arith.mulf %212, %211 : vector<8x128xf32>
    %214 = math.tanh %213 : vector<8x128xf32>
    %cst_91 = arith.constant 5.000000e-01 : f32
    %215 = vector.broadcast %cst_91 : f32 to vector<8x128xf32>
    %216 = arith.mulf %215, %214 : vector<8x128xf32>
    %cst_92 = arith.constant 5.000000e-01 : f32
    %217 = vector.broadcast %cst_92 : f32 to vector<8x128xf32>
    %218 = arith.addf %216, %217 : vector<8x128xf32>
    %219 = vector.extract_strided_slice %210 {offsets = [0, 128], sizes = [8, 128], strides = [1, 1]} : vector<8x512xf32> to vector<8x128xf32>
    %cst_93 = arith.constant 5.000000e-01 : f32
    %220 = vector.broadcast %cst_93 : f32 to vector<8x128xf32>
    %221 = arith.mulf %220, %219 : vector<8x128xf32>
    %222 = math.tanh %221 : vector<8x128xf32>
    %cst_94 = arith.constant 5.000000e-01 : f32
    %223 = vector.broadcast %cst_94 : f32 to vector<8x128xf32>
    %224 = arith.mulf %223, %222 : vector<8x128xf32>
    %cst_95 = arith.constant 5.000000e-01 : f32
    %225 = vector.broadcast %cst_95 : f32 to vector<8x128xf32>
    %226 = arith.addf %224, %225 : vector<8x128xf32>
    %227 = vector.extract_strided_slice %210 {offsets = [0, 256], sizes = [8, 128], strides = [1, 1]} : vector<8x512xf32> to vector<8x128xf32>
    %228 = math.tanh %227 : vector<8x128xf32>
    %229 = vector.extract_strided_slice %210 {offsets = [0, 384], sizes = [8, 128], strides = [1, 1]} : vector<8x512xf32> to vector<8x128xf32>
    %cst_96 = arith.constant 5.000000e-01 : f32
    %230 = vector.broadcast %cst_96 : f32 to vector<8x128xf32>
    %231 = arith.mulf %230, %229 : vector<8x128xf32>
    %232 = math.tanh %231 : vector<8x128xf32>
    %cst_97 = arith.constant 5.000000e-01 : f32
    %233 = vector.broadcast %cst_97 : f32 to vector<8x128xf32>
    %234 = arith.mulf %233, %232 : vector<8x128xf32>
    %cst_98 = arith.constant 5.000000e-01 : f32
    %235 = vector.broadcast %cst_98 : f32 to vector<8x128xf32>
    %236 = arith.addf %234, %235 : vector<8x128xf32>
    %237 = arith.mulf %226, %163 : vector<8x128xf32>
    %238 = arith.mulf %218, %228 : vector<8x128xf32>
    %239 = arith.addf %237, %238 : vector<8x128xf32>
    %240 = math.tanh %239 : vector<8x128xf32>
    %241 = arith.mulf %236, %240 : vector<8x128xf32>
    %242 = arith.addf %166, %241 : vector<8x128xf32>
    %c24 = arith.constant 24 : index
    %c0_99 = arith.constant 0 : index
    %243 = vector.load %arg10[%c24, %c0_99] : memref<64x512xf32, #tpu.memory_space<vmem>>, vector<8x512xf32>
    %244 = arith.truncf %202 : vector<8x128xf32> to vector<8x128xbf16>
    %c0_100 = arith.constant 0 : index
    %c0_101 = arith.constant 0 : index
    %245 = vector.load %arg3[%c0_100, %c0_101] : memref<128x512xbf16, #tpu.memory_space<vmem>>, vector<128x512xbf16>
    %cst_102 = arith.constant dense<0.000000e+00> : vector<8x512xf32>
    %246 = tpu.matmul %244, %245, %cst_102 {dimension_numbers = #tpu.dot_dimension_numbers<[1], [0], [0], [1], [0, 0, 1, 1], [], []>} : vector<8x128xbf16>, vector<128x512xbf16>, vector<8x512xf32> -> vector<8x512xf32>
    %247 = arith.addf %243, %246 : vector<8x512xf32>
    %248 = vector.extract_strided_slice %247 {offsets = [0, 0], sizes = [8, 128], strides = [1, 1]} : vector<8x512xf32> to vector<8x128xf32>
    %cst_103 = arith.constant 5.000000e-01 : f32
    %249 = vector.broadcast %cst_103 : f32 to vector<8x128xf32>
    %250 = arith.mulf %249, %248 : vector<8x128xf32>
    %251 = math.tanh %250 : vector<8x128xf32>
    %cst_104 = arith.constant 5.000000e-01 : f32
    %252 = vector.broadcast %cst_104 : f32 to vector<8x128xf32>
    %253 = arith.mulf %252, %251 : vector<8x128xf32>
    %cst_105 = arith.constant 5.000000e-01 : f32
    %254 = vector.broadcast %cst_105 : f32 to vector<8x128xf32>
    %255 = arith.addf %253, %254 : vector<8x128xf32>
    %256 = vector.extract_strided_slice %247 {offsets = [0, 128], sizes = [8, 128], strides = [1, 1]} : vector<8x512xf32> to vector<8x128xf32>
    %cst_106 = arith.constant 5.000000e-01 : f32
    %257 = vector.broadcast %cst_106 : f32 to vector<8x128xf32>
    %258 = arith.mulf %257, %256 : vector<8x128xf32>
    %259 = math.tanh %258 : vector<8x128xf32>
    %cst_107 = arith.constant 5.000000e-01 : f32
    %260 = vector.broadcast %cst_107 : f32 to vector<8x128xf32>
    %261 = arith.mulf %260, %259 : vector<8x128xf32>
    %cst_108 = arith.constant 5.000000e-01 : f32
    %262 = vector.broadcast %cst_108 : f32 to vector<8x128xf32>
    %263 = arith.addf %261, %262 : vector<8x128xf32>
    %264 = vector.extract_strided_slice %247 {offsets = [0, 256], sizes = [8, 128], strides = [1, 1]} : vector<8x512xf32> to vector<8x128xf32>
    %265 = math.tanh %264 : vector<8x128xf32>
    %266 = vector.extract_strided_slice %247 {offsets = [0, 384], sizes = [8, 128], strides = [1, 1]} : vector<8x512xf32> to vector<8x128xf32>
    %cst_109 = arith.constant 5.000000e-01 : f32
    %267 = vector.broadcast %cst_109 : f32 to vector<8x128xf32>
    %268 = arith.mulf %267, %266 : vector<8x128xf32>
    %269 = math.tanh %268 : vector<8x128xf32>
    %cst_110 = arith.constant 5.000000e-01 : f32
    %270 = vector.broadcast %cst_110 : f32 to vector<8x128xf32>
    %271 = arith.mulf %270, %269 : vector<8x128xf32>
    %cst_111 = arith.constant 5.000000e-01 : f32
    %272 = vector.broadcast %cst_111 : f32 to vector<8x128xf32>
    %273 = arith.addf %271, %272 : vector<8x128xf32>
    %274 = arith.mulf %263, %200 : vector<8x128xf32>
    %275 = arith.mulf %255, %265 : vector<8x128xf32>
    %276 = arith.addf %274, %275 : vector<8x128xf32>
    %277 = math.tanh %276 : vector<8x128xf32>
    %278 = arith.mulf %273, %277 : vector<8x128xf32>
    %279 = arith.truncf %241 : vector<8x128xf32> to vector<8x128xbf16>
    %c0_112 = arith.constant 0 : index
    %c0_113 = arith.constant 0 : index
    %280 = vector.load %arg4[%c0_112, %c0_113] : memref<128x512xbf16, #tpu.memory_space<vmem>>, vector<128x512xbf16>
    %cst_114 = arith.constant dense<0.000000e+00> : vector<8x512xf32>
    %281 = tpu.matmul %279, %280, %cst_114 {dimension_numbers = #tpu.dot_dimension_numbers<[1], [0], [0], [1], [0, 0, 1, 1], [], []>} : vector<8x128xbf16>, vector<128x512xbf16>, vector<8x512xf32> -> vector<8x512xf32>
    %282 = arith.truncf %278 : vector<8x128xf32> to vector<8x128xbf16>
    %c0_115 = arith.constant 0 : index
    %c0_116 = arith.constant 0 : index
    %283 = vector.load %arg5[%c0_115, %c0_116] : memref<128x512xbf16, #tpu.memory_space<vmem>>, vector<128x512xbf16>
    %cst_117 = arith.constant dense<0.000000e+00> : vector<8x512xf32>
    %284 = tpu.matmul %282, %283, %cst_117 {dimension_numbers = #tpu.dot_dimension_numbers<[1], [0], [0], [1], [0, 0, 1, 1], [], []>} : vector<8x128xbf16>, vector<128x512xbf16>, vector<8x512xf32> -> vector<8x512xf32>
    %285 = arith.addf %284, %281 : vector<8x512xf32>
    %286 = arith.addf %285, %9 : vector<8x512xf32>
    %287 = vector.extract_strided_slice %286 {offsets = [0, 0], sizes = [8, 128], strides = [1, 1]} : vector<8x512xf32> to vector<8x128xf32>
    %cst_118 = arith.constant 5.000000e-01 : f32
    %288 = vector.broadcast %cst_118 : f32 to vector<8x128xf32>
    %289 = arith.mulf %288, %287 : vector<8x128xf32>
    %290 = math.tanh %289 : vector<8x128xf32>
    %cst_119 = arith.constant 5.000000e-01 : f32
    %291 = vector.broadcast %cst_119 : f32 to vector<8x128xf32>
    %292 = arith.mulf %291, %290 : vector<8x128xf32>
    %cst_120 = arith.constant 5.000000e-01 : f32
    %293 = vector.broadcast %cst_120 : f32 to vector<8x128xf32>
    %294 = arith.addf %292, %293 : vector<8x128xf32>
    %295 = vector.extract_strided_slice %286 {offsets = [0, 128], sizes = [8, 128], strides = [1, 1]} : vector<8x512xf32> to vector<8x128xf32>
    %cst_121 = arith.constant 5.000000e-01 : f32
    %296 = vector.broadcast %cst_121 : f32 to vector<8x128xf32>
    %297 = arith.mulf %296, %295 : vector<8x128xf32>
    %298 = math.tanh %297 : vector<8x128xf32>
    %cst_122 = arith.constant 5.000000e-01 : f32
    %299 = vector.broadcast %cst_122 : f32 to vector<8x128xf32>
    %300 = arith.mulf %299, %298 : vector<8x128xf32>
    %cst_123 = arith.constant 5.000000e-01 : f32
    %301 = vector.broadcast %cst_123 : f32 to vector<8x128xf32>
    %302 = arith.addf %300, %301 : vector<8x128xf32>
    %303 = vector.extract_strided_slice %286 {offsets = [0, 256], sizes = [8, 128], strides = [1, 1]} : vector<8x512xf32> to vector<8x128xf32>
    %304 = math.tanh %303 : vector<8x128xf32>
    %305 = vector.extract_strided_slice %286 {offsets = [0, 384], sizes = [8, 128], strides = [1, 1]} : vector<8x512xf32> to vector<8x128xf32>
    %cst_124 = arith.constant 5.000000e-01 : f32
    %306 = vector.broadcast %cst_124 : f32 to vector<8x128xf32>
    %307 = arith.mulf %306, %305 : vector<8x128xf32>
    %308 = math.tanh %307 : vector<8x128xf32>
    %cst_125 = arith.constant 5.000000e-01 : f32
    %309 = vector.broadcast %cst_125 : f32 to vector<8x128xf32>
    %310 = arith.mulf %309, %308 : vector<8x128xf32>
    %cst_126 = arith.constant 5.000000e-01 : f32
    %311 = vector.broadcast %cst_126 : f32 to vector<8x128xf32>
    %312 = arith.addf %310, %311 : vector<8x128xf32>
    %313 = arith.mulf %302, %239 : vector<8x128xf32>
    %314 = arith.mulf %294, %304 : vector<8x128xf32>
    %315 = arith.addf %313, %314 : vector<8x128xf32>
    %316 = math.tanh %315 : vector<8x128xf32>
    %317 = arith.mulf %312, %316 : vector<8x128xf32>
    %318 = arith.addf %242, %317 : vector<8x128xf32>
    %c32 = arith.constant 32 : index
    %c0_127 = arith.constant 0 : index
    %319 = vector.load %arg10[%c32, %c0_127] : memref<64x512xf32, #tpu.memory_space<vmem>>, vector<8x512xf32>
    %320 = arith.truncf %278 : vector<8x128xf32> to vector<8x128xbf16>
    %c0_128 = arith.constant 0 : index
    %c0_129 = arith.constant 0 : index
    %321 = vector.load %arg3[%c0_128, %c0_129] : memref<128x512xbf16, #tpu.memory_space<vmem>>, vector<128x512xbf16>
    %cst_130 = arith.constant dense<0.000000e+00> : vector<8x512xf32>
    %322 = tpu.matmul %320, %321, %cst_130 {dimension_numbers = #tpu.dot_dimension_numbers<[1], [0], [0], [1], [0, 0, 1, 1], [], []>} : vector<8x128xbf16>, vector<128x512xbf16>, vector<8x512xf32> -> vector<8x512xf32>
    %323 = arith.addf %319, %322 : vector<8x512xf32>
    %324 = vector.extract_strided_slice %323 {offsets = [0, 0], sizes = [8, 128], strides = [1, 1]} : vector<8x512xf32> to vector<8x128xf32>
    %cst_131 = arith.constant 5.000000e-01 : f32
    %325 = vector.broadcast %cst_131 : f32 to vector<8x128xf32>
    %326 = arith.mulf %325, %324 : vector<8x128xf32>
    %327 = math.tanh %326 : vector<8x128xf32>
    %cst_132 = arith.constant 5.000000e-01 : f32
    %328 = vector.broadcast %cst_132 : f32 to vector<8x128xf32>
    %329 = arith.mulf %328, %327 : vector<8x128xf32>
    %cst_133 = arith.constant 5.000000e-01 : f32
    %330 = vector.broadcast %cst_133 : f32 to vector<8x128xf32>
    %331 = arith.addf %329, %330 : vector<8x128xf32>
    %332 = vector.extract_strided_slice %323 {offsets = [0, 128], sizes = [8, 128], strides = [1, 1]} : vector<8x512xf32> to vector<8x128xf32>
    %cst_134 = arith.constant 5.000000e-01 : f32
    %333 = vector.broadcast %cst_134 : f32 to vector<8x128xf32>
    %334 = arith.mulf %333, %332 : vector<8x128xf32>
    %335 = math.tanh %334 : vector<8x128xf32>
    %cst_135 = arith.constant 5.000000e-01 : f32
    %336 = vector.broadcast %cst_135 : f32 to vector<8x128xf32>
    %337 = arith.mulf %336, %335 : vector<8x128xf32>
    %cst_136 = arith.constant 5.000000e-01 : f32
    %338 = vector.broadcast %cst_136 : f32 to vector<8x128xf32>
    %339 = arith.addf %337, %338 : vector<8x128xf32>
    %340 = vector.extract_strided_slice %323 {offsets = [0, 256], sizes = [8, 128], strides = [1, 1]} : vector<8x512xf32> to vector<8x128xf32>
    %341 = math.tanh %340 : vector<8x128xf32>
    %342 = vector.extract_strided_slice %323 {offsets = [0, 384], sizes = [8, 128], strides = [1, 1]} : vector<8x512xf32> to vector<8x128xf32>
    %cst_137 = arith.constant 5.000000e-01 : f32
    %343 = vector.broadcast %cst_137 : f32 to vector<8x128xf32>
    %344 = arith.mulf %343, %342 : vector<8x128xf32>
    %345 = math.tanh %344 : vector<8x128xf32>
    %cst_138 = arith.constant 5.000000e-01 : f32
    %346 = vector.broadcast %cst_138 : f32 to vector<8x128xf32>
    %347 = arith.mulf %346, %345 : vector<8x128xf32>
    %cst_139 = arith.constant 5.000000e-01 : f32
    %348 = vector.broadcast %cst_139 : f32 to vector<8x128xf32>
    %349 = arith.addf %347, %348 : vector<8x128xf32>
    %350 = arith.mulf %339, %276 : vector<8x128xf32>
    %351 = arith.mulf %331, %341 : vector<8x128xf32>
    %352 = arith.addf %350, %351 : vector<8x128xf32>
    %353 = math.tanh %352 : vector<8x128xf32>
    %354 = arith.mulf %349, %353 : vector<8x128xf32>
    %355 = arith.truncf %317 : vector<8x128xf32> to vector<8x128xbf16>
    %c0_140 = arith.constant 0 : index
    %c0_141 = arith.constant 0 : index
    %356 = vector.load %arg4[%c0_140, %c0_141] : memref<128x512xbf16, #tpu.memory_space<vmem>>, vector<128x512xbf16>
    %cst_142 = arith.constant dense<0.000000e+00> : vector<8x512xf32>
    %357 = tpu.matmul %355, %356, %cst_142 {dimension_numbers = #tpu.dot_dimension_numbers<[1], [0], [0], [1], [0, 0, 1, 1], [], []>} : vector<8x128xbf16>, vector<128x512xbf16>, vector<8x512xf32> -> vector<8x512xf32>
    %358 = arith.truncf %354 : vector<8x128xf32> to vector<8x128xbf16>
    %c0_143 = arith.constant 0 : index
    %c0_144 = arith.constant 0 : index
    %359 = vector.load %arg5[%c0_143, %c0_144] : memref<128x512xbf16, #tpu.memory_space<vmem>>, vector<128x512xbf16>
    %cst_145 = arith.constant dense<0.000000e+00> : vector<8x512xf32>
    %360 = tpu.matmul %358, %359, %cst_145 {dimension_numbers = #tpu.dot_dimension_numbers<[1], [0], [0], [1], [0, 0, 1, 1], [], []>} : vector<8x128xbf16>, vector<128x512xbf16>, vector<8x512xf32> -> vector<8x512xf32>
    %361 = arith.addf %360, %357 : vector<8x512xf32>
    %362 = arith.addf %361, %9 : vector<8x512xf32>
    %363 = vector.extract_strided_slice %362 {offsets = [0, 0], sizes = [8, 128], strides = [1, 1]} : vector<8x512xf32> to vector<8x128xf32>
    %cst_146 = arith.constant 5.000000e-01 : f32
    %364 = vector.broadcast %cst_146 : f32 to vector<8x128xf32>
    %365 = arith.mulf %364, %363 : vector<8x128xf32>
    %366 = math.tanh %365 : vector<8x128xf32>
    %cst_147 = arith.constant 5.000000e-01 : f32
    %367 = vector.broadcast %cst_147 : f32 to vector<8x128xf32>
    %368 = arith.mulf %367, %366 : vector<8x128xf32>
    %cst_148 = arith.constant 5.000000e-01 : f32
    %369 = vector.broadcast %cst_148 : f32 to vector<8x128xf32>
    %370 = arith.addf %368, %369 : vector<8x128xf32>
    %371 = vector.extract_strided_slice %362 {offsets = [0, 128], sizes = [8, 128], strides = [1, 1]} : vector<8x512xf32> to vector<8x128xf32>
    %cst_149 = arith.constant 5.000000e-01 : f32
    %372 = vector.broadcast %cst_149 : f32 to vector<8x128xf32>
    %373 = arith.mulf %372, %371 : vector<8x128xf32>
    %374 = math.tanh %373 : vector<8x128xf32>
    %cst_150 = arith.constant 5.000000e-01 : f32
    %375 = vector.broadcast %cst_150 : f32 to vector<8x128xf32>
    %376 = arith.mulf %375, %374 : vector<8x128xf32>
    %cst_151 = arith.constant 5.000000e-01 : f32
    %377 = vector.broadcast %cst_151 : f32 to vector<8x128xf32>
    %378 = arith.addf %376, %377 : vector<8x128xf32>
    %379 = vector.extract_strided_slice %362 {offsets = [0, 256], sizes = [8, 128], strides = [1, 1]} : vector<8x512xf32> to vector<8x128xf32>
    %380 = math.tanh %379 : vector<8x128xf32>
    %381 = vector.extract_strided_slice %362 {offsets = [0, 384], sizes = [8, 128], strides = [1, 1]} : vector<8x512xf32> to vector<8x128xf32>
    %cst_152 = arith.constant 5.000000e-01 : f32
    %382 = vector.broadcast %cst_152 : f32 to vector<8x128xf32>
    %383 = arith.mulf %382, %381 : vector<8x128xf32>
    %384 = math.tanh %383 : vector<8x128xf32>
    %cst_153 = arith.constant 5.000000e-01 : f32
    %385 = vector.broadcast %cst_153 : f32 to vector<8x128xf32>
    %386 = arith.mulf %385, %384 : vector<8x128xf32>
    %cst_154 = arith.constant 5.000000e-01 : f32
    %387 = vector.broadcast %cst_154 : f32 to vector<8x128xf32>
    %388 = arith.addf %386, %387 : vector<8x128xf32>
    %389 = arith.mulf %378, %315 : vector<8x128xf32>
    %390 = arith.mulf %370, %380 : vector<8x128xf32>
    %391 = arith.addf %389, %390 : vector<8x128xf32>
    %392 = math.tanh %391 : vector<8x128xf32>
    %393 = arith.mulf %388, %392 : vector<8x128xf32>
    %394 = arith.addf %318, %393 : vector<8x128xf32>
    %c40 = arith.constant 40 : index
    %c0_155 = arith.constant 0 : index
    %395 = vector.load %arg10[%c40, %c0_155] : memref<64x512xf32, #tpu.memory_space<vmem>>, vector<8x512xf32>
    %396 = arith.truncf %354 : vector<8x128xf32> to vector<8x128xbf16>
    %c0_156 = arith.constant 0 : index
    %c0_157 = arith.constant 0 : index
    %397 = vector.load %arg3[%c0_156, %c0_157] : memref<128x512xbf16, #tpu.memory_space<vmem>>, vector<128x512xbf16>
    %cst_158 = arith.constant dense<0.000000e+00> : vector<8x512xf32>
    %398 = tpu.matmul %396, %397, %cst_158 {dimension_numbers = #tpu.dot_dimension_numbers<[1], [0], [0], [1], [0, 0, 1, 1], [], []>} : vector<8x128xbf16>, vector<128x512xbf16>, vector<8x512xf32> -> vector<8x512xf32>
    %399 = arith.addf %395, %398 : vector<8x512xf32>
    %400 = vector.extract_strided_slice %399 {offsets = [0, 0], sizes = [8, 128], strides = [1, 1]} : vector<8x512xf32> to vector<8x128xf32>
    %cst_159 = arith.constant 5.000000e-01 : f32
    %401 = vector.broadcast %cst_159 : f32 to vector<8x128xf32>
    %402 = arith.mulf %401, %400 : vector<8x128xf32>
    %403 = math.tanh %402 : vector<8x128xf32>
    %cst_160 = arith.constant 5.000000e-01 : f32
    %404 = vector.broadcast %cst_160 : f32 to vector<8x128xf32>
    %405 = arith.mulf %404, %403 : vector<8x128xf32>
    %cst_161 = arith.constant 5.000000e-01 : f32
    %406 = vector.broadcast %cst_161 : f32 to vector<8x128xf32>
    %407 = arith.addf %405, %406 : vector<8x128xf32>
    %408 = vector.extract_strided_slice %399 {offsets = [0, 128], sizes = [8, 128], strides = [1, 1]} : vector<8x512xf32> to vector<8x128xf32>
    %cst_162 = arith.constant 5.000000e-01 : f32
    %409 = vector.broadcast %cst_162 : f32 to vector<8x128xf32>
    %410 = arith.mulf %409, %408 : vector<8x128xf32>
    %411 = math.tanh %410 : vector<8x128xf32>
    %cst_163 = arith.constant 5.000000e-01 : f32
    %412 = vector.broadcast %cst_163 : f32 to vector<8x128xf32>
    %413 = arith.mulf %412, %411 : vector<8x128xf32>
    %cst_164 = arith.constant 5.000000e-01 : f32
    %414 = vector.broadcast %cst_164 : f32 to vector<8x128xf32>
    %415 = arith.addf %413, %414 : vector<8x128xf32>
    %416 = vector.extract_strided_slice %399 {offsets = [0, 256], sizes = [8, 128], strides = [1, 1]} : vector<8x512xf32> to vector<8x128xf32>
    %417 = math.tanh %416 : vector<8x128xf32>
    %418 = vector.extract_strided_slice %399 {offsets = [0, 384], sizes = [8, 128], strides = [1, 1]} : vector<8x512xf32> to vector<8x128xf32>
    %cst_165 = arith.constant 5.000000e-01 : f32
    %419 = vector.broadcast %cst_165 : f32 to vector<8x128xf32>
    %420 = arith.mulf %419, %418 : vector<8x128xf32>
    %421 = math.tanh %420 : vector<8x128xf32>
    %cst_166 = arith.constant 5.000000e-01 : f32
    %422 = vector.broadcast %cst_166 : f32 to vector<8x128xf32>
    %423 = arith.mulf %422, %421 : vector<8x128xf32>
    %cst_167 = arith.constant 5.000000e-01 : f32
    %424 = vector.broadcast %cst_167 : f32 to vector<8x128xf32>
    %425 = arith.addf %423, %424 : vector<8x128xf32>
    %426 = arith.mulf %415, %352 : vector<8x128xf32>
    %427 = arith.mulf %407, %417 : vector<8x128xf32>
    %428 = arith.addf %426, %427 : vector<8x128xf32>
    %429 = math.tanh %428 : vector<8x128xf32>
    %430 = arith.mulf %425, %429 : vector<8x128xf32>
    %431 = arith.truncf %393 : vector<8x128xf32> to vector<8x128xbf16>
    %c0_168 = arith.constant 0 : index
    %c0_169 = arith.constant 0 : index
    %432 = vector.load %arg4[%c0_168, %c0_169] : memref<128x512xbf16, #tpu.memory_space<vmem>>, vector<128x512xbf16>
    %cst_170 = arith.constant dense<0.000000e+00> : vector<8x512xf32>
    %433 = tpu.matmul %431, %432, %cst_170 {dimension_numbers = #tpu.dot_dimension_numbers<[1], [0], [0], [1], [0, 0, 1, 1], [], []>} : vector<8x128xbf16>, vector<128x512xbf16>, vector<8x512xf32> -> vector<8x512xf32>
    %434 = arith.truncf %430 : vector<8x128xf32> to vector<8x128xbf16>
    %c0_171 = arith.constant 0 : index
    %c0_172 = arith.constant 0 : index
    %435 = vector.load %arg5[%c0_171, %c0_172] : memref<128x512xbf16, #tpu.memory_space<vmem>>, vector<128x512xbf16>
    %cst_173 = arith.constant dense<0.000000e+00> : vector<8x512xf32>
    %436 = tpu.matmul %434, %435, %cst_173 {dimension_numbers = #tpu.dot_dimension_numbers<[1], [0], [0], [1], [0, 0, 1, 1], [], []>} : vector<8x128xbf16>, vector<128x512xbf16>, vector<8x512xf32> -> vector<8x512xf32>
    %437 = arith.addf %436, %433 : vector<8x512xf32>
    %438 = arith.addf %437, %9 : vector<8x512xf32>
    %439 = vector.extract_strided_slice %438 {offsets = [0, 0], sizes = [8, 128], strides = [1, 1]} : vector<8x512xf32> to vector<8x128xf32>
    %cst_174 = arith.constant 5.000000e-01 : f32
    %440 = vector.broadcast %cst_174 : f32 to vector<8x128xf32>
    %441 = arith.mulf %440, %439 : vector<8x128xf32>
    %442 = math.tanh %441 : vector<8x128xf32>
    %cst_175 = arith.constant 5.000000e-01 : f32
    %443 = vector.broadcast %cst_175 : f32 to vector<8x128xf32>
    %444 = arith.mulf %443, %442 : vector<8x128xf32>
    %cst_176 = arith.constant 5.000000e-01 : f32
    %445 = vector.broadcast %cst_176 : f32 to vector<8x128xf32>
    %446 = arith.addf %444, %445 : vector<8x128xf32>
    %447 = vector.extract_strided_slice %438 {offsets = [0, 128], sizes = [8, 128], strides = [1, 1]} : vector<8x512xf32> to vector<8x128xf32>
    %cst_177 = arith.constant 5.000000e-01 : f32
    %448 = vector.broadcast %cst_177 : f32 to vector<8x128xf32>
    %449 = arith.mulf %448, %447 : vector<8x128xf32>
    %450 = math.tanh %449 : vector<8x128xf32>
    %cst_178 = arith.constant 5.000000e-01 : f32
    %451 = vector.broadcast %cst_178 : f32 to vector<8x128xf32>
    %452 = arith.mulf %451, %450 : vector<8x128xf32>
    %cst_179 = arith.constant 5.000000e-01 : f32
    %453 = vector.broadcast %cst_179 : f32 to vector<8x128xf32>
    %454 = arith.addf %452, %453 : vector<8x128xf32>
    %455 = vector.extract_strided_slice %438 {offsets = [0, 256], sizes = [8, 128], strides = [1, 1]} : vector<8x512xf32> to vector<8x128xf32>
    %456 = math.tanh %455 : vector<8x128xf32>
    %457 = vector.extract_strided_slice %438 {offsets = [0, 384], sizes = [8, 128], strides = [1, 1]} : vector<8x512xf32> to vector<8x128xf32>
    %cst_180 = arith.constant 5.000000e-01 : f32
    %458 = vector.broadcast %cst_180 : f32 to vector<8x128xf32>
    %459 = arith.mulf %458, %457 : vector<8x128xf32>
    %460 = math.tanh %459 : vector<8x128xf32>
    %cst_181 = arith.constant 5.000000e-01 : f32
    %461 = vector.broadcast %cst_181 : f32 to vector<8x128xf32>
    %462 = arith.mulf %461, %460 : vector<8x128xf32>
    %cst_182 = arith.constant 5.000000e-01 : f32
    %463 = vector.broadcast %cst_182 : f32 to vector<8x128xf32>
    %464 = arith.addf %462, %463 : vector<8x128xf32>
    %465 = arith.mulf %454, %391 : vector<8x128xf32>
    %466 = arith.mulf %446, %456 : vector<8x128xf32>
    %467 = arith.addf %465, %466 : vector<8x128xf32>
    %468 = math.tanh %467 : vector<8x128xf32>
    %469 = arith.mulf %464, %468 : vector<8x128xf32>
    %470 = arith.addf %394, %469 : vector<8x128xf32>
    %c48 = arith.constant 48 : index
    %c0_183 = arith.constant 0 : index
    %471 = vector.load %arg10[%c48, %c0_183] : memref<64x512xf32, #tpu.memory_space<vmem>>, vector<8x512xf32>
    %472 = arith.truncf %430 : vector<8x128xf32> to vector<8x128xbf16>
    %c0_184 = arith.constant 0 : index
    %c0_185 = arith.constant 0 : index
    %473 = vector.load %arg3[%c0_184, %c0_185] : memref<128x512xbf16, #tpu.memory_space<vmem>>, vector<128x512xbf16>
    %cst_186 = arith.constant dense<0.000000e+00> : vector<8x512xf32>
    %474 = tpu.matmul %472, %473, %cst_186 {dimension_numbers = #tpu.dot_dimension_numbers<[1], [0], [0], [1], [0, 0, 1, 1], [], []>} : vector<8x128xbf16>, vector<128x512xbf16>, vector<8x512xf32> -> vector<8x512xf32>
    %475 = arith.addf %471, %474 : vector<8x512xf32>
    %476 = vector.extract_strided_slice %475 {offsets = [0, 0], sizes = [8, 128], strides = [1, 1]} : vector<8x512xf32> to vector<8x128xf32>
    %cst_187 = arith.constant 5.000000e-01 : f32
    %477 = vector.broadcast %cst_187 : f32 to vector<8x128xf32>
    %478 = arith.mulf %477, %476 : vector<8x128xf32>
    %479 = math.tanh %478 : vector<8x128xf32>
    %cst_188 = arith.constant 5.000000e-01 : f32
    %480 = vector.broadcast %cst_188 : f32 to vector<8x128xf32>
    %481 = arith.mulf %480, %479 : vector<8x128xf32>
    %cst_189 = arith.constant 5.000000e-01 : f32
    %482 = vector.broadcast %cst_189 : f32 to vector<8x128xf32>
    %483 = arith.addf %481, %482 : vector<8x128xf32>
    %484 = vector.extract_strided_slice %475 {offsets = [0, 128], sizes = [8, 128], strides = [1, 1]} : vector<8x512xf32> to vector<8x128xf32>
    %cst_190 = arith.constant 5.000000e-01 : f32
    %485 = vector.broadcast %cst_190 : f32 to vector<8x128xf32>
    %486 = arith.mulf %485, %484 : vector<8x128xf32>
    %487 = math.tanh %486 : vector<8x128xf32>
    %cst_191 = arith.constant 5.000000e-01 : f32
    %488 = vector.broadcast %cst_191 : f32 to vector<8x128xf32>
    %489 = arith.mulf %488, %487 : vector<8x128xf32>
    %cst_192 = arith.constant 5.000000e-01 : f32
    %490 = vector.broadcast %cst_192 : f32 to vector<8x128xf32>
    %491 = arith.addf %489, %490 : vector<8x128xf32>
    %492 = vector.extract_strided_slice %475 {offsets = [0, 256], sizes = [8, 128], strides = [1, 1]} : vector<8x512xf32> to vector<8x128xf32>
    %493 = math.tanh %492 : vector<8x128xf32>
    %494 = vector.extract_strided_slice %475 {offsets = [0, 384], sizes = [8, 128], strides = [1, 1]} : vector<8x512xf32> to vector<8x128xf32>
    %cst_193 = arith.constant 5.000000e-01 : f32
    %495 = vector.broadcast %cst_193 : f32 to vector<8x128xf32>
    %496 = arith.mulf %495, %494 : vector<8x128xf32>
    %497 = math.tanh %496 : vector<8x128xf32>
    %cst_194 = arith.constant 5.000000e-01 : f32
    %498 = vector.broadcast %cst_194 : f32 to vector<8x128xf32>
    %499 = arith.mulf %498, %497 : vector<8x128xf32>
    %cst_195 = arith.constant 5.000000e-01 : f32
    %500 = vector.broadcast %cst_195 : f32 to vector<8x128xf32>
    %501 = arith.addf %499, %500 : vector<8x128xf32>
    %502 = arith.mulf %491, %428 : vector<8x128xf32>
    %503 = arith.mulf %483, %493 : vector<8x128xf32>
    %504 = arith.addf %502, %503 : vector<8x128xf32>
    %505 = math.tanh %504 : vector<8x128xf32>
    %506 = arith.mulf %501, %505 : vector<8x128xf32>
    %507 = arith.truncf %469 : vector<8x128xf32> to vector<8x128xbf16>
    %c0_196 = arith.constant 0 : index
    %c0_197 = arith.constant 0 : index
    %508 = vector.load %arg4[%c0_196, %c0_197] : memref<128x512xbf16, #tpu.memory_space<vmem>>, vector<128x512xbf16>
    %cst_198 = arith.constant dense<0.000000e+00> : vector<8x512xf32>
    %509 = tpu.matmul %507, %508, %cst_198 {dimension_numbers = #tpu.dot_dimension_numbers<[1], [0], [0], [1], [0, 0, 1, 1], [], []>} : vector<8x128xbf16>, vector<128x512xbf16>, vector<8x512xf32> -> vector<8x512xf32>
    %510 = arith.truncf %506 : vector<8x128xf32> to vector<8x128xbf16>
    %c0_199 = arith.constant 0 : index
    %c0_200 = arith.constant 0 : index
    %511 = vector.load %arg5[%c0_199, %c0_200] : memref<128x512xbf16, #tpu.memory_space<vmem>>, vector<128x512xbf16>
    %cst_201 = arith.constant dense<0.000000e+00> : vector<8x512xf32>
    %512 = tpu.matmul %510, %511, %cst_201 {dimension_numbers = #tpu.dot_dimension_numbers<[1], [0], [0], [1], [0, 0, 1, 1], [], []>} : vector<8x128xbf16>, vector<128x512xbf16>, vector<8x512xf32> -> vector<8x512xf32>
    %513 = arith.addf %512, %509 : vector<8x512xf32>
    %514 = arith.addf %513, %9 : vector<8x512xf32>
    %515 = vector.extract_strided_slice %514 {offsets = [0, 0], sizes = [8, 128], strides = [1, 1]} : vector<8x512xf32> to vector<8x128xf32>
    %cst_202 = arith.constant 5.000000e-01 : f32
    %516 = vector.broadcast %cst_202 : f32 to vector<8x128xf32>
    %517 = arith.mulf %516, %515 : vector<8x128xf32>
    %518 = math.tanh %517 : vector<8x128xf32>
    %cst_203 = arith.constant 5.000000e-01 : f32
    %519 = vector.broadcast %cst_203 : f32 to vector<8x128xf32>
    %520 = arith.mulf %519, %518 : vector<8x128xf32>
    %cst_204 = arith.constant 5.000000e-01 : f32
    %521 = vector.broadcast %cst_204 : f32 to vector<8x128xf32>
    %522 = arith.addf %520, %521 : vector<8x128xf32>
    %523 = vector.extract_strided_slice %514 {offsets = [0, 128], sizes = [8, 128], strides = [1, 1]} : vector<8x512xf32> to vector<8x128xf32>
    %cst_205 = arith.constant 5.000000e-01 : f32
    %524 = vector.broadcast %cst_205 : f32 to vector<8x128xf32>
    %525 = arith.mulf %524, %523 : vector<8x128xf32>
    %526 = math.tanh %525 : vector<8x128xf32>
    %cst_206 = arith.constant 5.000000e-01 : f32
    %527 = vector.broadcast %cst_206 : f32 to vector<8x128xf32>
    %528 = arith.mulf %527, %526 : vector<8x128xf32>
    %cst_207 = arith.constant 5.000000e-01 : f32
    %529 = vector.broadcast %cst_207 : f32 to vector<8x128xf32>
    %530 = arith.addf %528, %529 : vector<8x128xf32>
    %531 = vector.extract_strided_slice %514 {offsets = [0, 256], sizes = [8, 128], strides = [1, 1]} : vector<8x512xf32> to vector<8x128xf32>
    %532 = math.tanh %531 : vector<8x128xf32>
    %533 = vector.extract_strided_slice %514 {offsets = [0, 384], sizes = [8, 128], strides = [1, 1]} : vector<8x512xf32> to vector<8x128xf32>
    %cst_208 = arith.constant 5.000000e-01 : f32
    %534 = vector.broadcast %cst_208 : f32 to vector<8x128xf32>
    %535 = arith.mulf %534, %533 : vector<8x128xf32>
    %536 = math.tanh %535 : vector<8x128xf32>
    %cst_209 = arith.constant 5.000000e-01 : f32
    %537 = vector.broadcast %cst_209 : f32 to vector<8x128xf32>
    %538 = arith.mulf %537, %536 : vector<8x128xf32>
    %cst_210 = arith.constant 5.000000e-01 : f32
    %539 = vector.broadcast %cst_210 : f32 to vector<8x128xf32>
    %540 = arith.addf %538, %539 : vector<8x128xf32>
    %541 = arith.mulf %530, %467 : vector<8x128xf32>
    %542 = arith.mulf %522, %532 : vector<8x128xf32>
    %543 = arith.addf %541, %542 : vector<8x128xf32>
    %544 = math.tanh %543 : vector<8x128xf32>
    %545 = arith.mulf %540, %544 : vector<8x128xf32>
    %546 = arith.addf %470, %545 : vector<8x128xf32>
    %c56 = arith.constant 56 : index
    %c0_211 = arith.constant 0 : index
    %547 = vector.load %arg10[%c56, %c0_211] : memref<64x512xf32, #tpu.memory_space<vmem>>, vector<8x512xf32>
    %548 = arith.truncf %506 : vector<8x128xf32> to vector<8x128xbf16>
    %c0_212 = arith.constant 0 : index
    %c0_213 = arith.constant 0 : index
    %549 = vector.load %arg3[%c0_212, %c0_213] : memref<128x512xbf16, #tpu.memory_space<vmem>>, vector<128x512xbf16>
    %cst_214 = arith.constant dense<0.000000e+00> : vector<8x512xf32>
    %550 = tpu.matmul %548, %549, %cst_214 {dimension_numbers = #tpu.dot_dimension_numbers<[1], [0], [0], [1], [0, 0, 1, 1], [], []>} : vector<8x128xbf16>, vector<128x512xbf16>, vector<8x512xf32> -> vector<8x512xf32>
    %551 = arith.addf %547, %550 : vector<8x512xf32>
    %552 = vector.extract_strided_slice %551 {offsets = [0, 0], sizes = [8, 128], strides = [1, 1]} : vector<8x512xf32> to vector<8x128xf32>
    %cst_215 = arith.constant 5.000000e-01 : f32
    %553 = vector.broadcast %cst_215 : f32 to vector<8x128xf32>
    %554 = arith.mulf %553, %552 : vector<8x128xf32>
    %555 = math.tanh %554 : vector<8x128xf32>
    %cst_216 = arith.constant 5.000000e-01 : f32
    %556 = vector.broadcast %cst_216 : f32 to vector<8x128xf32>
    %557 = arith.mulf %556, %555 : vector<8x128xf32>
    %cst_217 = arith.constant 5.000000e-01 : f32
    %558 = vector.broadcast %cst_217 : f32 to vector<8x128xf32>
    %559 = arith.addf %557, %558 : vector<8x128xf32>
    %560 = vector.extract_strided_slice %551 {offsets = [0, 128], sizes = [8, 128], strides = [1, 1]} : vector<8x512xf32> to vector<8x128xf32>
    %cst_218 = arith.constant 5.000000e-01 : f32
    %561 = vector.broadcast %cst_218 : f32 to vector<8x128xf32>
    %562 = arith.mulf %561, %560 : vector<8x128xf32>
    %563 = math.tanh %562 : vector<8x128xf32>
    %cst_219 = arith.constant 5.000000e-01 : f32
    %564 = vector.broadcast %cst_219 : f32 to vector<8x128xf32>
    %565 = arith.mulf %564, %563 : vector<8x128xf32>
    %cst_220 = arith.constant 5.000000e-01 : f32
    %566 = vector.broadcast %cst_220 : f32 to vector<8x128xf32>
    %567 = arith.addf %565, %566 : vector<8x128xf32>
    %568 = vector.extract_strided_slice %551 {offsets = [0, 256], sizes = [8, 128], strides = [1, 1]} : vector<8x512xf32> to vector<8x128xf32>
    %569 = math.tanh %568 : vector<8x128xf32>
    %570 = vector.extract_strided_slice %551 {offsets = [0, 384], sizes = [8, 128], strides = [1, 1]} : vector<8x512xf32> to vector<8x128xf32>
    %cst_221 = arith.constant 5.000000e-01 : f32
    %571 = vector.broadcast %cst_221 : f32 to vector<8x128xf32>
    %572 = arith.mulf %571, %570 : vector<8x128xf32>
    %573 = math.tanh %572 : vector<8x128xf32>
    %cst_222 = arith.constant 5.000000e-01 : f32
    %574 = vector.broadcast %cst_222 : f32 to vector<8x128xf32>
    %575 = arith.mulf %574, %573 : vector<8x128xf32>
    %cst_223 = arith.constant 5.000000e-01 : f32
    %576 = vector.broadcast %cst_223 : f32 to vector<8x128xf32>
    %577 = arith.addf %575, %576 : vector<8x128xf32>
    %578 = arith.mulf %567, %504 : vector<8x128xf32>
    %579 = arith.mulf %559, %569 : vector<8x128xf32>
    %580 = arith.addf %578, %579 : vector<8x128xf32>
    %581 = math.tanh %580 : vector<8x128xf32>
    %582 = arith.mulf %577, %581 : vector<8x128xf32>
    %583 = arith.truncf %545 : vector<8x128xf32> to vector<8x128xbf16>
    %c0_224 = arith.constant 0 : index
    %c0_225 = arith.constant 0 : index
    %584 = vector.load %arg4[%c0_224, %c0_225] : memref<128x512xbf16, #tpu.memory_space<vmem>>, vector<128x512xbf16>
    %cst_226 = arith.constant dense<0.000000e+00> : vector<8x512xf32>
    %585 = tpu.matmul %583, %584, %cst_226 {dimension_numbers = #tpu.dot_dimension_numbers<[1], [0], [0], [1], [0, 0, 1, 1], [], []>} : vector<8x128xbf16>, vector<128x512xbf16>, vector<8x512xf32> -> vector<8x512xf32>
    %586 = arith.truncf %582 : vector<8x128xf32> to vector<8x128xbf16>
    %c0_227 = arith.constant 0 : index
    %c0_228 = arith.constant 0 : index
    %587 = vector.load %arg5[%c0_227, %c0_228] : memref<128x512xbf16, #tpu.memory_space<vmem>>, vector<128x512xbf16>
    %cst_229 = arith.constant dense<0.000000e+00> : vector<8x512xf32>
    %588 = tpu.matmul %586, %587, %cst_229 {dimension_numbers = #tpu.dot_dimension_numbers<[1], [0], [0], [1], [0, 0, 1, 1], [], []>} : vector<8x128xbf16>, vector<128x512xbf16>, vector<8x512xf32> -> vector<8x512xf32>
    %589 = arith.addf %588, %585 : vector<8x512xf32>
    %590 = arith.addf %589, %9 : vector<8x512xf32>
    %591 = vector.extract_strided_slice %590 {offsets = [0, 0], sizes = [8, 128], strides = [1, 1]} : vector<8x512xf32> to vector<8x128xf32>
    %cst_230 = arith.constant 5.000000e-01 : f32
    %592 = vector.broadcast %cst_230 : f32 to vector<8x128xf32>
    %593 = arith.mulf %592, %591 : vector<8x128xf32>
    %594 = math.tanh %593 : vector<8x128xf32>
    %cst_231 = arith.constant 5.000000e-01 : f32
    %595 = vector.broadcast %cst_231 : f32 to vector<8x128xf32>
    %596 = arith.mulf %595, %594 : vector<8x128xf32>
    %cst_232 = arith.constant 5.000000e-01 : f32
    %597 = vector.broadcast %cst_232 : f32 to vector<8x128xf32>
    %598 = arith.addf %596, %597 : vector<8x128xf32>
    %599 = vector.extract_strided_slice %590 {offsets = [0, 128], sizes = [8, 128], strides = [1, 1]} : vector<8x512xf32> to vector<8x128xf32>
    %cst_233 = arith.constant 5.000000e-01 : f32
    %600 = vector.broadcast %cst_233 : f32 to vector<8x128xf32>
    %601 = arith.mulf %600, %599 : vector<8x128xf32>
    %602 = math.tanh %601 : vector<8x128xf32>
    %cst_234 = arith.constant 5.000000e-01 : f32
    %603 = vector.broadcast %cst_234 : f32 to vector<8x128xf32>
    %604 = arith.mulf %603, %602 : vector<8x128xf32>
    %cst_235 = arith.constant 5.000000e-01 : f32
    %605 = vector.broadcast %cst_235 : f32 to vector<8x128xf32>
    %606 = arith.addf %604, %605 : vector<8x128xf32>
    %607 = vector.extract_strided_slice %590 {offsets = [0, 256], sizes = [8, 128], strides = [1, 1]} : vector<8x512xf32> to vector<8x128xf32>
    %608 = math.tanh %607 : vector<8x128xf32>
    %609 = vector.extract_strided_slice %590 {offsets = [0, 384], sizes = [8, 128], strides = [1, 1]} : vector<8x512xf32> to vector<8x128xf32>
    %cst_236 = arith.constant 5.000000e-01 : f32
    %610 = vector.broadcast %cst_236 : f32 to vector<8x128xf32>
    %611 = arith.mulf %610, %609 : vector<8x128xf32>
    %612 = math.tanh %611 : vector<8x128xf32>
    %cst_237 = arith.constant 5.000000e-01 : f32
    %613 = vector.broadcast %cst_237 : f32 to vector<8x128xf32>
    %614 = arith.mulf %613, %612 : vector<8x128xf32>
    %cst_238 = arith.constant 5.000000e-01 : f32
    %615 = vector.broadcast %cst_238 : f32 to vector<8x128xf32>
    %616 = arith.addf %614, %615 : vector<8x128xf32>
    %617 = arith.mulf %606, %543 : vector<8x128xf32>
    %618 = arith.mulf %598, %608 : vector<8x128xf32>
    %619 = arith.addf %617, %618 : vector<8x128xf32>
    %620 = math.tanh %619 : vector<8x128xf32>
    %621 = arith.mulf %616, %620 : vector<8x128xf32>
    %622 = arith.addf %546, %621 : vector<8x128xf32>
    %623 = tpu.concatenate %621, %622 in 1 : vector<8x128xf32>, vector<8x128xf32> -> vector<8x256xf32>
    %c0_239 = arith.constant 0 : index
    %c0_240 = arith.constant 0 : index
    %624 = vector.load %arg7[%c0_239, %c0_240] : memref<256x128xf32, #tpu.memory_space<vmem>>, vector<256x128xf32>
    %cst_241 = arith.constant dense<0.000000e+00> : vector<8x128xf32>
    %625 = tpu.matmul %623, %624, %cst_241 {dimension_numbers = #tpu.dot_dimension_numbers<[1], [0], [0], [1], [0, 0, 1, 1], [], []>} : vector<8x256xf32>, vector<256x128xf32>, vector<8x128xf32> -> vector<8x128xf32>
    %c0_242 = arith.constant 0 : index
    %c0_243 = arith.constant 0 : index
    %626 = vector.load %arg8[%c0_242, %c0_243] : memref<1x128xf32, #tpu.memory_space<vmem>>, vector<1x128xf32>
    %627 = vector.broadcast %626 : vector<1x128xf32> to vector<8x128xf32>
    %628 = arith.addf %625, %627 : vector<8x128xf32>
    %c0_244 = arith.constant 0 : index
    %c0_245 = arith.constant 0 : index
    %629 = vector.load %arg9[%c0_244, %c0_245] : memref<8x128xf32, #tpu.memory_space<vmem>>, vector<8x128xf32>
    tpu.vector_store %arg9[%c0_244, %c0_245], %628 {strides = array<i32>} : memref<8x128xf32, #tpu.memory_space<vmem>>, vector<8x128xf32>,
    return
  }
}

</mosaic_0001>

<llo_original>
// kernel: corner_lstm_pallas.1
$region0: #{corner_lstm_pallas.1}
  #allocation0 [shape = 'u32[]', space=smem, size = 0x4, offset = 0x4, fixed_abs, tag = 'smem constant byte address 0x4 - core index']
  #allocation1 [shape = 'u32[144,128]{1,0:T(1,128)}', space=vmem, size = 0x12000, scoped, tag = 'internal scratch']
  #allocation2 [shape = 'f32[64,512]{1,0:T(8,128)}', space=vmem, size = 0x20000, scoped, tag = 'scratch operand']
  %s0 = inlined_call_operand.vmem [shape: bf16[64,20], index: 0, kind: input, shape index: {}]
  %s1 = inlined_call_operand.vmem [shape: bf16[20,512], index: 1, kind: input, shape index: {}]
  %s2 = inlined_call_operand.vmem [shape: f32[1,512], index: 2, kind: input, shape index: {}]
  %s3 = inlined_call_operand.hbm [shape: bf16[128,512], index: 3, kind: input, shape index: {}]
  %s4 = inlined_call_operand.hbm [shape: bf16[128,512], index: 4, kind: input, shape index: {}]
  %s5 = inlined_call_operand.hbm [shape: bf16[128,512], index: 5, kind: input, shape index: {}]
  %s6 = inlined_call_operand.vmem [shape: f32[1,512], index: 6, kind: input, shape index: {}]
  %s7 = inlined_call_operand.hbm [shape: f32[256,128], index: 7, kind: input, shape index: {}]
  %s8 = inlined_call_operand.vmem [shape: f32[1,128], index: 8, kind: input, shape index: {}]
  %s9 = inlined_call_operand.vmem [shape: f32[8,128], index: 9, kind: output, shape index: {}]
  %s10 = sld [smem:[#allocation0]]
  $region62: #{corner_lstm_pallas.1} parent=0
    _
  %s12 = ssub.s32 1, %s10
  %s13 = scalar_select 0, %s12, %s10
  $region1: #{corner_lstm_pallas.1} parent=0
    #allocation3 [shape = 'u8[131072]{0}', space=vmem, size = 0x20000, scoped, tag = 'input window, operand 3, single buffered']
    #allocation4 [shape = 's32[1]{0}', space=sflag, size = 0x4, scoped, tag = 'scoped memory for corner_lstm_pallas.1']
    #allocation5 [shape = 'u8[131072]{0}', space=vmem, size = 0x20000, scoped, tag = 'input window, operand 4, single buffered']
    #allocation6 [shape = 's32[1]{0}', space=sflag, size = 0x4, scoped, tag = 'scoped memory for corner_lstm_pallas.1']
    #allocation7 [shape = 'u8[131072]{0}', space=vmem, size = 0x20000, scoped, tag = 'input window, operand 5, single buffered']
    #allocation8 [shape = 'u8[131072]{0}', space=vmem, size = 0x20000, scoped, tag = 'input window, operand 7, single buffered']
    #allocation9 [shape = 's32[1]{0}', space=sflag, size = 0x4, scoped, tag = 'scoped memory for corner_lstm_pallas.1']
    %14 = vsyncpa [#allocation4], 0
    %15 = vsyncpa [#allocation6], 0
    %16 = vsyncpa [#allocation9], 0
    // Predicated region
    $region2: #{corner_lstm_pallas.1} parent=1 // pred_check
      _
    $region3: #{corner_lstm_pallas.1} parent=1 // pred_check_branch
      %18 = sbr.rel (0) target = $region5
    $region4: #{corner_lstm_pallas.1} parent=1 // pred_region
      _
    $region5: #{corner_lstm_pallas.1} parent=1 // pred_fallthru
      _
    // Predicated region
    $region6: #{corner_lstm_pallas.1} parent=1 // pred_check
      _
    $region7: #{corner_lstm_pallas.1} parent=1 // pred_check_branch
      %20 = sbr.rel (0) target = $region9
    $region8: #{corner_lstm_pallas.1} parent=1 // pred_region
      _
    $region9: #{corner_lstm_pallas.1} parent=1 // pred_fallthru
      _
    // Predicated region
    $region10: #{corner_lstm_pallas.1} parent=1 // pred_check
      _
    $region11: #{corner_lstm_pallas.1} parent=1 // pred_check_branch
      %22 = sbr.rel (0) target = $region13
    $region12: #{corner_lstm_pallas.1} parent=1 // pred_region
      _
    $region13: #{corner_lstm_pallas.1} parent=1 // pred_fallthru
      _
    // Predicated region
    $region14: #{corner_lstm_pallas.1} parent=1 // pred_check
      _
    $region15: #{corner_lstm_pallas.1} parent=1 // pred_check_branch
      %24 = sbr.rel (0) target = $region17
    $region16: #{corner_lstm_pallas.1} parent=1 // pred_region
      %s26 = ssub.s32 4096, 4096
      %27 = vsyncadd [#allocation4], %s26
      %s28 = sshll.u32 [#allocation3], 4
      %s29 = int_to_ptr.vmem [resolvable:$true] %s28
      %34 = dma.hbm_to_vmem [thread:$0]  %s3, 4096, %s29, [#allocation4], 256, 256, 16
    $region17: #{corner_lstm_pallas.1} parent=1 // pred_fallthru
      _
    // Predicated region
    $region18: #{corner_lstm_pallas.1} parent=1 // pred_check
      _
    $region19: #{corner_lstm_pallas.1} parent=1 // pred_check_branch
      %36 = sbr.rel (0) target = $region21
    $region20: #{corner_lstm_pallas.1} parent=1 // pred_region
      %s38 = ssub.s32 4096, 4096
      %39 = vsyncadd [#allocation6], %s38
      %s40 = sshll.u32 [#allocation5], 4
      %s41 = int_to_ptr.vmem [resolvable:$true] %s40
      %46 = dma.hbm_to_vmem [thread:$0]  %s4, 4096, %s41, [#allocation6], 256, 256, 16
    $region21: #{corner_lstm_pallas.1} parent=1 // pred_fallthru
      _
    // Predicated region
    $region22: #{corner_lstm_pallas.1} parent=1 // pred_check
      _
    $region23: #{corner_lstm_pallas.1} parent=1 // pred_check_branch
      %48 = sbr.rel (0) target = $region25
    $region24: #{corner_lstm_pallas.1} parent=1 // pred_region
      %s50 = ssub.s32 4096, 4096
      %51 = vsyncadd [#allocation6], %s50
      %s52 = sshll.u32 [#allocation7], 4
      %s53 = int_to_ptr.vmem [resolvable:$true] %s52
      %58 = dma.hbm_to_vmem [thread:$0]  %s5, 4096, %s53, [#allocation6], 256, 256, 16
    $region25: #{corner_lstm_pallas.1} parent=1 // pred_fallthru
      _
    // Predicated region
    $region26: #{corner_lstm_pallas.1} parent=1 // pred_check
      _
    $region27: #{corner_lstm_pallas.1} parent=1 // pred_check_branch
      %60 = sbr.rel (0) target = $region29
    $region28: #{corner_lstm_pallas.1} parent=1 // pred_region
      _
    $region29: #{corner_lstm_pallas.1} parent=1 // pred_fallthru
      _
    // Predicated region
    $region30: #{corner_lstm_pallas.1} parent=1 // pred_check
      _
    $region31: #{corner_lstm_pallas.1} parent=1 // pred_check_branch
      %62 = sbr.rel (0) target = $region33
    $region32: #{corner_lstm_pallas.1} parent=1 // pred_region
      %s64 = ssub.s32 4096, 4096
      %65 = vsyncadd [#allocation9], %s64
      %s66 = sshll.u32 [#allocation8], 4
      %s67 = int_to_ptr.vmem [resolvable:$true] %s66
      %72 = dma.hbm_to_vmem [thread:$0]  %s7, 4096, %s67, [#allocation9], 128, 128, 8
    $region33: #{corner_lstm_pallas.1} parent=1 // pred_fallthru
      _
    // Predicated region
    $region34: #{corner_lstm_pallas.1} parent=1 // pred_check
      _
    $region35: #{corner_lstm_pallas.1} parent=1 // pred_check_branch
      %74 = sbr.rel (0) target = $region37
    $region36: #{corner_lstm_pallas.1} parent=1 // pred_region
      _
    $region37: #{corner_lstm_pallas.1} parent=1 // pred_fallthru
      _
    // Predicated region
    $region38: #{corner_lstm_pallas.1} parent=1 // pred_check
      _
    $region39: #{corner_lstm_pallas.1} parent=1 // pred_check_branch
      %76 = sbr.rel (0) target = $region41
    $region40: #{corner_lstm_pallas.1} parent=1 // pred_region
      %77 = dma.done [#allocation4], 4096
    $region41: #{corner_lstm_pallas.1} parent=1 // pred_fallthru
      _
    // Predicated region
    $region42: #{corner_lstm_pallas.1} parent=1 // pred_check
      _
    $region43: #{corner_lstm_pallas.1} parent=1 // pred_check_branch
      %79 = sbr.rel (0) target = $region45
    $region44: #{corner_lstm_pallas.1} parent=1 // pred_region
      %80 = dma.done [#allocation6], 4096
    $region45: #{corner_lstm_pallas.1} parent=1 // pred_fallthru
      _
    // Predicated region
    $region46: #{corner_lstm_pallas.1} parent=1 // pred_check
      _
    $region47: #{corner_lstm_pallas.1} parent=1 // pred_check_branch
      %82 = sbr.rel (0) target = $region49
    $region48: #{corner_lstm_pallas.1} parent=1 // pred_region
      %83 = dma.done [#allocation6], 4096
    $region49: #{corner_lstm_pallas.1} parent=1 // pred_fallthru
      _
    // Predicated region
    $region50: #{corner_lstm_pallas.1} parent=1 // pred_check
      _
    $region51: #{corner_lstm_pallas.1} parent=1 // pred_check_branch
      %85 = sbr.rel (0) target = $region53
    $region52: #{corner_lstm_pallas.1} parent=1 // pred_region
      %86 = dma.done [#allocation9], 4096
    $region53: #{corner_lstm_pallas.1} parent=1 // pred_fallthru
      _
    %v88 = vld [vmem:[%s0] sm:$0xf]
    %v89 = vld [vmem:[%s0 + $0x4] sm:$0xf]
    %v90 = vld [vmem:[%s0 + $0x8] sm:$0xf]
    %v91 = vld [vmem:[%s0 + $0xc] sm:$0xf]
    %v92 = vld [vmem:[%s0 + $0x10] sm:$0xf]
    %v93 = vld [vmem:[%s0 + $0x14] sm:$0xf]
    %v94 = vld [vmem:[%s0 + $0x18] sm:$0xf]
    %v95 = vld [vmem:[%s0 + $0x1c] sm:$0xf]
    %v96 = vld [vmem:[%s1] sm:$0xff]
    %v97 = vld [vmem:[%s1 + $0x8] sm:$0xff]
    %v98 = vld [vmem:[%s1 + $0x10] sm:$0xff]
    %v99 = vld [vmem:[%s1 + $0x18] sm:$0xff]
    %v100 = vld [vmem:[%s1 + $0x20] sm:$0x33]
    %v101 = vld [vmem:[%s1 + $0x28] sm:$0x33]
    %v102 = vld [vmem:[%s2] sm:$0xf]
    %v104 = vlaneseq
    %v105 = vshrl.u32 %v104, 7
    %v106 = vsub.s32 0, %v105
    %v107 = vrot.slane %v102, %v106
    %v108 = vlaneseq
    %v109 = vshrl.u32 %v108, 7
    %v110 = vsub.s32 1, %v109
    %v111 = vrot.slane %v102, %v110
    %v112 = vlaneseq
    %v113 = vshrl.u32 %v112, 7
    %v114 = vsub.s32 2, %v113
    %v115 = vrot.slane %v102, %v114
    %v116 = vlaneseq
    %v117 = vshrl.u32 %v116, 7
    %v118 = vsub.s32 3, %v117
    %v119 = vrot.slane %v102, %v118
    %v132 = vunpack.c.l.b16 %v88
    %v133 = vunpack.c.l.b16 %v89
    %v134 = vunpack.c.l.b16 %v90
    %v135 = vunpack.c.l.b16 %v91
    %v136 = vunpack.c.l.b16 %v92
    %v137 = vunpack.c.l.b16 %v93
    %v138 = vunpack.c.l.b16 %v94
    %v139 = vunpack.c.l.b16 %v95
    %v140 = vpack.c.b16 %v133, %v132
    %v141 = vpack.c.b16 %v135, %v134
    %v142 = vpack.c.b16 %v137, %v136
    %v143 = vpack.c.b16 %v139, %v138
    %v150 = vunpack.c.l.b16 %v96
    %v151 = vunpack.c.h.b16 %v96
    %v152 = vunpack.c.l.b16 %v97
    %v153 = vunpack.c.h.b16 %v97
    %v154 = vunpack.c.l.b16 %v98
    %v155 = vunpack.c.h.b16 %v98
    %v156 = vunpack.c.l.b16 %v99
    %v157 = vunpack.c.h.b16 %v99
    %v158 = vunpack.c.l.b16 %v100
    %v159 = vunpack.c.h.b16 %v100
    %v160 = vunpack.c.l.b16 %v101
    %v161 = vunpack.c.h.b16 %v101
    %v162 = vpack.c.b16 %v154, %v150
    %v163 = vpack.c.b16 %v155, %v151
    %v164 = vpack.c.b16 %v156, %v152
    %v165 = vpack.c.b16 %v157, %v153
    %v166 = vpack.c.b16 %v158, %v158
    %v167 = vpack.c.b16 %v159, %v159
    %v168 = vpack.c.b16 %v160, %v160
    %v169 = vpack.c.b16 %v161, %v161
    %vm174 = vcmask 162816
    %v176 = vsel %vm174, %v140, 0
    %v179 = vsel %vm174, %v141, 0
    %v182 = vsel %vm174, %v142, 0
    %v185 = vsel %vm174, %v143, 0
    %vm187 = vcmask 1041408
    %v189 = vsel %vm187, %v166, 0
    %v192 = vsel %vm187, %v167, 0
    %v195 = vsel %vm187, %v168, 0
    %v198 = vsel %vm187, %v169, 0
    %200 = vmatprep.subr.bf16.mxu0 %v163
    %201 = vmatpush1.bf16.msra.mxu0 %v162
    %202 = vmatprep.subr.bf16.mxu0 %v192
    %203 = vmatpush1.bf16.msra.mxu0 %v189
    %204 = vmatprep.subr.bf16.mxu0 0
    %205 = vmatpush1.bf16.msra.mxu0 0
    %206 = vmatprep.subr.bf16.mxu0 0
    %207 = vmatpush1.bf16.msra.mxu0 0
    %208 = vmatprep.subr.bf16.mxu0 0
    %209 = vmatpush1.bf16.msra.mxu0 0
    %210 = vmatprep.subr.bf16.mxu0 0
    %211 = vmatpush1.bf16.msra.mxu0 0
    %212 = vmatprep.subr.bf16.mxu0 0
    %213 = vmatpush1.bf16.msra.mxu0 0
    %214 = vmatprep.subr.bf16.mxu0 0
    %215 = vmatpush1.bf16.msra.mxu0 0
    %216 = vmatprep.subr.bf16.mxu0 0
    %217 = vmatpush1.bf16.msra.mxu0 0
    %218 = vmatprep.subr.bf16.mxu0 0
    %219 = vmatpush1.bf16.msra.mxu0 0
    %220 = vmatprep.subr.bf16.mxu0 0
    %221 = vmatpush1.bf16.msra.mxu0 0
    %222 = vmatprep.subr.bf16.mxu0 0
    %223 = vmatpush1.bf16.msra.mxu0 0
    %224 = vmatprep.subr.bf16.mxu0 0
    %225 = vmatpush1.bf16.msra.mxu0 0
    %226 = vmatprep.subr.bf16.mxu0 0
    %227 = vmatpush1.bf16.msra.mxu0 0
    %228 = vmatprep.subr.bf16.mxu0 0
    %229 = vmatpush1.bf16.msra.mxu0 0
    %230 = vmatprep.subr.bf16.mxu0 0
    %231 = vmatpush1.bf16.msra.mxu0 0
    %232 = vmatprep.mubr.bf16.mxu0 0
    %233 = vmatmul.mubr.bf16.gmra.mrb[0].mxu0 %v176
    %v234 = vpop.f32.mrb[0].mxu0
    %v235 = vadd.f32 %v107, %v234
    %v236 = vpop.f32.mrb[0].mxu0
    %v237 = vadd.f32 %v111, %v236
    %v238 = vpop.f32.mrb[0].mxu0
    %v239 = vadd.f32 %v107, %v238
    %v240 = vpop.f32.mrb[0].mxu0
    %v241 = vadd.f32 %v111, %v240
    %242 = vmatprep.mubr.bf16.mxu0 0
    %243 = vmatmul.mubr.bf16.gmra.mrb[0].mxu0 %v179
    %v244 = vpop.f32.mrb[0].mxu0
    %v245 = vadd.f32 %v107, %v244
    %v246 = vpop.f32.mrb[0].mxu0
    %v247 = vadd.f32 %v111, %v246
    %v248 = vpop.f32.mrb[0].mxu0
    %v249 = vadd.f32 %v107, %v248
    %v250 = vpop.f32.mrb[0].mxu0
    %v251 = vadd.f32 %v111, %v250
    %252 = vmatprep.mubr.bf16.mxu0 0
    %253 = vmatmul.mubr.bf16.gmra.mrb[0].mxu0 %v182
    %v254 = vpop.f32.mrb[0].mxu0
    %v255 = vadd.f32 %v107, %v254
    %v256 = vpop.f32.mrb[0].mxu0
    %v257 = vadd.f32 %v111, %v256
    %v258 = vpop.f32.mrb[0].mxu0
    %v259 = vadd.f32 %v107, %v258
    %v260 = vpop.f32.mrb[0].mxu0
    %v261 = vadd.f32 %v111, %v260
    %262 = vmatprep.mubr.bf16.mxu0 0
    %263 = vmatmul.mubr.bf16.gmra.mrb[0].mxu0 %v185
    %v264 = vpop.f32.mrb[0].mxu0
    %v265 = vadd.f32 %v107, %v264
    %v266 = vpop.f32.mrb[0].mxu0
    %v267 = vadd.f32 %v111, %v266
    %v268 = vpop.f32.mrb[0].mxu0
    %v269 = vadd.f32 %v107, %v268
    %v270 = vpop.f32.mrb[0].mxu0
    %v271 = vadd.f32 %v111, %v270
    %272 = vdwg.mxu0
    %273 = vmatprep.subr.bf16.mxu0 %v165
    %274 = vmatpush1.bf16.msra.mxu0 %v164
    %275 = vmatprep.subr.bf16.mxu0 %v198
    %276 = vmatpush1.bf16.msra.mxu0 %v195
    %277 = vmatprep.subr.bf16.mxu0 0
    %278 = vmatpush1.bf16.msra.mxu0 0
    %279 = vmatprep.subr.bf16.mxu0 0
    %280 = vmatpush1.bf16.msra.mxu0 0
    %281 = vmatprep.subr.bf16.mxu0 0
    %282 = vmatpush1.bf16.msra.mxu0 0
    %283 = vmatprep.subr.bf16.mxu0 0
    %284 = vmatpush1.bf16.msra.mxu0 0
    %285 = vmatprep.subr.bf16.mxu0 0
    %286 = vmatpush1.bf16.msra.mxu0 0
    %287 = vmatprep.subr.bf16.mxu0 0
    %288 = vmatpush1.bf16.msra.mxu0 0
    %289 = vmatprep.subr.bf16.mxu0 0
    %290 = vmatpush1.bf16.msra.mxu0 0
    %291 = vmatprep.subr.bf16.mxu0 0
    %292 = vmatpush1.bf16.msra.mxu0 0
    %293 = vmatprep.subr.bf16.mxu0 0
    %294 = vmatpush1.bf16.msra.mxu0 0
    %295 = vmatprep.subr.bf16.mxu0 0
    %296 = vmatpush1.bf16.msra.mxu0 0
    %297 = vmatprep.subr.bf16.mxu0 0
    %298 = vmatpush1.bf16.msra.mxu0 0
    %299 = vmatprep.subr.bf16.mxu0 0
    %300 = vmatpush1.bf16.msra.mxu0 0
    %301 = vmatprep.subr.bf16.mxu0 0
    %302 = vmatpush1.bf16.msra.mxu0 0
    %303 = vmatprep.subr.bf16.mxu0 0
    %304 = vmatpush1.bf16.msra.mxu0 0
    %305 = vmatprep.mubr.bf16.mxu0 0
    %306 = vmatmul.mubr.bf16.gmra.mrb[0].mxu0 %v176
    %v307 = vpop.f32.mrb[0].mxu0
    %v308 = vadd.f32 %v115, %v307
    %v309 = vpop.f32.mrb[0].mxu0
    %v310 = vadd.f32 %v119, %v309
    %v311 = vpop.f32.mrb[0].mxu0
    %v312 = vadd.f32 %v115, %v311
    %v313 = vpop.f32.mrb[0].mxu0
    %v314 = vadd.f32 %v119, %v313
    %315 = vmatprep.mubr.bf16.mxu0 0
    %316 = vmatmul.mubr.bf16.gmra.mrb[0].mxu0 %v179
    %v317 = vpop.f32.mrb[0].mxu0
    %v318 = vadd.f32 %v115, %v317
    %v319 = vpop.f32.mrb[0].mxu0
    %v320 = vadd.f32 %v119, %v319
    %v321 = vpop.f32.mrb[0].mxu0
    %v322 = vadd.f32 %v115, %v321
    %v323 = vpop.f32.mrb[0].mxu0
    %v324 = vadd.f32 %v119, %v323
    %325 = vmatprep.mubr.bf16.mxu0 0
    %326 = vmatmul.mubr.bf16.gmra.mrb[0].mxu0 %v182
    %v327 = vpop.f32.mrb[0].mxu0
    %v328 = vadd.f32 %v115, %v327
    %v329 = vpop.f32.mrb[0].mxu0
    %v330 = vadd.f32 %v119, %v329
    %v331 = vpop.f32.mrb[0].mxu0
    %v332 = vadd.f32 %v115, %v331
    %v333 = vpop.f32.mrb[0].mxu0
    %v334 = vadd.f32 %v119, %v333
    %335 = vmatprep.mubr.bf16.mxu0 0
    %336 = vmatmul.mubr.bf16.gmra.mrb[0].mxu0 %v185
    %v337 = vpop.f32.mrb[0].mxu0
    %v338 = vadd.f32 %v115, %v337
    %v339 = vpop.f32.mrb[0].mxu0
    %v340 = vadd.f32 %v119, %v339
    %v341 = vpop.f32.mrb[0].mxu0
    %v342 = vadd.f32 %v115, %v341
    %v343 = vpop.f32.mrb[0].mxu0
    %v344 = vadd.f32 %v119, %v343
    %345 = vdwg.mxu0
    %346 = vst [vmem:[#allocation2] sm:$0xff] %v235
    %347 = vst [vmem:[#allocation2 + $0x8] sm:$0xff] %v237
    %348 = vst [vmem:[#allocation2 + $0x10] sm:$0xff] %v308
    %349 = vst [vmem:[#allocation2 + $0x18] sm:$0xff] %v310
    %350 = vst [vmem:[#allocation2 + $0x20] sm:$0xff] %v239
    %351 = vst [vmem:[#allocation2 + $0x28] sm:$0xff] %v241
    %352 = vst [vmem:[#allocation2 + $0x30] sm:$0xff] %v312
    %353 = vst [vmem:[#allocation2 + $0x38] sm:$0xff] %v314
    %354 = vst [vmem:[#allocation2 + $0x40] sm:$0xff] %v245
    %355 = vst [vmem:[#allocation2 + $0x48] sm:$0xff] %v247
    %356 = vst [vmem:[#allocation2 + $0x50] sm:$0xff] %v318
    %357 = vst [vmem:[#allocation2 + $0x58] sm:$0xff] %v320
    %358 = vst [vmem:[#allocation2 + $0x60] sm:$0xff] %v249
    %359 = vst [vmem:[#allocation2 + $0x68] sm:$0xff] %v251
    %360 = vst [vmem:[#allocation2 + $0x70] sm:$0xff] %v322
    %361 = vst [vmem:[#allocation2 + $0x78] sm:$0xff] %v324
    %362 = vst [vmem:[#allocation2 + $0x80] sm:$0xff] %v255
    %363 = vst [vmem:[#allocation2 + $0x88] sm:$0xff] %v257
    %364 = vst [vmem:[#allocation2 + $0x90] sm:$0xff] %v328
    %365 = vst [vmem:[#allocation2 + $0x98] sm:$0xff] %v330
    %366 = vst [vmem:[#allocation2 + $0xa0] sm:$0xff] %v259
    %367 = vst [vmem:[#allocation2 + $0xa8] sm:$0xff] %v261
    %368 = vst [vmem:[#allocation2 + $0xb0] sm:$0xff] %v332
    %369 = vst [vmem:[#allocation2 + $0xb8] sm:$0xff] %v334
    %370 = vst [vmem:[#allocation2 + $0xc0] sm:$0xff] %v265
    %371 = vst [vmem:[#allocation2 + $0xc8] sm:$0xff] %v267
    %372 = vst [vmem:[#allocation2 + $0xd0] sm:$0xff] %v338
    %373 = vst [vmem:[#allocation2 + $0xd8] sm:$0xff] %v340
    %374 = vst [vmem:[#allocation2 + $0xe0] sm:$0xff] %v269
    %375 = vst [vmem:[#allocation2 + $0xe8] sm:$0xff] %v271
    %376 = vst [vmem:[#allocation2 + $0xf0] sm:$0xff] %v342
    %377 = vst [vmem:[#allocation2 + $0xf8] sm:$0xff] %v344
    %v378 = vld [vmem:[%s6] sm:$0xf]
    %v380 = vlaneseq
    %v381 = vshrl.u32 %v380, 7
    %v382 = vsub.s32 0, %v381
    %v383 = vrot.slane %v378, %v382
    %v384 = vlaneseq
    %v385 = vshrl.u32 %v384, 7
    %v386 = vsub.s32 1, %v385
    %v387 = vrot.slane %v378, %v386
    %v388 = vlaneseq
    %v389 = vshrl.u32 %v388, 7
    %v390 = vsub.s32 2, %v389
    %v391 = vrot.slane %v378, %v390
    %v392 = vlaneseq
    %v393 = vshrl.u32 %v392, 7
    %v394 = vsub.s32 3, %v393
    %v395 = vrot.slane %v378, %v394
    %v400 = vld [vmem:[#allocation2] sm:$0xff]
    %v401 = vld [vmem:[#allocation2 + $0x8] sm:$0xff]
    %v402 = vld [vmem:[#allocation2 + $0x10] sm:$0xff]
    %v403 = vld [vmem:[#allocation2 + $0x18] sm:$0xff]
    %v404 = vld [vmem:[#allocation3] sm:$0xff]
    %v405 = vld [vmem:[#allocation3 + $0x8] sm:$0xff]
    %v406 = vld [vmem:[#allocation3 + $0x10] sm:$0xff]
    %v407 = vld [vmem:[#allocation3 + $0x18] sm:$0xff]
    %v408 = vld [vmem:[#allocation3 + $0x20] sm:$0xff]
    %v409 = vld [vmem:[#allocation3 + $0x28] sm:$0xff]
    %v410 = vld [vmem:[#allocation3 + $0x30] sm:$0xff]
    %v411 = vld [vmem:[#allocation3 + $0x38] sm:$0xff]
    %v412 = vld [vmem:[#allocation3 + $0x40] sm:$0xff]
    %v413 = vld [vmem:[#allocation3 + $0x48] sm:$0xff]
    %v414 = vld [vmem:[#allocation3 + $0x50] sm:$0xff]
    %v415 = vld [vmem:[#allocation3 + $0x58] sm:$0xff]
    %v416 = vld [vmem:[#allocation3 + $0x60] sm:$0xff]
    %v417 = vld [vmem:[#allocation3 + $0x68] sm:$0xff]
    %v418 = vld [vmem:[#allocation3 + $0x70] sm:$0xff]
    %v419 = vld [vmem:[#allocation3 + $0x78] sm:$0xff]
    %v420 = vld [vmem:[#allocation3 + $0x80] sm:$0xff]
    %v421 = vld [vmem:[#allocation3 + $0x88] sm:$0xff]
    %v422 = vld [vmem:[#allocation3 + $0x90] sm:$0xff]
    %v423 = vld [vmem:[#allocation3 + $0x98] sm:$0xff]
    %v424 = vld [vmem:[#allocation3 + $0xa0] sm:$0xff]
    %v425 = vld [vmem:[#allocation3 + $0xa8] sm:$0xff]
    %v426 = vld [vmem:[#allocation3 + $0xb0] sm:$0xff]
    %v427 = vld [vmem:[#allocation3 + $0xb8] sm:$0xff]
    %v428 = vld [vmem:[#allocation3 + $0xc0] sm:$0xff]
    %v429 = vld [vmem:[#allocation3 + $0xc8] sm:$0xff]
    %v430 = vld [vmem:[#allocation3 + $0xd0] sm:$0xff]
    %v431 = vld [vmem:[#allocation3 + $0xd8] sm:$0xff]
    %v432 = vld [vmem:[#allocation3 + $0xe0] sm:$0xff]
    %v433 = vld [vmem:[#allocation3 + $0xe8] sm:$0xff]
    %v434 = vld [vmem:[#allocation3 + $0xf0] sm:$0xff]
    %v435 = vld [vmem:[#allocation3 + $0xf8] sm:$0xff]
    %v468 = vunpack.c.l.b16 %v404
    %v469 = vunpack.c.h.b16 %v404
    %v470 = vunpack.c.l.b16 %v405
    %v471 = vunpack.c.h.b16 %v405
    %v472 = vunpack.c.l.b16 %v406
    %v473 = vunpack.c.h.b16 %v406
    %v474 = vunpack.c.l.b16 %v407
    %v475 = vunpack.c.h.b16 %v407
    %v476 = vunpack.c.l.b16 %v408
    %v477 = vunpack.c.h.b16 %v408
    %v478 = vunpack.c.l.b16 %v409
    %v479 = vunpack.c.h.b16 %v409
    %v480 = vunpack.c.l.b16 %v410
    %v481 = vunpack.c.h.b16 %v410
    %v482 = vunpack.c.l.b16 %v411
    %v483 = vunpack.c.h.b16 %v411
    %v484 = vunpack.c.l.b16 %v412
    %v485 = vunpack.c.h.b16 %v412
    %v486 = vunpack.c.l.b16 %v413
    %v487 = vunpack.c.h.b16 %v413
    %v488 = vunpack.c.l.b16 %v414
    %v489 = vunpack.c.h.b16 %v414
    %v490 = vunpack.c.l.b16 %v415
    %v491 = vunpack.c.h.b16 %v415
    %v492 = vunpack.c.l.b16 %v416
    %v493 = vunpack.c.h.b16 %v416
    %v494 = vunpack.c.l.b16 %v417
    %v495 = vunpack.c.h.b16 %v417
    %v496 = vunpack.c.l.b16 %v418
    %v497 = vunpack.c.h.b16 %v418
    %v498 = vunpack.c.l.b16 %v419
    %v499 = vunpack.c.h.b16 %v419
    %v500 = vunpack.c.l.b16 %v420
    %v501 = vunpack.c.h.b16 %v420
    %v502 = vunpack.c.l.b16 %v421
    %v503 = vunpack.c.h.b16 %v421
    %v504 = vunpack.c.l.b16 %v422
    %v505 = vunpack.c.h.b16 %v422
    %v506 = vunpack.c.l.b16 %v423
    %v507 = vunpack.c.h.b16 %v423
    %v508 = vunpack.c.l.b16 %v424
    %v509 = vunpack.c.h.b16 %v424
    %v510 = vunpack.c.l.b16 %v425
    %v511 = vunpack.c.h.b16 %v425
    %v512 = vunpack.c.l.b16 %v426
    %v513 = vunpack.c.h.b16 %v426
    %v514 = vunpack.c.l.b16 %v427
    %v515 = vunpack.c.h.b16 %v427
    %v516 = vunpack.c.l.b16 %v428
    %v517 = vunpack.c.h.b16 %v428
    %v518 = vunpack.c.l.b16 %v429
    %v519 = vunpack.c.h.b16 %v429
    %v520 = vunpack.c.l.b16 %v430
    %v521 = vunpack.c.h.b16 %v430
    %v522 = vunpack.c.l.b16 %v431
    %v523 = vunpack.c.h.b16 %v431
    %v524 = vunpack.c.l.b16 %v432
    %v525 = vunpack.c.h.b16 %v432
    %v526 = vunpack.c.l.b16 %v433
    %v527 = vunpack.c.h.b16 %v433
    %v528 = vunpack.c.l.b16 %v434
    %v529 = vunpack.c.h.b16 %v434
    %v530 = vunpack.c.l.b16 %v435
    %v531 = vunpack.c.h.b16 %v435
    %v532 = vpack.c.b16 %v472, %v468
    %v533 = vpack.c.b16 %v473, %v469
    %v534 = vpack.c.b16 %v474, %v470
    %v535 = vpack.c.b16 %v475, %v471
    %v536 = vpack.c.b16 %v480, %v476
    %v537 = vpack.c.b16 %v481, %v477
    %v538 = vpack.c.b16 %v482, %v478
    %v539 = vpack.c.b16 %v483, %v479
    %v540 = vpack.c.b16 %v488, %v484
    %v541 = vpack.c.b16 %v489, %v485
    %v542 = vpack.c.b16 %v490, %v486
    %v543 = vpack.c.b16 %v491, %v487
    %v544 = vpack.c.b16 %v496, %v492
    %v545 = vpack.c.b16 %v497, %v493
    %v546 = vpack.c.b16 %v498, %v494
    %v547 = vpack.c.b16 %v499, %v495
    %v548 = vpack.c.b16 %v504, %v500
    %v549 = vpack.c.b16 %v505, %v501
    %v550 = vpack.c.b16 %v506, %v502
    %v551 = vpack.c.b16 %v507, %v503
    %v552 = vpack.c.b16 %v512, %v508
    %v553 = vpack.c.b16 %v513, %v509
    %v554 = vpack.c.b16 %v514, %v510
    %v555 = vpack.c.b16 %v515, %v511
    %v556 = vpack.c.b16 %v520, %v516
    %v557 = vpack.c.b16 %v521, %v517
    %v558 = vpack.c.b16 %v522, %v518
    %v559 = vpack.c.b16 %v523, %v519
    %v560 = vpack.c.b16 %v528, %v524
    %v561 = vpack.c.b16 %v529, %v525
    %v562 = vpack.c.b16 %v530, %v526
    %v563 = vpack.c.b16 %v531, %v527
    %596 = vmatprep.subr.bf16.mxu0 %v533
    %597 = vmatpush1.bf16.msra.mxu0 %v532
    %598 = vmatprep.subr.bf16.mxu0 %v537
    %599 = vmatpush1.bf16.msra.mxu0 %v536
    %600 = vmatprep.subr.bf16.mxu0 %v541
    %601 = vmatpush1.bf16.msra.mxu0 %v540
    %602 = vmatprep.subr.bf16.mxu0 %v545
    %603 = vmatpush1.bf16.msra.mxu0 %v544
    %604 = vmatprep.subr.bf16.mxu0 %v549
    %605 = vmatpush1.bf16.msra.mxu0 %v548
    %606 = vmatprep.subr.bf16.mxu0 %v553
    %607 = vmatpush1.bf16.msra.mxu0 %v552
    %608 = vmatprep.subr.bf16.mxu0 %v557
    %609 = vmatpush1.bf16.msra.mxu0 %v556
    %610 = vmatprep.subr.bf16.mxu0 %v561
    %611 = vmatpush1.bf16.msra.mxu0 %v560
    %612 = vmatprep.subr.bf16.mxu0 0
    %613 = vmatpush1.bf16.msra.mxu0 0
    %614 = vmatprep.subr.bf16.mxu0 0
    %615 = vmatpush1.bf16.msra.mxu0 0
    %616 = vmatprep.subr.bf16.mxu0 0
    %617 = vmatpush1.bf16.msra.mxu0 0
    %618 = vmatprep.subr.bf16.mxu0 0
    %619 = vmatpush1.bf16.msra.mxu0 0
    %620 = vmatprep.subr.bf16.mxu0 0
    %621 = vmatpush1.bf16.msra.mxu0 0
    %622 = vmatprep.subr.bf16.mxu0 0
    %623 = vmatpush1.bf16.msra.mxu0 0
    %624 = vmatprep.subr.bf16.mxu0 0
    %625 = vmatpush1.bf16.msra.mxu0 0
    %626 = vmatprep.subr.bf16.mxu0 0
    %627 = vmatpush1.bf16.msra.mxu0 0
    %628 = vmatprep.mubr.bf16.mxu0 0
    %629 = vmatmul.mubr.bf16.gmra.mrb[0].mxu0 0
    %v630 = vpop.f32.mrb[0].mxu0
    %v631 = vadd.f32 0.0, %v630
    %v632 = vpop.f32.mrb[0].mxu0
    %v633 = vadd.f32 0.0, %v632
    %v634 = vpop.f32.mrb[0].mxu0
    %v635 = vpop.f32.mrb[0].mxu0
    %636 = vdwg.mxu0
    %637 = vmatprep.subr.bf16.mxu0 %v535
    %638 = vmatpush1.bf16.msra.mxu0 %v534
    %639 = vmatprep.subr.bf16.mxu0 %v539
    %640 = vmatpush1.bf16.msra.mxu0 %v538
    %641 = vmatprep.subr.bf16.mxu0 %v543
    %642 = vmatpush1.bf16.msra.mxu0 %v542
    %643 = vmatprep.subr.bf16.mxu0 %v547
    %644 = vmatpush1.bf16.msra.mxu0 %v546
    %645 = vmatprep.subr.bf16.mxu0 %v551
    %646 = vmatpush1.bf16.msra.mxu0 %v550
    %647 = vmatprep.subr.bf16.mxu0 %v555
    %648 = vmatpush1.bf16.msra.mxu0 %v554
    %649 = vmatprep.subr.bf16.mxu0 %v559
    %650 = vmatpush1.bf16.msra.mxu0 %v558
    %651 = vmatprep.subr.bf16.mxu0 %v563
    %652 = vmatpush1.bf16.msra.mxu0 %v562
    %653 = vmatprep.subr.bf16.mxu0 0
    %654 = vmatpush1.bf16.msra.mxu0 0
    %655 = vmatprep.subr.bf16.mxu0 0
    %656 = vmatpush1.bf16.msra.mxu0 0
    %657 = vmatprep.subr.bf16.mxu0 0
    %658 = vmatpush1.bf16.msra.mxu0 0
    %659 = vmatprep.subr.bf16.mxu0 0
    %660 = vmatpush1.bf16.msra.mxu0 0
    %661 = vmatprep.subr.bf16.mxu0 0
    %662 = vmatpush1.bf16.msra.mxu0 0
    %663 = vmatprep.subr.bf16.mxu0 0
    %664 = vmatpush1.bf16.msra.mxu0 0
    %665 = vmatprep.subr.bf16.mxu0 0
    %666 = vmatpush1.bf16.msra.mxu0 0
    %667 = vmatprep.subr.bf16.mxu0 0
    %668 = vmatpush1.bf16.msra.mxu0 0
    %669 = vmatprep.mubr.bf16.mxu0 0
    %670 = vmatmul.mubr.bf16.gmra.mrb[0].mxu0 0
    %v671 = vpop.f32.mrb[0].mxu0
    %v672 = vadd.f32 0.0, %v671
    %v673 = vpop.f32.mrb[0].mxu0
    %v674 = vadd.f32 0.0, %v673
    %v675 = vpop.f32.mrb[0].mxu0
    %v676 = vpop.f32.mrb[0].mxu0
    %677 = vdwg.mxu0
    %v678 = vadd.f32 %v400, %v631
    %v679 = vadd.f32 %v401, %v633
    %v680 = vadd.f32 %v402, %v672
    %v681 = vadd.f32 %v403, %v674
    %v682 = vmul.f32 %v678, 0.5
    %v683 = vtanh.pop %v682
    %v684 = vmul.f32 %v683, 0.5
    %v685 = vadd.f32 %v684, 0.5
    %v686 = vmul.f32 %v679, 0.5
    %v687 = vtanh.pop %v686
    %v688 = vmul.f32 %v687, 0.5
    %v689 = vadd.f32 %v688, 0.5
    %v690 = vtanh.pop %v680
    %v691 = vmul.f32 %v681, 0.5
    %v692 = vtanh.pop %v691
    %v693 = vmul.f32 %v692, 0.5
    %v694 = vadd.f32 %v693, 0.5
    %v695 = vmul.f32 %v689, 0.0
    %v696 = vmul.f32 %v685, %v690
    %v697 = vadd.f32 %v695, %v696
    %v698 = vtanh.pop %v697
    %v699 = vmul.f32 %v694, %v698
    %v700 = vld [vmem:[#allocation5] sm:$0xff]
    %v701 = vld [vmem:[#allocation5 + $0x8] sm:$0xff]
    %v702 = vld [vmem:[#allocation5 + $0x10] sm:$0xff]
    %v703 = vld [vmem:[#allocation5 + $0x18] sm:$0xff]
    %v704 = vld [vmem:[#allocation5 + $0x20] sm:$0xff]
    %v705 = vld [vmem:[#allocation5 + $0x28] sm:$0xff]
    %v706 = vld [vmem:[#allocation5 + $0x30] sm:$0xff]
    %v707 = vld [vmem:[#allocation5 + $0x38] sm:$0xff]
    %v708 = vld [vmem:[#allocation5 + $0x40] sm:$0xff]
    %v709 = vld [vmem:[#allocation5 + $0x48] sm:$0xff]
    %v710 = vld [vmem:[#allocation5 + $0x50] sm:$0xff]
    %v711 = vld [vmem:[#allocation5 + $0x58] sm:$0xff]
    %v712 = vld [vmem:[#allocation5 + $0x60] sm:$0xff]
    %v713 = vld [vmem:[#allocation5 + $0x68] sm:$0xff]
    %v714 = vld [vmem:[#allocation5 + $0x70] sm:$0xff]
    %v715 = vld [vmem:[#allocation5 + $0x78] sm:$0xff]
    %v716 = vld [vmem:[#allocation5 + $0x80] sm:$0xff]
    %v717 = vld [vmem:[#allocation5 + $0x88] sm:$0xff]
    %v718 = vld [vmem:[#allocation5 + $0x90] sm:$0xff]
    %v719 = vld [vmem:[#allocation5 + $0x98] sm:$0xff]
    %v720 = vld [vmem:[#allocation5 + $0xa0] sm:$0xff]
    %v721 = vld [vmem:[#allocation5 + $0xa8] sm:$0xff]
    %v722 = vld [vmem:[#allocation5 + $0xb0] sm:$0xff]
    %v723 = vld [vmem:[#allocation5 + $0xb8] sm:$0xff]
    %v724 = vld [vmem:[#allocation5 + $0xc0] sm:$0xff]
    %v725 = vld [vmem:[#allocation5 + $0xc8] sm:$0xff]
    %v726 = vld [vmem:[#allocation5 + $0xd0] sm:$0xff]
    %v727 = vld [vmem:[#allocation5 + $0xd8] sm:$0xff]
    %v728 = vld [vmem:[#allocation5 + $0xe0] sm:$0xff]
    %v729 = vld [vmem:[#allocation5 + $0xe8] sm:$0xff]
    %v730 = vld [vmem:[#allocation5 + $0xf0] sm:$0xff]
    %v731 = vld [vmem:[#allocation5 + $0xf8] sm:$0xff]
    %v764 = vunpack.c.l.b16 %v700
    %v765 = vunpack.c.h.b16 %v700
    %v766 = vunpack.c.l.b16 %v701
    %v767 = vunpack.c.h.b16 %v701
    %v768 = vunpack.c.l.b16 %v702
    %v769 = vunpack.c.h.b16 %v702
    %v770 = vunpack.c.l.b16 %v703
    %v771 = vunpack.c.h.b16 %v703
    %v772 = vunpack.c.l.b16 %v704
    %v773 = vunpack.c.h.b16 %v704
    %v774 = vunpack.c.l.b16 %v705
    %v775 = vunpack.c.h.b16 %v705
    %v776 = vunpack.c.l.b16 %v706
    %v777 = vunpack.c.h.b16 %v706
    %v778 = vunpack.c.l.b16 %v707
    %v779 = vunpack.c.h.b16 %v707
    %v780 = vunpack.c.l.b16 %v708
    %v781 = vunpack.c.h.b16 %v708
    %v782 = vunpack.c.l.b16 %v709
    %v783 = vunpack.c.h.b16 %v709
    %v784 = vunpack.c.l.b16 %v710
    %v785 = vunpack.c.h.b16 %v710
    %v786 = vunpack.c.l.b16 %v711
    %v787 = vunpack.c.h.b16 %v711
    %v788 = vunpack.c.l.b16 %v712
    %v789 = vunpack.c.h.b16 %v712
    %v790 = vunpack.c.l.b16 %v713
    %v791 = vunpack.c.h.b16 %v713
    %v792 = vunpack.c.l.b16 %v714
    %v793 = vunpack.c.h.b16 %v714
    %v794 = vunpack.c.l.b16 %v715
    %v795 = vunpack.c.h.b16 %v715
    %v796 = vunpack.c.l.b16 %v716
    %v797 = vunpack.c.h.b16 %v716
    %v798 = vunpack.c.l.b16 %v717
    %v799 = vunpack.c.h.b16 %v717
    %v800 = vunpack.c.l.b16 %v718
    %v801 = vunpack.c.h.b16 %v718
    %v802 = vunpack.c.l.b16 %v719
    %v803 = vunpack.c.h.b16 %v719
    %v804 = vunpack.c.l.b16 %v720
    %v805 = vunpack.c.h.b16 %v720
    %v806 = vunpack.c.l.b16 %v721
    %v807 = vunpack.c.h.b16 %v721
    %v808 = vunpack.c.l.b16 %v722
    %v809 = vunpack.c.h.b16 %v722
    %v810 = vunpack.c.l.b16 %v723
    %v811 = vunpack.c.h.b16 %v723
    %v812 = vunpack.c.l.b16 %v724
    %v813 = vunpack.c.h.b16 %v724
    %v814 = vunpack.c.l.b16 %v725
    %v815 = vunpack.c.h.b16 %v725
    %v816 = vunpack.c.l.b16 %v726
    %v817 = vunpack.c.h.b16 %v726
    %v818 = vunpack.c.l.b16 %v727
    %v819 = vunpack.c.h.b16 %v727
    %v820 = vunpack.c.l.b16 %v728
    %v821 = vunpack.c.h.b16 %v728
    %v822 = vunpack.c.l.b16 %v729
    %v823 = vunpack.c.h.b16 %v729
    %v824 = vunpack.c.l.b16 %v730
    %v825 = vunpack.c.h.b16 %v730
    %v826 = vunpack.c.l.b16 %v731
    %v827 = vunpack.c.h.b16 %v731
    %v828 = vpack.c.b16 %v768, %v764
    %v829 = vpack.c.b16 %v769, %v765
    %v830 = vpack.c.b16 %v770, %v766
    %v831 = vpack.c.b16 %v771, %v767
    %v832 = vpack.c.b16 %v776, %v772
    %v833 = vpack.c.b16 %v777, %v773
    %v834 = vpack.c.b16 %v778, %v774
    %v835 = vpack.c.b16 %v779, %v775
    %v836 = vpack.c.b16 %v784, %v780
    %v837 = vpack.c.b16 %v785, %v781
    %v838 = vpack.c.b16 %v786, %v782
    %v839 = vpack.c.b16 %v787, %v783
    %v840 = vpack.c.b16 %v792, %v788
    %v841 = vpack.c.b16 %v793, %v789
    %v842 = vpack.c.b16 %v794, %v790
    %v843 = vpack.c.b16 %v795, %v791
    %v844 = vpack.c.b16 %v800, %v796
    %v845 = vpack.c.b16 %v801, %v797
    %v846 = vpack.c.b16 %v802, %v798
    %v847 = vpack.c.b16 %v803, %v799
    %v848 = vpack.c.b16 %v808, %v804
    %v849 = vpack.c.b16 %v809, %v805
    %v850 = vpack.c.b16 %v810, %v806
    %v851 = vpack.c.b16 %v811, %v807
    %v852 = vpack.c.b16 %v816, %v812
    %v853 = vpack.c.b16 %v817, %v813
    %v854 = vpack.c.b16 %v818, %v814
    %v855 = vpack.c.b16 %v819, %v815
    %v856 = vpack.c.b16 %v824, %v820
    %v857 = vpack.c.b16 %v825, %v821
    %v858 = vpack.c.b16 %v826, %v822
    %v859 = vpack.c.b16 %v827, %v823
    %892 = vmatprep.subr.bf16.mxu0 %v829
    %893 = vmatpush1.bf16.msra.mxu0 %v828
    %894 = vmatprep.subr.bf16.mxu0 %v833
    %895 = vmatpush1.bf16.msra.mxu0 %v832
    %896 = vmatprep.subr.bf16.mxu0 %v837
    %897 = vmatpush1.bf16.msra.mxu0 %v836
    %898 = vmatprep.subr.bf16.mxu0 %v841
    %899 = vmatpush1.bf16.msra.mxu0 %v840
    %900 = vmatprep.subr.bf16.mxu0 %v845
    %901 = vmatpush1.bf16.msra.mxu0 %v844
    %902 = vmatprep.subr.bf16.mxu0 %v849
    %903 = vmatpush1.bf16.msra.mxu0 %v848
    %904 = vmatprep.subr.bf16.mxu0 %v853
    %905 = vmatpush1.bf16.msra.mxu0 %v852
    %906 = vmatprep.subr.bf16.mxu0 %v857
    %907 = vmatpush1.bf16.msra.mxu0 %v856
    %908 = vmatprep.subr.bf16.mxu0 0
    %909 = vmatpush1.bf16.msra.mxu0 0
    %910 = vmatprep.subr.bf16.mxu0 0
    %911 = vmatpush1.bf16.msra.mxu0 0
    %912 = vmatprep.subr.bf16.mxu0 0
    %913 = vmatpush1.bf16.msra.mxu0 0
    %914 = vmatprep.subr.bf16.mxu0 0
    %915 = vmatpush1.bf16.msra.mxu0 0
    %916 = vmatprep.subr.bf16.mxu0 0
    %917 = vmatpush1.bf16.msra.mxu0 0
    %918 = vmatprep.subr.bf16.mxu0 0
    %919 = vmatpush1.bf16.msra.mxu0 0
    %920 = vmatprep.subr.bf16.mxu0 0
    %921 = vmatpush1.bf16.msra.mxu0 0
    %922 = vmatprep.subr.bf16.mxu0 0
    %923 = vmatpush1.bf16.msra.mxu0 0
    %924 = vmatprep.mubr.bf16.mxu0 0
    %925 = vmatmul.mubr.bf16.gmra.mrb[0].mxu0 0
    %v926 = vpop.f32.mrb[0].mxu0
    %v927 = vadd.f32 0.0, %v926
    %v928 = vpop.f32.mrb[0].mxu0
    %v929 = vadd.f32 0.0, %v928
    %v930 = vpop.f32.mrb[0].mxu0
    %v931 = vpop.f32.mrb[0].mxu0
    %932 = vdwg.mxu0
    %933 = vmatprep.subr.bf16.mxu0 %v831
    %934 = vmatpush1.bf16.msra.mxu0 %v830
    %935 = vmatprep.subr.bf16.mxu0 %v835
    %936 = vmatpush1.bf16.msra.mxu0 %v834
    %937 = vmatprep.subr.bf16.mxu0 %v839
    %938 = vmatpush1.bf16.msra.mxu0 %v838
    %939 = vmatprep.subr.bf16.mxu0 %v843
    %940 = vmatpush1.bf16.msra.mxu0 %v842
    %941 = vmatprep.subr.bf16.mxu0 %v847
    %942 = vmatpush1.bf16.msra.mxu0 %v846
    %943 = vmatprep.subr.bf16.mxu0 %v851
    %944 = vmatpush1.bf16.msra.mxu0 %v850
    %945 = vmatprep.subr.bf16.mxu0 %v855
    %946 = vmatpush1.bf16.msra.mxu0 %v854
    %947 = vmatprep.subr.bf16.mxu0 %v859
    %948 = vmatpush1.bf16.msra.mxu0 %v858
    %949 = vmatprep.subr.bf16.mxu0 0
    %950 = vmatpush1.bf16.msra.mxu0 0
    %951 = vmatprep.subr.bf16.mxu0 0
    %952 = vmatpush1.bf16.msra.mxu0 0
    %953 = vmatprep.subr.bf16.mxu0 0
    %954 = vmatpush1.bf16.msra.mxu0 0
    %955 = vmatprep.subr.bf16.mxu0 0
    %956 = vmatpush1.bf16.msra.mxu0 0
    %957 = vmatprep.subr.bf16.mxu0 0
    %958 = vmatpush1.bf16.msra.mxu0 0
    %959 = vmatprep.subr.bf16.mxu0 0
    %960 = vmatpush1.bf16.msra.mxu0 0
    %961 = vmatprep.subr.bf16.mxu0 0
    %962 = vmatpush1.bf16.msra.mxu0 0
    %963 = vmatprep.subr.bf16.mxu0 0
    %964 = vmatpush1.bf16.msra.mxu0 0
    %965 = vmatprep.mubr.bf16.mxu0 0
    %966 = vmatmul.mubr.bf16.gmra.mrb[0].mxu0 0
    %v967 = vpop.f32.mrb[0].mxu0
    %v968 = vadd.f32 0.0, %v967
    %v969 = vpop.f32.mrb[0].mxu0
    %v970 = vadd.f32 0.0, %v969
    %v971 = vpop.f32.mrb[0].mxu0
    %v972 = vpop.f32.mrb[0].mxu0
    %973 = vdwg.mxu0
    %v974 = vpack.c.bf16 %v699, %v699
    %v975 = vld [vmem:[#allocation7] sm:$0xff]
    %v976 = vld [vmem:[#allocation7 + $0x8] sm:$0xff]
    %v977 = vld [vmem:[#allocation7 + $0x10] sm:$0xff]
    %v978 = vld [vmem:[#allocation7 + $0x18] sm:$0xff]
    %v979 = vld [vmem:[#allocation7 + $0x20] sm:$0xff]
    %v980 = vld [vmem:[#allocation7 + $0x28] sm:$0xff]
    %v981 = vld [vmem:[#allocation7 + $0x30] sm:$0xff]
    %v982 = vld [vmem:[#allocation7 + $0x38] sm:$0xff]
    %v983 = vld [vmem:[#allocation7 + $0x40] sm:$0xff]
    %v984 = vld [vmem:[#allocation7 + $0x48] sm:$0xff]
    %v985 = vld [vmem:[#allocation7 + $0x50] sm:$0xff]
    %v986 = vld [vmem:[#allocation7 + $0x58] sm:$0xff]
    %v987 = vld [vmem:[#allocation7 + $0x60] sm:$0xff]
    %v988 = vld [vmem:[#allocation7 + $0x68] sm:$0xff]
    %v989 = vld [vmem:[#allocation7 + $0x70] sm:$0xff]
    %v990 = vld [vmem:[#allocation7 + $0x78] sm:$0xff]
    %v991 = vld [vmem:[#allocation7 + $0x80] sm:$0xff]
    %v992 = vld [vmem:[#allocation7 + $0x88] sm:$0xff]
    %v993 = vld [vmem:[#allocation7 + $0x90] sm:$0xff]
    %v994 = vld [vmem:[#allocation7 + $0x98] sm:$0xff]
    %v995 = vld [vmem:[#allocation7 + $0xa0] sm:$0xff]
    %v996 = vld [vmem:[#allocation7 + $0xa8] sm:$0xff]
    %v997 = vld [vmem:[#allocation7 + $0xb0] sm:$0xff]
    %v998 = vld [vmem:[#allocation7 + $0xb8] sm:$0xff]
    %v999 = vld [vmem:[#allocation7 + $0xc0] sm:$0xff]
    %v1000 = vld [vmem:[#allocation7 + $0xc8] sm:$0xff]
    %v1001 = vld [vmem:[#allocation7 + $0xd0] sm:$0xff]
    %v1002 = vld [vmem:[#allocation7 + $0xd8] sm:$0xff]
    %v1003 = vld [vmem:[#allocation7 + $0xe0] sm:$0xff]
    %v1004 = vld [vmem:[#allocation7 + $0xe8] sm:$0xff]
    %v1005 = vld [vmem:[#allocation7 + $0xf0] sm:$0xff]
    %v1006 = vld [vmem:[#allocation7 + $0xf8] sm:$0xff]
    %v1039 = vunpack.c.l.b16 %v975
    %v1040 = vunpack.c.h.b16 %v975
    %v1041 = vunpack.c.l.b16 %v976
    %v1042 = vunpack.c.h.b16 %v976
    %v1043 = vunpack.c.l.b16 %v977
    %v1044 = vunpack.c.h.b16 %v977
    %v1045 = vunpack.c.l.b16 %v978
    %v1046 = vunpack.c.h.b16 %v978
    %v1047 = vunpack.c.l.b16 %v979
    %v1048 = vunpack.c.h.b16 %v979
    %v1049 = vunpack.c.l.b16 %v980
    %v1050 = vunpack.c.h.b16 %v980
    %v1051 = vunpack.c.l.b16 %v981
    %v1052 = vunpack.c.h.b16 %v981
    %v1053 = vunpack.c.l.b16 %v982
    %v1054 = vunpack.c.h.b16 %v982
    %v1055 = vunpack.c.l.b16 %v983
    %v1056 = vunpack.c.h.b16 %v983
    %v1057 = vunpack.c.l.b16 %v984
    %v1058 = vunpack.c.h.b16 %v984
    %v1059 = vunpack.c.l.b16 %v985
    %v1060 = vunpack.c.h.b16 %v985
    %v1061 = vunpack.c.l.b16 %v986
    %v1062 = vunpack.c.h.b16 %v986
    %v1063 = vunpack.c.l.b16 %v987
    %v1064 = vunpack.c.h.b16 %v987
    %v1065 = vunpack.c.l.b16 %v988
    %v1066 = vunpack.c.h.b16 %v988
    %v1067 = vunpack.c.l.b16 %v989
    %v1068 = vunpack.c.h.b16 %v989
    %v1069 = vunpack.c.l.b16 %v990
    %v1070 = vunpack.c.h.b16 %v990
    %v1071 = vunpack.c.l.b16 %v991
    %v1072 = vunpack.c.h.b16 %v991
    %v1073 = vunpack.c.l.b16 %v992
    %v1074 = vunpack.c.h.b16 %v992
    %v1075 = vunpack.c.l.b16 %v993
    %v1076 = vunpack.c.h.b16 %v993
    %v1077 = vunpack.c.l.b16 %v994
    %v1078 = vunpack.c.h.b16 %v994
    %v1079 = vunpack.c.l.b16 %v995
    %v1080 = vunpack.c.h.b16 %v995
    %v1081 = vunpack.c.l.b16 %v996
    %v1082 = vunpack.c.h.b16 %v996
    %v1083 = vunpack.c.l.b16 %v997
    %v1084 = vunpack.c.h.b16 %v997
    %v1085 = vunpack.c.l.b16 %v998
    %v1086 = vunpack.c.h.b16 %v998
    %v1087 = vunpack.c.l.b16 %v999
    %v1088 = vunpack.c.h.b16 %v999
    %v1089 = vunpack.c.l.b16 %v1000
    %v1090 = vunpack.c.h.b16 %v1000
    %v1091 = vunpack.c.l.b16 %v1001
    %v1092 = vunpack.c.h.b16 %v1001
    %v1093 = vunpack.c.l.b16 %v1002
    %v1094 = vunpack.c.h.b16 %v1002
    %v1095 = vunpack.c.l.b16 %v1003
    %v1096 = vunpack.c.h.b16 %v1003
    %v1097 = vunpack.c.l.b16 %v1004
    %v1098 = vunpack.c.h.b16 %v1004
    %v1099 = vunpack.c.l.b16 %v1005
    %v1100 = vunpack.c.h.b16 %v1005
    %v1101 = vunpack.c.l.b16 %v1006
    %v1102 = vunpack.c.h.b16 %v1006
    %v1103 = vpack.c.b16 %v1043, %v1039
    %v1104 = vpack.c.b16 %v1044, %v1040
    %v1105 = vpack.c.b16 %v1045, %v1041
    %v1106 = vpack.c.b16 %v1046, %v1042
    %v1107 = vpack.c.b16 %v1051, %v1047
    %v1108 = vpack.c.b16 %v1052, %v1048
    %v1109 = vpack.c.b16 %v1053, %v1049
    %v1110 = vpack.c.b16 %v1054, %v1050
    %v1111 = vpack.c.b16 %v1059, %v1055
    %v1112 = vpack.c.b16 %v1060, %v1056
    %v1113 = vpack.c.b16 %v1061, %v1057
    %v1114 = vpack.c.b16 %v1062, %v1058
    %v1115 = vpack.c.b16 %v1067, %v1063
    %v1116 = vpack.c.b16 %v1068, %v1064
    %v1117 = vpack.c.b16 %v1069, %v1065
    %v1118 = vpack.c.b16 %v1070, %v1066
    %v1119 = vpack.c.b16 %v1075, %v1071
    %v1120 = vpack.c.b16 %v1076, %v1072
    %v1121 = vpack.c.b16 %v1077, %v1073
    %v1122 = vpack.c.b16 %v1078, %v1074
    %v1123 = vpack.c.b16 %v1083, %v1079
    %v1124 = vpack.c.b16 %v1084, %v1080
    %v1125 = vpack.c.b16 %v1085, %v1081
    %v1126 = vpack.c.b16 %v1086, %v1082
    %v1127 = vpack.c.b16 %v1091, %v1087
    %v1128 = vpack.c.b16 %v1092, %v1088
    %v1129 = vpack.c.b16 %v1093, %v1089
    %v1130 = vpack.c.b16 %v1094, %v1090
    %v1131 = vpack.c.b16 %v1099, %v1095
    %v1132 = vpack.c.b16 %v1100, %v1096
    %v1133 = vpack.c.b16 %v1101, %v1097
    %v1134 = vpack.c.b16 %v1102, %v1098
    %1167 = vmatprep.subr.bf16.mxu0 %v1104
    %1168 = vmatpush1.bf16.msra.mxu0 %v1103
    %1169 = vmatprep.subr.bf16.mxu0 %v1108
    %1170 = vmatpush1.bf16.msra.mxu0 %v1107
    %1171 = vmatprep.subr.bf16.mxu0 %v1112
    %1172 = vmatpush1.bf16.msra.mxu0 %v1111
    %1173 = vmatprep.subr.bf16.mxu0 %v1116
    %1174 = vmatpush1.bf16.msra.mxu0 %v1115
    %1175 = vmatprep.subr.bf16.mxu0 %v1120
    %1176 = vmatpush1.bf16.msra.mxu0 %v1119
    %1177 = vmatprep.subr.bf16.mxu0 %v1124
    %1178 = vmatpush1.bf16.msra.mxu0 %v1123
    %1179 = vmatprep.subr.bf16.mxu0 %v1128
    %1180 = vmatpush1.bf16.msra.mxu0 %v1127
    %1181 = vmatprep.subr.bf16.mxu0 %v1132
    %1182 = vmatpush1.bf16.msra.mxu0 %v1131
    %1183 = vmatprep.subr.bf16.mxu0 0
    %1184 = vmatpush1.bf16.msra.mxu0 0
    %1185 = vmatprep.subr.bf16.mxu0 0
    %1186 = vmatpush1.bf16.msra.mxu0 0
    %1187 = vmatprep.subr.bf16.mxu0 0
    %1188 = vmatpush1.bf16.msra.mxu0 0
    %1189 = vmatprep.subr.bf16.mxu0 0
    %1190 = vmatpush1.bf16.msra.mxu0 0
    %1191 = vmatprep.subr.bf16.mxu0 0
    %1192 = vmatpush1.bf16.msra.mxu0 0
    %1193 = vmatprep.subr.bf16.mxu0 0
    %1194 = vmatpush1.bf16.msra.mxu0 0
    %1195 = vmatprep.subr.bf16.mxu0 0
    %1196 = vmatpush1.bf16.msra.mxu0 0
    %1197 = vmatprep.subr.bf16.mxu0 0
    %1198 = vmatpush1.bf16.msra.mxu0 0
    %1199 = vmatprep.mubr.bf16.mxu0 0
    %1200 = vmatmul.mubr.bf16.gmra.mrb[0].mxu0 %v974
    %v1201 = vpop.f32.mrb[0].mxu0
    %v1202 = vadd.f32 %v927, %v1201
    %v1203 = vpop.f32.mrb[0].mxu0
    %v1204 = vadd.f32 %v929, %v1203
    %v1205 = vpop.f32.mrb[0].mxu0
    %v1206 = vpop.f32.mrb[0].mxu0
    %1207 = vdwg.mxu0
    %1208 = vmatprep.subr.bf16.mxu0 %v1106
    %1209 = vmatpush1.bf16.msra.mxu0 %v1105
    %1210 = vmatprep.subr.bf16.mxu0 %v1110
    %1211 = vmatpush1.bf16.msra.mxu0 %v1109
    %1212 = vmatprep.subr.bf16.mxu0 %v1114
    %1213 = vmatpush1.bf16.msra.mxu0 %v1113
    %1214 = vmatprep.subr.bf16.mxu0 %v1118
    %1215 = vmatpush1.bf16.msra.mxu0 %v1117
    %1216 = vmatprep.subr.bf16.mxu0 %v1122
    %1217 = vmatpush1.bf16.msra.mxu0 %v1121
    %1218 = vmatprep.subr.bf16.mxu0 %v1126
    %1219 = vmatpush1.bf16.msra.mxu0 %v1125
    %1220 = vmatprep.subr.bf16.mxu0 %v1130
    %1221 = vmatpush1.bf16.msra.mxu0 %v1129
    %1222 = vmatprep.subr.bf16.mxu0 %v1134
    %1223 = vmatpush1.bf16.msra.mxu0 %v1133
    %1224 = vmatprep.subr.bf16.mxu0 0
    %1225 = vmatpush1.bf16.msra.mxu0 0
    %1226 = vmatprep.subr.bf16.mxu0 0
    %1227 = vmatpush1.bf16.msra.mxu0 0
    %1228 = vmatprep.subr.bf16.mxu0 0
    %1229 = vmatpush1.bf16.msra.mxu0 0
    %1230 = vmatprep.subr.bf16.mxu0 0
    %1231 = vmatpush1.bf16.msra.mxu0 0
    %1232 = vmatprep.subr.bf16.mxu0 0
    %1233 = vmatpush1.bf16.msra.mxu0 0
    %1234 = vmatprep.subr.bf16.mxu0 0
    %1235 = vmatpush1.bf16.msra.mxu0 0
    %1236 = vmatprep.subr.bf16.mxu0 0
    %1237 = vmatpush1.bf16.msra.mxu0 0
    %1238 = vmatprep.subr.bf16.mxu0 0
    %1239 = vmatpush1.bf16.msra.mxu0 0
    %1240 = vmatprep.mubr.bf16.mxu0 0
    %1241 = vmatmul.mubr.bf16.gmra.mrb[0].mxu0 %v974
    %v1242 = vpop.f32.mrb[0].mxu0
    %v1243 = vadd.f32 %v968, %v1242
    %v1244 = vpop.f32.mrb[0].mxu0
    %v1245 = vadd.f32 %v970, %v1244
    %v1246 = vpop.f32.mrb[0].mxu0
    %v1247 = vpop.f32.mrb[0].mxu0
    %1248 = vdwg.mxu0
    %v1249 = vadd.f32 %v1202, %v383
    %v1250 = vadd.f32 %v1204, %v387
    %v1251 = vadd.f32 %v1243, %v391
    %v1252 = vadd.f32 %v1245, %v395
    %v1253 = vmul.f32 %v1249, 0.5
    %v1254 = vtanh.pop %v1253
    %v1255 = vmul.f32 %v1254, 0.5
    %v1256 = vadd.f32 %v1255, 0.5
    %v1257 = vmul.f32 %v1250, 0.5
    %v1258 = vtanh.pop %v1257
    %v1259 = vmul.f32 %v1258, 0.5
    %v1260 = vadd.f32 %v1259, 0.5
    %v1261 = vtanh.pop %v1251
    %v1262 = vmul.f32 %v1252, 0.5
    %v1263 = vtanh.pop %v1262
    %v1264 = vmul.f32 %v1263, 0.5
    %v1265 = vadd.f32 %v1264, 0.5
    %v1266 = vmul.f32 %v1260, 0.0
    %v1267 = vmul.f32 %v1256, %v1261
    %v1268 = vadd.f32 %v1266, %v1267
    %v1269 = vtanh.pop %v1268
    %v1270 = vmul.f32 %v1265, %v1269
    %v1271 = vadd.f32 %v1270, 0.0
    %v1272 = vld [vmem:[#allocation2 + $0x20] sm:$0xff]
    %v1273 = vld [vmem:[#allocation2 + $0x28] sm:$0xff]
    %v1274 = vld [vmem:[#allocation2 + $0x30] sm:$0xff]
    %v1275 = vld [vmem:[#allocation2 + $0x38] sm:$0xff]
    %1276 = vmatprep.subr.bf16.mxu0 %v533
    %1277 = vmatpush1.bf16.msra.mxu0 %v532
    %1278 = vmatprep.subr.bf16.mxu0 %v537
    %1279 = vmatpush1.bf16.msra.mxu0 %v536
    %1280 = vmatprep.subr.bf16.mxu0 %v541
    %1281 = vmatpush1.bf16.msra.mxu0 %v540
    %1282 = vmatprep.subr.bf16.mxu0 %v545
    %1283 = vmatpush1.bf16.msra.mxu0 %v544
    %1284 = vmatprep.subr.bf16.mxu0 %v549
    %1285 = vmatpush1.bf16.msra.mxu0 %v548
    %1286 = vmatprep.subr.bf16.mxu0 %v553
    %1287 = vmatpush1.bf16.msra.mxu0 %v552
    %1288 = vmatprep.subr.bf16.mxu0 %v557
    %1289 = vmatpush1.bf16.msra.mxu0 %v556
    %1290 = vmatprep.subr.bf16.mxu0 %v561
    %1291 = vmatpush1.bf16.msra.mxu0 %v560
    %1292 = vmatprep.subr.bf16.mxu0 0
    %1293 = vmatpush1.bf16.msra.mxu0 0
    %1294 = vmatprep.subr.bf16.mxu0 0
    %1295 = vmatpush1.bf16.msra.mxu0 0
    %1296 = vmatprep.subr.bf16.mxu0 0
    %1297 = vmatpush1.bf16.msra.mxu0 0
    %1298 = vmatprep.subr.bf16.mxu0 0
    %1299 = vmatpush1.bf16.msra.mxu0 0
    %1300 = vmatprep.subr.bf16.mxu0 0
    %1301 = vmatpush1.bf16.msra.mxu0 0
    %1302 = vmatprep.subr.bf16.mxu0 0
    %1303 = vmatpush1.bf16.msra.mxu0 0
    %1304 = vmatprep.subr.bf16.mxu0 0
    %1305 = vmatpush1.bf16.msra.mxu0 0
    %1306 = vmatprep.subr.bf16.mxu0 0
    %1307 = vmatpush1.bf16.msra.mxu0 0
    %1308 = vmatprep.mubr.bf16.mxu0 0
    %1309 = vmatmul.mubr.bf16.gmra.mrb[0].mxu0 %v974
    %v1310 = vpop.f32.mrb[0].mxu0
    %v1311 = vadd.f32 0.0, %v1310
    %v1312 = vpop.f32.mrb[0].mxu0
    %v1313 = vadd.f32 0.0, %v1312
    %v1314 = vpop.f32.mrb[0].mxu0
    %v1315 = vpop.f32.mrb[0].mxu0
    %1316 = vdwg.mxu0
    %1317 = vmatprep.subr.bf16.mxu0 %v535
    %1318 = vmatpush1.bf16.msra.mxu0 %v534
    %1319 = vmatprep.subr.bf16.mxu0 %v539
    %1320 = vmatpush1.bf16.msra.mxu0 %v538
    %1321 = vmatprep.subr.bf16.mxu0 %v543
    %1322 = vmatpush1.bf16.msra.mxu0 %v542
    %1323 = vmatprep.subr.bf16.mxu0 %v547
    %1324 = vmatpush1.bf16.msra.mxu0 %v546
    %1325 = vmatprep.subr.bf16.mxu0 %v551
    %1326 = vmatpush1.bf16.msra.mxu0 %v550
    %1327 = vmatprep.subr.bf16.mxu0 %v555
    %1328 = vmatpush1.bf16.msra.mxu0 %v554
    %1329 = vmatprep.subr.bf16.mxu0 %v559
    %1330 = vmatpush1.bf16.msra.mxu0 %v558
    %1331 = vmatprep.subr.bf16.mxu0 %v563
    %1332 = vmatpush1.bf16.msra.mxu0 %v562
    %1333 = vmatprep.subr.bf16.mxu0 0
    %1334 = vmatpush1.bf16.msra.mxu0 0
    %1335 = vmatprep.subr.bf16.mxu0 0
    %1336 = vmatpush1.bf16.msra.mxu0 0
    %1337 = vmatprep.subr.bf16.mxu0 0
    %1338 = vmatpush1.bf16.msra.mxu0 0
    %1339 = vmatprep.subr.bf16.mxu0 0
    %1340 = vmatpush1.bf16.msra.mxu0 0
    %1341 = vmatprep.subr.bf16.mxu0 0
    %1342 = vmatpush1.bf16.msra.mxu0 0
    %1343 = vmatprep.subr.bf16.mxu0 0
    %1344 = vmatpush1.bf16.msra.mxu0 0
    %1345 = vmatprep.subr.bf16.mxu0 0
    %1346 = vmatpush1.bf16.msra.mxu0 0
    %1347 = vmatprep.subr.bf16.mxu0 0
    %1348 = vmatpush1.bf16.msra.mxu0 0
    %1349 = vmatprep.mubr.bf16.mxu0 0
    %1350 = vmatmul.mubr.bf16.gmra.mrb[0].mxu0 %v974
    %v1351 = vpop.f32.mrb[0].mxu0
    %v1352 = vadd.f32 0.0, %v1351
    %v1353 = vpop.f32.mrb[0].mxu0
    %v1354 = vadd.f32 0.0, %v1353
    %v1355 = vpop.f32.mrb[0].mxu0
    %v1356 = vpop.f32.mrb[0].mxu0
    %1357 = vdwg.mxu0
    %v1358 = vadd.f32 %v1272, %v1311
    %v1359 = vadd.f32 %v1273, %v1313
    %v1360 = vadd.f32 %v1274, %v1352
    %v1361 = vadd.f32 %v1275, %v1354
    %v1362 = vmul.f32 %v1358, 0.5
    %v1363 = vtanh.pop %v1362
    %v1364 = vmul.f32 %v1363, 0.5
    %v1365 = vadd.f32 %v1364, 0.5
    %v1366 = vmul.f32 %v1359, 0.5
    %v1367 = vtanh.pop %v1366
    %v1368 = vmul.f32 %v1367, 0.5
    %v1369 = vadd.f32 %v1368, 0.5
    %v1370 = vtanh.pop %v1360
    %v1371 = vmul.f32 %v1361, 0.5
    %v1372 = vtanh.pop %v1371
    %v1373 = vmul.f32 %v1372, 0.5
    %v1374 = vadd.f32 %v1373, 0.5
    %v1375 = vmul.f32 %v1369, %v697
    %v1376 = vmul.f32 %v1365, %v1370
    %v1377 = vadd.f32 %v1375, %v1376
    %v1378 = vtanh.pop %v1377
    %v1379 = vmul.f32 %v1374, %v1378
    %v1380 = vpack.c.bf16 %v1270, %v1270
    %1381 = vmatprep.subr.bf16.mxu0 %v829
    %1382 = vmatpush1.bf16.msra.mxu0 %v828
    %1383 = vmatprep.subr.bf16.mxu0 %v833
    %1384 = vmatpush1.bf16.msra.mxu0 %v832
    %1385 = vmatprep.subr.bf16.mxu0 %v837
    %1386 = vmatpush1.bf16.msra.mxu0 %v836
    %1387 = vmatprep.subr.bf16.mxu0 %v841
    %1388 = vmatpush1.bf16.msra.mxu0 %v840
    %1389 = vmatprep.subr.bf16.mxu0 %v845
    %1390 = vmatpush1.bf16.msra.mxu0 %v844
    %1391 = vmatprep.subr.bf16.mxu0 %v849
    %1392 = vmatpush1.bf16.msra.mxu0 %v848
    %1393 = vmatprep.subr.bf16.mxu0 %v853
    %1394 = vmatpush1.bf16.msra.mxu0 %v852
    %1395 = vmatprep.subr.bf16.mxu0 %v857
    %1396 = vmatpush1.bf16.msra.mxu0 %v856
    %1397 = vmatprep.subr.bf16.mxu0 0
    %1398 = vmatpush1.bf16.msra.mxu0 0
    %1399 = vmatprep.subr.bf16.mxu0 0
    %1400 = vmatpush1.bf16.msra.mxu0 0
    %1401 = vmatprep.subr.bf16.mxu0 0
    %1402 = vmatpush1.bf16.msra.mxu0 0
    %1403 = vmatprep.subr.bf16.mxu0 0
    %1404 = vmatpush1.bf16.msra.mxu0 0
    %1405 = vmatprep.subr.bf16.mxu0 0
    %1406 = vmatpush1.bf16.msra.mxu0 0
    %1407 = vmatprep.subr.bf16.mxu0 0
    %1408 = vmatpush1.bf16.msra.mxu0 0
    %1409 = vmatprep.subr.bf16.mxu0 0
    %1410 = vmatpush1.bf16.msra.mxu0 0
    %1411 = vmatprep.subr.bf16.mxu0 0
    %1412 = vmatpush1.bf16.msra.mxu0 0
    %1413 = vmatprep.mubr.bf16.mxu0 0
    %1414 = vmatmul.mubr.bf16.gmra.mrb[0].mxu0 %v1380
    %v1415 = vpop.f32.mrb[0].mxu0
    %v1416 = vadd.f32 0.0, %v1415
    %v1417 = vpop.f32.mrb[0].mxu0
    %v1418 = vadd.f32 0.0, %v1417
    %v1419 = vpop.f32.mrb[0].mxu0
    %v1420 = vpop.f32.mrb[0].mxu0
    %1421 = vdwg.mxu0
    %1422 = vmatprep.subr.bf16.mxu0 %v831
    %1423 = vmatpush1.bf16.msra.mxu0 %v830
    %1424 = vmatprep.subr.bf16.mxu0 %v835
    %1425 = vmatpush1.bf16.msra.mxu0 %v834
    %1426 = vmatprep.subr.bf16.mxu0 %v839
    %1427 = vmatpush1.bf16.msra.mxu0 %v838
    %1428 = vmatprep.subr.bf16.mxu0 %v843
    %1429 = vmatpush1.bf16.msra.mxu0 %v842
    %1430 = vmatprep.subr.bf16.mxu0 %v847
    %1431 = vmatpush1.bf16.msra.mxu0 %v846
    %1432 = vmatprep.subr.bf16.mxu0 %v851
    %1433 = vmatpush1.bf16.msra.mxu0 %v850
    %1434 = vmatprep.subr.bf16.mxu0 %v855
    %1435 = vmatpush1.bf16.msra.mxu0 %v854
    %1436 = vmatprep.subr.bf16.mxu0 %v859
    %1437 = vmatpush1.bf16.msra.mxu0 %v858
    %1438 = vmatprep.subr.bf16.mxu0 0
    %1439 = vmatpush1.bf16.msra.mxu0 0
    %1440 = vmatprep.subr.bf16.mxu0 0
    %1441 = vmatpush1.bf16.msra.mxu0 0
    %1442 = vmatprep.subr.bf16.mxu0 0
    %1443 = vmatpush1.bf16.msra.mxu0 0
    %1444 = vmatprep.subr.bf16.mxu0 0
    %1445 = vmatpush1.bf16.msra.mxu0 0
    %1446 = vmatprep.subr.bf16.mxu0 0
    %1447 = vmatpush1.bf16.msra.mxu0 0
    %1448 = vmatprep.subr.bf16.mxu0 0
    %1449 = vmatpush1.bf16.msra.mxu0 0
    %1450 = vmatprep.subr.bf16.mxu0 0
    %1451 = vmatpush1.bf16.msra.mxu0 0
    %1452 = vmatprep.subr.bf16.mxu0 0
    %1453 = vmatpush1.bf16.msra.mxu0 0
    %1454 = vmatprep.mubr.bf16.mxu0 0
    %1455 = vmatmul.mubr.bf16.gmra.mrb[0].mxu0 %v1380
    %v1456 = vpop.f32.mrb[0].mxu0
    %v1457 = vadd.f32 0.0, %v1456
    %v1458 = vpop.f32.mrb[0].mxu0
    %v1459 = vadd.f32 0.0, %v1458
    %v1460 = vpop.f32.mrb[0].mxu0
    %v1461 = vpop.f32.mrb[0].mxu0
    %1462 = vdwg.mxu0
    %v1463 = vpack.c.bf16 %v1379, %v1379
    %1464 = vmatprep.subr.bf16.mxu0 %v1104
    %1465 = vmatpush1.bf16.msra.mxu0 %v1103
    %1466 = vmatprep.subr.bf16.mxu0 %v1108
    %1467 = vmatpush1.bf16.msra.mxu0 %v1107
    %1468 = vmatprep.subr.bf16.mxu0 %v1112
    %1469 = vmatpush1.bf16.msra.mxu0 %v1111
    %1470 = vmatprep.subr.bf16.mxu0 %v1116
    %1471 = vmatpush1.bf16.msra.mxu0 %v1115
    %1472 = vmatprep.subr.bf16.mxu0 %v1120
    %1473 = vmatpush1.bf16.msra.mxu0 %v1119
    %1474 = vmatprep.subr.bf16.mxu0 %v1124
    %1475 = vmatpush1.bf16.msra.mxu0 %v1123
    %1476 = vmatprep.subr.bf16.mxu0 %v1128
    %1477 = vmatpush1.bf16.msra.mxu0 %v1127
    %1478 = vmatprep.subr.bf16.mxu0 %v1132
    %1479 = vmatpush1.bf16.msra.mxu0 %v1131
    %1480 = vmatprep.subr.bf16.mxu0 0
    %1481 = vmatpush1.bf16.msra.mxu0 0
    %1482 = vmatprep.subr.bf16.mxu0 0
    %1483 = vmatpush1.bf16.msra.mxu0 0
    %1484 = vmatprep.subr.bf16.mxu0 0
    %1485 = vmatpush1.bf16.msra.mxu0 0
    %1486 = vmatprep.subr.bf16.mxu0 0
    %1487 = vmatpush1.bf16.msra.mxu0 0
    %1488 = vmatprep.subr.bf16.mxu0 0
    %1489 = vmatpush1.bf16.msra.mxu0 0
    %1490 = vmatprep.subr.bf16.mxu0 0
    %1491 = vmatpush1.bf16.msra.mxu0 0
    %1492 = vmatprep.subr.bf16.mxu0 0
    %1493 = vmatpush1.bf16.msra.mxu0 0
    %1494 = vmatprep.subr.bf16.mxu0 0
    %1495 = vmatpush1.bf16.msra.mxu0 0
    %1496 = vmatprep.mubr.bf16.mxu0 0
    %1497 = vmatmul.mubr.bf16.gmra.mrb[0].mxu0 %v1463
    %v1498 = vpop.f32.mrb[0].mxu0
    %v1499 = vadd.f32 %v1416, %v1498
    %v1500 = vpop.f32.mrb[0].mxu0
    %v1501 = vadd.f32 %v1418, %v1500
    %v1502 = vpop.f32.mrb[0].mxu0
    %v1503 = vpop.f32.mrb[0].mxu0
    %1504 = vdwg.mxu0
    %1505 = vmatprep.subr.bf16.mxu0 %v1106
    %1506 = vmatpush1.bf16.msra.mxu0 %v1105
    %1507 = vmatprep.subr.bf16.mxu0 %v1110
    %1508 = vmatpush1.bf16.msra.mxu0 %v1109
    %1509 = vmatprep.subr.bf16.mxu0 %v1114
    %1510 = vmatpush1.bf16.msra.mxu0 %v1113
    %1511 = vmatprep.subr.bf16.mxu0 %v1118
    %1512 = vmatpush1.bf16.msra.mxu0 %v1117
    %1513 = vmatprep.subr.bf16.mxu0 %v1122
    %1514 = vmatpush1.bf16.msra.mxu0 %v1121
    %1515 = vmatprep.subr.bf16.mxu0 %v1126
    %1516 = vmatpush1.bf16.msra.mxu0 %v1125
    %1517 = vmatprep.subr.bf16.mxu0 %v1130
    %1518 = vmatpush1.bf16.msra.mxu0 %v1129
    %1519 = vmatprep.subr.bf16.mxu0 %v1134
    %1520 = vmatpush1.bf16.msra.mxu0 %v1133
    %1521 = vmatprep.subr.bf16.mxu0 0
    %1522 = vmatpush1.bf16.msra.mxu0 0
    %1523 = vmatprep.subr.bf16.mxu0 0
    %1524 = vmatpush1.bf16.msra.mxu0 0
    %1525 = vmatprep.subr.bf16.mxu0 0
    %1526 = vmatpush1.bf16.msra.mxu0 0
    %1527 = vmatprep.subr.bf16.mxu0 0
    %1528 = vmatpush1.bf16.msra.mxu0 0
    %1529 = vmatprep.subr.bf16.mxu0 0
    %1530 = vmatpush1.bf16.msra.mxu0 0
    %1531 = vmatprep.subr.bf16.mxu0 0
    %1532 = vmatpush1.bf16.msra.mxu0 0
    %1533 = vmatprep.subr.bf16.mxu0 0
    %1534 = vmatpush1.bf16.msra.mxu0 0
    %1535 = vmatprep.subr.bf16.mxu0 0
    %1536 = vmatpush1.bf16.msra.mxu0 0
    %1537 = vmatprep.mubr.bf16.mxu0 0
    %1538 = vmatmul.mubr.bf16.gmra.mrb[0].mxu0 %v1463
    %v1539 = vpop.f32.mrb[0].mxu0
    %v1540 = vadd.f32 %v1457, %v1539
    %v1541 = vpop.f32.mrb[0].mxu0
    %v1542 = vadd.f32 %v1459, %v1541
    %v1543 = vpop.f32.mrb[0].mxu0
    %v1544 = vpop.f32.mrb[0].mxu0
    %1545 = vdwg.mxu0
    %v1546 = vadd.f32 %v1499, %v383
    %v1547 = vadd.f32 %v1501, %v387
    %v1548 = vadd.f32 %v1540, %v391
    %v1549 = vadd.f32 %v1542, %v395
    %v1550 = vmul.f32 %v1546, 0.5
    %v1551 = vtanh.pop %v1550
    %v1552 = vmul.f32 %v1551, 0.5
    %v1553 = vadd.f32 %v1552, 0.5
    %v1554 = vmul.f32 %v1547, 0.5
    %v1555 = vtanh.pop %v1554
    %v1556 = vmul.f32 %v1555, 0.5
    %v1557 = vadd.f32 %v1556, 0.5
    %v1558 = vtanh.pop %v1548
    %v1559 = vmul.f32 %v1549, 0.5
    %v1560 = vtanh.pop %v1559
    %v1561 = vmul.f32 %v1560, 0.5
    %v1562 = vadd.f32 %v1561, 0.5
    %v1563 = vmul.f32 %v1557, %v1268
    %v1564 = vmul.f32 %v1553, %v1558
    %v1565 = vadd.f32 %v1563, %v1564
    %v1566 = vtanh.pop %v1565
    %v1567 = vmul.f32 %v1562, %v1566
    %v1568 = vadd.f32 %v1271, %v1567
    %v1569 = vld [vmem:[#allocation2 + $0x40] sm:$0xff]
    %v1570 = vld [vmem:[#allocation2 + $0x48] sm:$0xff]
    %v1571 = vld [vmem:[#allocation2 + $0x50] sm:$0xff]
    %v1572 = vld [vmem:[#allocation2 + $0x58] sm:$0xff]
    %1573 = vmatprep.subr.bf16.mxu0 %v533
    %1574 = vmatpush1.bf16.msra.mxu0 %v532
    %1575 = vmatprep.subr.bf16.mxu0 %v537
    %1576 = vmatpush1.bf16.msra.mxu0 %v536
    %1577 = vmatprep.subr.bf16.mxu0 %v541
    %1578 = vmatpush1.bf16.msra.mxu0 %v540
    %1579 = vmatprep.subr.bf16.mxu0 %v545
    %1580 = vmatpush1.bf16.msra.mxu0 %v544
    %1581 = vmatprep.subr.bf16.mxu0 %v549
    %1582 = vmatpush1.bf16.msra.mxu0 %v548
    %1583 = vmatprep.subr.bf16.mxu0 %v553
    %1584 = vmatpush1.bf16.msra.mxu0 %v552
    %1585 = vmatprep.subr.bf16.mxu0 %v557
    %1586 = vmatpush1.bf16.msra.mxu0 %v556
    %1587 = vmatprep.subr.bf16.mxu0 %v561
    %1588 = vmatpush1.bf16.msra.mxu0 %v560
    %1589 = vmatprep.subr.bf16.mxu0 0
    %1590 = vmatpush1.bf16.msra.mxu0 0
    %1591 = vmatprep.subr.bf16.mxu0 0
    %1592 = vmatpush1.bf16.msra.mxu0 0
    %1593 = vmatprep.subr.bf16.mxu0 0
    %1594 = vmatpush1.bf16.msra.mxu0 0
    %1595 = vmatprep.subr.bf16.mxu0 0
    %1596 = vmatpush1.bf16.msra.mxu0 0
    %1597 = vmatprep.subr.bf16.mxu0 0
    %1598 = vmatpush1.bf16.msra.mxu0 0
    %1599 = vmatprep.subr.bf16.mxu0 0
    %1600 = vmatpush1.bf16.msra.mxu0 0
    %1601 = vmatprep.subr.bf16.mxu0 0
    %1602 = vmatpush1.bf16.msra.mxu0 0
    %1603 = vmatprep.subr.bf16.mxu0 0
    %1604 = vmatpush1.bf16.msra.mxu0 0
    %1605 = vmatprep.mubr.bf16.mxu0 0
    %1606 = vmatmul.mubr.bf16.gmra.mrb[0].mxu0 %v1463
    %v1607 = vpop.f32.mrb[0].mxu0
    %v1608 = vadd.f32 0.0, %v1607
    %v1609 = vpop.f32.mrb[0].mxu0
    %v1610 = vadd.f32 0.0, %v1609
    %v1611 = vpop.f32.mrb[0].mxu0
    %v1612 = vpop.f32.mrb[0].mxu0
    %1613 = vdwg.mxu0
    %1614 = vmatprep.subr.bf16.mxu0 %v535
    %1615 = vmatpush1.bf16.msra.mxu0 %v534
    %1616 = vmatprep.subr.bf16.mxu0 %v539
    %1617 = vmatpush1.bf16.msra.mxu0 %v538
    %1618 = vmatprep.subr.bf16.mxu0 %v543
    %1619 = vmatpush1.bf16.msra.mxu0 %v542
    %1620 = vmatprep.subr.bf16.mxu0 %v547
    %1621 = vmatpush1.bf16.msra.mxu0 %v546
    %1622 = vmatprep.subr.bf16.mxu0 %v551
    %1623 = vmatpush1.bf16.msra.mxu0 %v550
    %1624 = vmatprep.subr.bf16.mxu0 %v555
    %1625 = vmatpush1.bf16.msra.mxu0 %v554
    %1626 = vmatprep.subr.bf16.mxu0 %v559
    %1627 = vmatpush1.bf16.msra.mxu0 %v558
    %1628 = vmatprep.subr.bf16.mxu0 %v563
    %1629 = vmatpush1.bf16.msra.mxu0 %v562
    %1630 = vmatprep.subr.bf16.mxu0 0
    %1631 = vmatpush1.bf16.msra.mxu0 0
    %1632 = vmatprep.subr.bf16.mxu0 0
    %1633 = vmatpush1.bf16.msra.mxu0 0
    %1634 = vmatprep.subr.bf16.mxu0 0
    %1635 = vmatpush1.bf16.msra.mxu0 0
    %1636 = vmatprep.subr.bf16.mxu0 0
    %1637 = vmatpush1.bf16.msra.mxu0 0
    %1638 = vmatprep.subr.bf16.mxu0 0
    %1639 = vmatpush1.bf16.msra.mxu0 0
    %1640 = vmatprep.subr.bf16.mxu0 0
    %1641 = vmatpush1.bf16.msra.mxu0 0
    %1642 = vmatprep.subr.bf16.mxu0 0
    %1643 = vmatpush1.bf16.msra.mxu0 0
    %1644 = vmatprep.subr.bf16.mxu0 0
    %1645 = vmatpush1.bf16.msra.mxu0 0
    %1646 = vmatprep.mubr.bf16.mxu0 0
    %1647 = vmatmul.mubr.bf16.gmra.mrb[0].mxu0 %v1463
    %v1648 = vpop.f32.mrb[0].mxu0
    %v1649 = vadd.f32 0.0, %v1648
    %v1650 = vpop.f32.mrb[0].mxu0
    %v1651 = vadd.f32 0.0, %v1650
    %v1652 = vpop.f32.mrb[0].mxu0
    %v1653 = vpop.f32.mrb[0].mxu0
    %1654 = vdwg.mxu0
    %v1655 = vadd.f32 %v1569, %v1608
    %v1656 = vadd.f32 %v1570, %v1610
    %v1657 = vadd.f32 %v1571, %v1649
    %v1658 = vadd.f32 %v1572, %v1651
    %v1659 = vmul.f32 %v1655, 0.5
    %v1660 = vtanh.pop %v1659
    %v1661 = vmul.f32 %v1660, 0.5
    %v1662 = vadd.f32 %v1661, 0.5
    %v1663 = vmul.f32 %v1656, 0.5
    %v1664 = vtanh.pop %v1663
    %v1665 = vmul.f32 %v1664, 0.5
    %v1666 = vadd.f32 %v1665, 0.5
    %v1667 = vtanh.pop %v1657
    %v1668 = vmul.f32 %v1658, 0.5
    %v1669 = vtanh.pop %v1668
    %v1670 = vmul.f32 %v1669, 0.5
    %v1671 = vadd.f32 %v1670, 0.5
    %v1672 = vmul.f32 %v1666, %v1377
    %v1673 = vmul.f32 %v1662, %v1667
    %v1674 = vadd.f32 %v1672, %v1673
    %v1675 = vtanh.pop %v1674
    %v1676 = vmul.f32 %v1671, %v1675
    %v1677 = vpack.c.bf16 %v1567, %v1567
    %1678 = vmatprep.subr.bf16.mxu0 %v829
    %1679 = vmatpush1.bf16.msra.mxu0 %v828
    %1680 = vmatprep.subr.bf16.mxu0 %v833
    %1681 = vmatpush1.bf16.msra.mxu0 %v832
    %1682 = vmatprep.subr.bf16.mxu0 %v837
    %1683 = vmatpush1.bf16.msra.mxu0 %v836
    %1684 = vmatprep.subr.bf16.mxu0 %v841
    %1685 = vmatpush1.bf16.msra.mxu0 %v840
    %1686 = vmatprep.subr.bf16.mxu0 %v845
    %1687 = vmatpush1.bf16.msra.mxu0 %v844
    %1688 = vmatprep.subr.bf16.mxu0 %v849
    %1689 = vmatpush1.bf16.msra.mxu0 %v848
    %1690 = vmatprep.subr.bf16.mxu0 %v853
    %1691 = vmatpush1.bf16.msra.mxu0 %v852
    %1692 = vmatprep.subr.bf16.mxu0 %v857
    %1693 = vmatpush1.bf16.msra.mxu0 %v856
    %1694 = vmatprep.subr.bf16.mxu0 0
    %1695 = vmatpush1.bf16.msra.mxu0 0
    %1696 = vmatprep.subr.bf16.mxu0 0
    %1697 = vmatpush1.bf16.msra.mxu0 0
    %1698 = vmatprep.subr.bf16.mxu0 0
    %1699 = vmatpush1.bf16.msra.mxu0 0
    %1700 = vmatprep.subr.bf16.mxu0 0
    %1701 = vmatpush1.bf16.msra.mxu0 0
    %1702 = vmatprep.subr.bf16.mxu0 0
    %1703 = vmatpush1.bf16.msra.mxu0 0
    %1704 = vmatprep.subr.bf16.mxu0 0
    %1705 = vmatpush1.bf16.msra.mxu0 0
    %1706 = vmatprep.subr.bf16.mxu0 0
    %1707 = vmatpush1.bf16.msra.mxu0 0
    %1708 = vmatprep.subr.bf16.mxu0 0
    %1709 = vmatpush1.bf16.msra.mxu0 0
    %1710 = vmatprep.mubr.bf16.mxu0 0
    %1711 = vmatmul.mubr.bf16.gmra.mrb[0].mxu0 %v1677
    %v1712 = vpop.f32.mrb[0].mxu0
    %v1713 = vadd.f32 0.0, %v1712
    %v1714 = vpop.f32.mrb[0].mxu0
    %v1715 = vadd.f32 0.0, %v1714
    %v1716 = vpop.f32.mrb[0].mxu0
    %v1717 = vpop.f32.mrb[0].mxu0
    %1718 = vdwg.mxu0
    %1719 = vmatprep.subr.bf16.mxu0 %v831
    %1720 = vmatpush1.bf16.msra.mxu0 %v830
    %1721 = vmatprep.subr.bf16.mxu0 %v835
    %1722 = vmatpush1.bf16.msra.mxu0 %v834
    %1723 = vmatprep.subr.bf16.mxu0 %v839
    %1724 = vmatpush1.bf16.msra.mxu0 %v838
    %1725 = vmatprep.subr.bf16.mxu0 %v843
    %1726 = vmatpush1.bf16.msra.mxu0 %v842
    %1727 = vmatprep.subr.bf16.mxu0 %v847
    %1728 = vmatpush1.bf16.msra.mxu0 %v846
    %1729 = vmatprep.subr.bf16.mxu0 %v851
    %1730 = vmatpush1.bf16.msra.mxu0 %v850
    %1731 = vmatprep.subr.bf16.mxu0 %v855
    %1732 = vmatpush1.bf16.msra.mxu0 %v854
    %1733 = vmatprep.subr.bf16.mxu0 %v859
    %1734 = vmatpush1.bf16.msra.mxu0 %v858
    %1735 = vmatprep.subr.bf16.mxu0 0
    %1736 = vmatpush1.bf16.msra.mxu0 0
    %1737 = vmatprep.subr.bf16.mxu0 0
    %1738 = vmatpush1.bf16.msra.mxu0 0
    %1739 = vmatprep.subr.bf16.mxu0 0
    %1740 = vmatpush1.bf16.msra.mxu0 0
    %1741 = vmatprep.subr.bf16.mxu0 0
    %1742 = vmatpush1.bf16.msra.mxu0 0
    %1743 = vmatprep.subr.bf16.mxu0 0
    %1744 = vmatpush1.bf16.msra.mxu0 0
    %1745 = vmatprep.subr.bf16.mxu0 0
    %1746 = vmatpush1.bf16.msra.mxu0 0
    %1747 = vmatprep.subr.bf16.mxu0 0
    %1748 = vmatpush1.bf16.msra.mxu0 0
    %1749 = vmatprep.subr.bf16.mxu0 0
    %1750 = vmatpush1.bf16.msra.mxu0 0
    %1751 = vmatprep.mubr.bf16.mxu0 0
    %1752 = vmatmul.mubr.bf16.gmra.mrb[0].mxu0 %v1677
    %v1753 = vpop.f32.mrb[0].mxu0
    %v1754 = vadd.f32 0.0, %v1753
    %v1755 = vpop.f32.mrb[0].mxu0
    %v1756 = vadd.f32 0.0, %v1755
    %v1757 = vpop.f32.mrb[0].mxu0
    %v1758 = vpop.f32.mrb[0].mxu0
    %1759 = vdwg.mxu0
    %v1760 = vpack.c.bf16 %v1676, %v1676
    %1761 = vmatprep.subr.bf16.mxu0 %v1104
    %1762 = vmatpush1.bf16.msra.mxu0 %v1103
    %1763 = vmatprep.subr.bf16.mxu0 %v1108
    %1764 = vmatpush1.bf16.msra.mxu0 %v1107
    %1765 = vmatprep.subr.bf16.mxu0 %v1112
    %1766 = vmatpush1.bf16.msra.mxu0 %v1111
    %1767 = vmatprep.subr.bf16.mxu0 %v1116
    %1768 = vmatpush1.bf16.msra.mxu0 %v1115
    %1769 = vmatprep.subr.bf16.mxu0 %v1120
    %1770 = vmatpush1.bf16.msra.mxu0 %v1119
    %1771 = vmatprep.subr.bf16.mxu0 %v1124
    %1772 = vmatpush1.bf16.msra.mxu0 %v1123
    %1773 = vmatprep.subr.bf16.mxu0 %v1128
    %1774 = vmatpush1.bf16.msra.mxu0 %v1127
    %1775 = vmatprep.subr.bf16.mxu0 %v1132
    %1776 = vmatpush1.bf16.msra.mxu0 %v1131
    %1777 = vmatprep.subr.bf16.mxu0 0
    %1778 = vmatpush1.bf16.msra.mxu0 0
    %1779 = vmatprep.subr.bf16.mxu0 0
    %1780 = vmatpush1.bf16.msra.mxu0 0
    %1781 = vmatprep.subr.bf16.mxu0 0
    %1782 = vmatpush1.bf16.msra.mxu0 0
    %1783 = vmatprep.subr.bf16.mxu0 0
    %1784 = vmatpush1.bf16.msra.mxu0 0
    %1785 = vmatprep.subr.bf16.mxu0 0
    %1786 = vmatpush1.bf16.msra.mxu0 0
    %1787 = vmatprep.subr.bf16.mxu0 0
    %1788 = vmatpush1.bf16.msra.mxu0 0
    %1789 = vmatprep.subr.bf16.mxu0 0
    %1790 = vmatpush1.bf16.msra.mxu0 0
    %1791 = vmatprep.subr.bf16.mxu0 0
    %1792 = vmatpush1.bf16.msra.mxu0 0
    %1793 = vmatprep.mubr.bf16.mxu0 0
    %1794 = vmatmul.mubr.bf16.gmra.mrb[0].mxu0 %v1760
    %v1795 = vpop.f32.mrb[0].mxu0
    %v1796 = vadd.f32 %v1713, %v1795
    %v1797 = vpop.f32.mrb[0].mxu0
    %v1798 = vadd.f32 %v1715, %v1797
    %v1799 = vpop.f32.mrb[0].mxu0
    %v1800 = vpop.f32.mrb[0].mxu0
    %1801 = vdwg.mxu0
    %1802 = vmatprep.subr.bf16.mxu0 %v1106
    %1803 = vmatpush1.bf16.msra.mxu0 %v1105
    %1804 = vmatprep.subr.bf16.mxu0 %v1110
    %1805 = vmatpush1.bf16.msra.mxu0 %v1109
    %1806 = vmatprep.subr.bf16.mxu0 %v1114
    %1807 = vmatpush1.bf16.msra.mxu0 %v1113
    %1808 = vmatprep.subr.bf16.mxu0 %v1118
    %1809 = vmatpush1.bf16.msra.mxu0 %v1117
    %1810 = vmatprep.subr.bf16.mxu0 %v1122
    %1811 = vmatpush1.bf16.msra.mxu0 %v1121
    %1812 = vmatprep.subr.bf16.mxu0 %v1126
    %1813 = vmatpush1.bf16.msra.mxu0 %v1125
    %1814 = vmatprep.subr.bf16.mxu0 %v1130
    %1815 = vmatpush1.bf16.msra.mxu0 %v1129
    %1816 = vmatprep.subr.bf16.mxu0 %v1134
    %1817 = vmatpush1.bf16.msra.mxu0 %v1133
    %1818 = vmatprep.subr.bf16.mxu0 0
    %1819 = vmatpush1.bf16.msra.mxu0 0
    %1820 = vmatprep.subr.bf16.mxu0 0
    %1821 = vmatpush1.bf16.msra.mxu0 0
    %1822 = vmatprep.subr.bf16.mxu0 0
    %1823 = vmatpush1.bf16.msra.mxu0 0
    %1824 = vmatprep.subr.bf16.mxu0 0
    %1825 = vmatpush1.bf16.msra.mxu0 0
    %1826 = vmatprep.subr.bf16.mxu0 0
    %1827 = vmatpush1.bf16.msra.mxu0 0
    %1828 = vmatprep.subr.bf16.mxu0 0
    %1829 = vmatpush1.bf16.msra.mxu0 0
    %1830 = vmatprep.subr.bf16.mxu0 0
    %1831 = vmatpush1.bf16.msra.mxu0 0
    %1832 = vmatprep.subr.bf16.mxu0 0
    %1833 = vmatpush1.bf16.msra.mxu0 0
    %1834 = vmatprep.mubr.bf16.mxu0 0
    %1835 = vmatmul.mubr.bf16.gmra.mrb[0].mxu0 %v1760
    %v1836 = vpop.f32.mrb[0].mxu0
    %v1837 = vadd.f32 %v1754, %v1836
    %v1838 = vpop.f32.mrb[0].mxu0
    %v1839 = vadd.f32 %v1756, %v1838
    %v1840 = vpop.f32.mrb[0].mxu0
    %v1841 = vpop.f32.mrb[0].mxu0
    %1842 = vdwg.mxu0
    %v1843 = vadd.f32 %v1796, %v383
    %v1844 = vadd.f32 %v1798, %v387
    %v1845 = vadd.f32 %v1837, %v391
    %v1846 = vadd.f32 %v1839, %v395
    %v1847 = vmul.f32 %v1843, 0.5
    %v1848 = vtanh.pop %v1847
    %v1849 = vmul.f32 %v1848, 0.5
    %v1850 = vadd.f32 %v1849, 0.5
    %v1851 = vmul.f32 %v1844, 0.5
    %v1852 = vtanh.pop %v1851
    %v1853 = vmul.f32 %v1852, 0.5
    %v1854 = vadd.f32 %v1853, 0.5
    %v1855 = vtanh.pop %v1845
    %v1856 = vmul.f32 %v1846, 0.5
    %v1857 = vtanh.pop %v1856
    %v1858 = vmul.f32 %v1857, 0.5
    %v1859 = vadd.f32 %v1858, 0.5
    %v1860 = vmul.f32 %v1854, %v1565
    %v1861 = vmul.f32 %v1850, %v1855
    %v1862 = vadd.f32 %v1860, %v1861
    %v1863 = vtanh.pop %v1862
    %v1864 = vmul.f32 %v1859, %v1863
    %v1865 = vadd.f32 %v1568, %v1864
    %v1866 = vld [vmem:[#allocation2 + $0x60] sm:$0xff]
    %v1867 = vld [vmem:[#allocation2 + $0x68] sm:$0xff]
    %v1868 = vld [vmem:[#allocation2 + $0x70] sm:$0xff]
    %v1869 = vld [vmem:[#allocation2 + $0x78] sm:$0xff]
    %1870 = vmatprep.subr.bf16.mxu0 %v533
    %1871 = vmatpush1.bf16.msra.mxu0 %v532
    %1872 = vmatprep.subr.bf16.mxu0 %v537
    %1873 = vmatpush1.bf16.msra.mxu0 %v536
    %1874 = vmatprep.subr.bf16.mxu0 %v541
    %1875 = vmatpush1.bf16.msra.mxu0 %v540
    %1876 = vmatprep.subr.bf16.mxu0 %v545
    %1877 = vmatpush1.bf16.msra.mxu0 %v544
    %1878 = vmatprep.subr.bf16.mxu0 %v549
    %1879 = vmatpush1.bf16.msra.mxu0 %v548
    %1880 = vmatprep.subr.bf16.mxu0 %v553
    %1881 = vmatpush1.bf16.msra.mxu0 %v552
    %1882 = vmatprep.subr.bf16.mxu0 %v557
    %1883 = vmatpush1.bf16.msra.mxu0 %v556
    %1884 = vmatprep.subr.bf16.mxu0 %v561
    %1885 = vmatpush1.bf16.msra.mxu0 %v560
    %1886 = vmatprep.subr.bf16.mxu0 0
    %1887 = vmatpush1.bf16.msra.mxu0 0
    %1888 = vmatprep.subr.bf16.mxu0 0
    %1889 = vmatpush1.bf16.msra.mxu0 0
    %1890 = vmatprep.subr.bf16.mxu0 0
    %1891 = vmatpush1.bf16.msra.mxu0 0
    %1892 = vmatprep.subr.bf16.mxu0 0
    %1893 = vmatpush1.bf16.msra.mxu0 0
    %1894 = vmatprep.subr.bf16.mxu0 0
    %1895 = vmatpush1.bf16.msra.mxu0 0
    %1896 = vmatprep.subr.bf16.mxu0 0
    %1897 = vmatpush1.bf16.msra.mxu0 0
    %1898 = vmatprep.subr.bf16.mxu0 0
    %1899 = vmatpush1.bf16.msra.mxu0 0
    %1900 = vmatprep.subr.bf16.mxu0 0
    %1901 = vmatpush1.bf16.msra.mxu0 0
    %1902 = vmatprep.mubr.bf16.mxu0 0
    %1903 = vmatmul.mubr.bf16.gmra.mrb[0].mxu0 %v1760
    %v1904 = vpop.f32.mrb[0].mxu0
    %v1905 = vadd.f32 0.0, %v1904
    %v1906 = vpop.f32.mrb[0].mxu0
    %v1907 = vadd.f32 0.0, %v1906
    %v1908 = vpop.f32.mrb[0].mxu0
    %v1909 = vpop.f32.mrb[0].mxu0
    %1910 = vdwg.mxu0
    %1911 = vmatprep.subr.bf16.mxu0 %v535
    %1912 = vmatpush1.bf16.msra.mxu0 %v534
    %1913 = vmatprep.subr.bf16.mxu0 %v539
    %1914 = vmatpush1.bf16.msra.mxu0 %v538
    %1915 = vmatprep.subr.bf16.mxu0 %v543
    %1916 = vmatpush1.bf16.msra.mxu0 %v542
    %1917 = vmatprep.subr.bf16.mxu0 %v547
    %1918 = vmatpush1.bf16.msra.mxu0 %v546
    %1919 = vmatprep.subr.bf16.mxu0 %v551
    %1920 = vmatpush1.bf16.msra.mxu0 %v550
    %1921 = vmatprep.subr.bf16.mxu0 %v555
    %1922 = vmatpush1.bf16.msra.mxu0 %v554
    %1923 = vmatprep.subr.bf16.mxu0 %v559
    %1924 = vmatpush1.bf16.msra.mxu0 %v558
    %1925 = vmatprep.subr.bf16.mxu0 %v563
    %1926 = vmatpush1.bf16.msra.mxu0 %v562
    %1927 = vmatprep.subr.bf16.mxu0 0
    %1928 = vmatpush1.bf16.msra.mxu0 0
    %1929 = vmatprep.subr.bf16.mxu0 0
    %1930 = vmatpush1.bf16.msra.mxu0 0
    %1931 = vmatprep.subr.bf16.mxu0 0
    %1932 = vmatpush1.bf16.msra.mxu0 0
    %1933 = vmatprep.subr.bf16.mxu0 0
    %1934 = vmatpush1.bf16.msra.mxu0 0
    %1935 = vmatprep.subr.bf16.mxu0 0
    %1936 = vmatpush1.bf16.msra.mxu0 0
    %1937 = vmatprep.subr.bf16.mxu0 0
    %1938 = vmatpush1.bf16.msra.mxu0 0
    %1939 = vmatprep.subr.bf16.mxu0 0
    %1940 = vmatpush1.bf16.msra.mxu0 0
    %1941 = vmatprep.subr.bf16.mxu0 0
    %1942 = vmatpush1.bf16.msra.mxu0 0
    %1943 = vmatprep.mubr.bf16.mxu0 0
    %1944 = vmatmul.mubr.bf16.gmra.mrb[0].mxu0 %v1760
    %v1945 = vpop.f32.mrb[0].mxu0
    %v1946 = vadd.f32 0.0, %v1945
    %v1947 = vpop.f32.mrb[0].mxu0
    %v1948 = vadd.f32 0.0, %v1947
    %v1949 = vpop.f32.mrb[0].mxu0
    %v1950 = vpop.f32.mrb[0].mxu0
    %1951 = vdwg.mxu0
    %v1952 = vadd.f32 %v1866, %v1905
    %v1953 = vadd.f32 %v1867, %v1907
    %v1954 = vadd.f32 %v1868, %v1946
    %v1955 = vadd.f32 %v1869, %v1948
    %v1956 = vmul.f32 %v1952, 0.5
    %v1957 = vtanh.pop %v1956
    %v1958 = vmul.f32 %v1957, 0.5
    %v1959 = vadd.f32 %v1958, 0.5
    %v1960 = vmul.f32 %v1953, 0.5
    %v1961 = vtanh.pop %v1960
    %v1962 = vmul.f32 %v1961, 0.5
    %v1963 = vadd.f32 %v1962, 0.5
    %v1964 = vtanh.pop %v1954
    %v1965 = vmul.f32 %v1955, 0.5
    %v1966 = vtanh.pop %v1965
    %v1967 = vmul.f32 %v1966, 0.5
    %v1968 = vadd.f32 %v1967, 0.5
    %v1969 = vmul.f32 %v1963, %v1674
    %v1970 = vmul.f32 %v1959, %v1964
    %v1971 = vadd.f32 %v1969, %v1970
    %v1972 = vtanh.pop %v1971
    %v1973 = vmul.f32 %v1968, %v1972
    %v1974 = vpack.c.bf16 %v1864, %v1864
    %1975 = vmatprep.subr.bf16.mxu0 %v829
    %1976 = vmatpush1.bf16.msra.mxu0 %v828
    %1977 = vmatprep.subr.bf16.mxu0 %v833
    %1978 = vmatpush1.bf16.msra.mxu0 %v832
    %1979 = vmatprep.subr.bf16.mxu0 %v837
    %1980 = vmatpush1.bf16.msra.mxu0 %v836
    %1981 = vmatprep.subr.bf16.mxu0 %v841
    %1982 = vmatpush1.bf16.msra.mxu0 %v840
    %1983 = vmatprep.subr.bf16.mxu0 %v845
    %1984 = vmatpush1.bf16.msra.mxu0 %v844
    %1985 = vmatprep.subr.bf16.mxu0 %v849
    %1986 = vmatpush1.bf16.msra.mxu0 %v848
    %1987 = vmatprep.subr.bf16.mxu0 %v853
    %1988 = vmatpush1.bf16.msra.mxu0 %v852
    %1989 = vmatprep.subr.bf16.mxu0 %v857
    %1990 = vmatpush1.bf16.msra.mxu0 %v856
    %1991 = vmatprep.subr.bf16.mxu0 0
    %1992 = vmatpush1.bf16.msra.mxu0 0
    %1993 = vmatprep.subr.bf16.mxu0 0
    %1994 = vmatpush1.bf16.msra.mxu0 0
    %1995 = vmatprep.subr.bf16.mxu0 0
    %1996 = vmatpush1.bf16.msra.mxu0 0
    %1997 = vmatprep.subr.bf16.mxu0 0
    %1998 = vmatpush1.bf16.msra.mxu0 0
    %1999 = vmatprep.subr.bf16.mxu0 0
    %2000 = vmatpush1.bf16.msra.mxu0 0
    %2001 = vmatprep.subr.bf16.mxu0 0
    %2002 = vmatpush1.bf16.msra.mxu0 0
    %2003 = vmatprep.subr.bf16.mxu0 0
    %2004 = vmatpush1.bf16.msra.mxu0 0
    %2005 = vmatprep.subr.bf16.mxu0 0
    %2006 = vmatpush1.bf16.msra.mxu0 0
    %2007 = vmatprep.mubr.bf16.mxu0 0
    %2008 = vmatmul.mubr.bf16.gmra.mrb[0].mxu0 %v1974
    %v2009 = vpop.f32.mrb[0].mxu0
    %v2010 = vadd.f32 0.0, %v2009
    %v2011 = vpop.f32.mrb[0].mxu0
    %v2012 = vadd.f32 0.0, %v2011
    %v2013 = vpop.f32.mrb[0].mxu0
    %v2014 = vpop.f32.mrb[0].mxu0
    %2015 = vdwg.mxu0
    %2016 = vmatprep.subr.bf16.mxu0 %v831
    %2017 = vmatpush1.bf16.msra.mxu0 %v830
    %2018 = vmatprep.subr.bf16.mxu0 %v835
    %2019 = vmatpush1.bf16.msra.mxu0 %v834
    %2020 = vmatprep.subr.bf16.mxu0 %v839
    %2021 = vmatpush1.bf16.msra.mxu0 %v838
    %2022 = vmatprep.subr.bf16.mxu0 %v843
    %2023 = vmatpush1.bf16.msra.mxu0 %v842
    %2024 = vmatprep.subr.bf16.mxu0 %v847
    %2025 = vmatpush1.bf16.msra.mxu0 %v846
    %2026 = vmatprep.subr.bf16.mxu0 %v851
    %2027 = vmatpush1.bf16.msra.mxu0 %v850
    %2028 = vmatprep.subr.bf16.mxu0 %v855
    %2029 = vmatpush1.bf16.msra.mxu0 %v854
    %2030 = vmatprep.subr.bf16.mxu0 %v859
    %2031 = vmatpush1.bf16.msra.mxu0 %v858
    %2032 = vmatprep.subr.bf16.mxu0 0
    %2033 = vmatpush1.bf16.msra.mxu0 0
    %2034 = vmatprep.subr.bf16.mxu0 0
    %2035 = vmatpush1.bf16.msra.mxu0 0
    %2036 = vmatprep.subr.bf16.mxu0 0
    %2037 = vmatpush1.bf16.msra.mxu0 0
    %2038 = vmatprep.subr.bf16.mxu0 0
    %2039 = vmatpush1.bf16.msra.mxu0 0
    %2040 = vmatprep.subr.bf16.mxu0 0
    %2041 = vmatpush1.bf16.msra.mxu0 0
    %2042 = vmatprep.subr.bf16.mxu0 0
    %2043 = vmatpush1.bf16.msra.mxu0 0
    %2044 = vmatprep.subr.bf16.mxu0 0
    %2045 = vmatpush1.bf16.msra.mxu0 0
    %2046 = vmatprep.subr.bf16.mxu0 0
    %2047 = vmatpush1.bf16.msra.mxu0 0
    %2048 = vmatprep.mubr.bf16.mxu0 0
    %2049 = vmatmul.mubr.bf16.gmra.mrb[0].mxu0 %v1974
    %v2050 = vpop.f32.mrb[0].mxu0
    %v2051 = vadd.f32 0.0, %v2050
    %v2052 = vpop.f32.mrb[0].mxu0
    %v2053 = vadd.f32 0.0, %v2052
    %v2054 = vpop.f32.mrb[0].mxu0
    %v2055 = vpop.f32.mrb[0].mxu0
    %2056 = vdwg.mxu0
    %v2057 = vpack.c.bf16 %v1973, %v1973
    %2058 = vmatprep.subr.bf16.mxu0 %v1104
    %2059 = vmatpush1.bf16.msra.mxu0 %v1103
    %2060 = vmatprep.subr.bf16.mxu0 %v1108
    %2061 = vmatpush1.bf16.msra.mxu0 %v1107
    %2062 = vmatprep.subr.bf16.mxu0 %v1112
    %2063 = vmatpush1.bf16.msra.mxu0 %v1111
    %2064 = vmatprep.subr.bf16.mxu0 %v1116
    %2065 = vmatpush1.bf16.msra.mxu0 %v1115
    %2066 = vmatprep.subr.bf16.mxu0 %v1120
    %2067 = vmatpush1.bf16.msra.mxu0 %v1119
    %2068 = vmatprep.subr.bf16.mxu0 %v1124
    %2069 = vmatpush1.bf16.msra.mxu0 %v1123
    %2070 = vmatprep.subr.bf16.mxu0 %v1128
    %2071 = vmatpush1.bf16.msra.mxu0 %v1127
    %2072 = vmatprep.subr.bf16.mxu0 %v1132
    %2073 = vmatpush1.bf16.msra.mxu0 %v1131
    %2074 = vmatprep.subr.bf16.mxu0 0
    %2075 = vmatpush1.bf16.msra.mxu0 0
    %2076 = vmatprep.subr.bf16.mxu0 0
    %2077 = vmatpush1.bf16.msra.mxu0 0
    %2078 = vmatprep.subr.bf16.mxu0 0
    %2079 = vmatpush1.bf16.msra.mxu0 0
    %2080 = vmatprep.subr.bf16.mxu0 0
    %2081 = vmatpush1.bf16.msra.mxu0 0
    %2082 = vmatprep.subr.bf16.mxu0 0
    %2083 = vmatpush1.bf16.msra.mxu0 0
    %2084 = vmatprep.subr.bf16.mxu0 0
    %2085 = vmatpush1.bf16.msra.mxu0 0
    %2086 = vmatprep.subr.bf16.mxu0 0
    %2087 = vmatpush1.bf16.msra.mxu0 0
    %2088 = vmatprep.subr.bf16.mxu0 0
    %2089 = vmatpush1.bf16.msra.mxu0 0
    %2090 = vmatprep.mubr.bf16.mxu0 0
    %2091 = vmatmul.mubr.bf16.gmra.mrb[0].mxu0 %v2057
    %v2092 = vpop.f32.mrb[0].mxu0
    %v2093 = vadd.f32 %v2010, %v2092
    %v2094 = vpop.f32.mrb[0].mxu0
    %v2095 = vadd.f32 %v2012, %v2094
    %v2096 = vpop.f32.mrb[0].mxu0
    %v2097 = vpop.f32.mrb[0].mxu0
    %2098 = vdwg.mxu0
    %2099 = vmatprep.subr.bf16.mxu0 %v1106
    %2100 = vmatpush1.bf16.msra.mxu0 %v1105
    %2101 = vmatprep.subr.bf16.mxu0 %v1110
    %2102 = vmatpush1.bf16.msra.mxu0 %v1109
    %2103 = vmatprep.subr.bf16.mxu0 %v1114
    %2104 = vmatpush1.bf16.msra.mxu0 %v1113
    %2105 = vmatprep.subr.bf16.mxu0 %v1118
    %2106 = vmatpush1.bf16.msra.mxu0 %v1117
    %2107 = vmatprep.subr.bf16.mxu0 %v1122
    %2108 = vmatpush1.bf16.msra.mxu0 %v1121
    %2109 = vmatprep.subr.bf16.mxu0 %v1126
    %2110 = vmatpush1.bf16.msra.mxu0 %v1125
    %2111 = vmatprep.subr.bf16.mxu0 %v1130
    %2112 = vmatpush1.bf16.msra.mxu0 %v1129
    %2113 = vmatprep.subr.bf16.mxu0 %v1134
    %2114 = vmatpush1.bf16.msra.mxu0 %v1133
    %2115 = vmatprep.subr.bf16.mxu0 0
    %2116 = vmatpush1.bf16.msra.mxu0 0
    %2117 = vmatprep.subr.bf16.mxu0 0
    %2118 = vmatpush1.bf16.msra.mxu0 0
    %2119 = vmatprep.subr.bf16.mxu0 0
    %2120 = vmatpush1.bf16.msra.mxu0 0
    %2121 = vmatprep.subr.bf16.mxu0 0
    %2122 = vmatpush1.bf16.msra.mxu0 0
    %2123 = vmatprep.subr.bf16.mxu0 0
    %2124 = vmatpush1.bf16.msra.mxu0 0
    %2125 = vmatprep.subr.bf16.mxu0 0
    %2126 = vmatpush1.bf16.msra.mxu0 0
    %2127 = vmatprep.subr.bf16.mxu0 0
    %2128 = vmatpush1.bf16.msra.mxu0 0
    %2129 = vmatprep.subr.bf16.mxu0 0
    %2130 = vmatpush1.bf16.msra.mxu0 0
    %2131 = vmatprep.mubr.bf16.mxu0 0
    %2132 = vmatmul.mubr.bf16.gmra.mrb[0].mxu0 %v2057
    %v2133 = vpop.f32.mrb[0].mxu0
    %v2134 = vadd.f32 %v2051, %v2133
    %v2135 = vpop.f32.mrb[0].mxu0
    %v2136 = vadd.f32 %v2053, %v2135
    %v2137 = vpop.f32.mrb[0].mxu0
    %v2138 = vpop.f32.mrb[0].mxu0
    %2139 = vdwg.mxu0
    %v2140 = vadd.f32 %v2093, %v383
    %v2141 = vadd.f32 %v2095, %v387
    %v2142 = vadd.f32 %v2134, %v391
    %v2143 = vadd.f32 %v2136, %v395
    %v2144 = vmul.f32 %v2140, 0.5
    %v2145 = vtanh.pop %v2144
    %v2146 = vmul.f32 %v2145, 0.5
    %v2147 = vadd.f32 %v2146, 0.5
    %v2148 = vmul.f32 %v2141, 0.5
    %v2149 = vtanh.pop %v2148
    %v2150 = vmul.f32 %v2149, 0.5
    %v2151 = vadd.f32 %v2150, 0.5
    %v2152 = vtanh.pop %v2142
    %v2153 = vmul.f32 %v2143, 0.5
    %v2154 = vtanh.pop %v2153
    %v2155 = vmul.f32 %v2154, 0.5
    %v2156 = vadd.f32 %v2155, 0.5
    %v2157 = vmul.f32 %v2151, %v1862
    %v2158 = vmul.f32 %v2147, %v2152
    %v2159 = vadd.f32 %v2157, %v2158
    %v2160 = vtanh.pop %v2159
    %v2161 = vmul.f32 %v2156, %v2160
    %v2162 = vadd.f32 %v1865, %v2161
    %v2163 = vld [vmem:[#allocation2 + $0x80] sm:$0xff]
    %v2164 = vld [vmem:[#allocation2 + $0x88] sm:$0xff]
    %v2165 = vld [vmem:[#allocation2 + $0x90] sm:$0xff]
    %v2166 = vld [vmem:[#allocation2 + $0x98] sm:$0xff]
    %2167 = vmatprep.subr.bf16.mxu0 %v533
    %2168 = vmatpush1.bf16.msra.mxu0 %v532
    %2169 = vmatprep.subr.bf16.mxu0 %v537
    %2170 = vmatpush1.bf16.msra.mxu0 %v536
    %2171 = vmatprep.subr.bf16.mxu0 %v541
    %2172 = vmatpush1.bf16.msra.mxu0 %v540
    %2173 = vmatprep.subr.bf16.mxu0 %v545
    %2174 = vmatpush1.bf16.msra.mxu0 %v544
    %2175 = vmatprep.subr.bf16.mxu0 %v549
    %2176 = vmatpush1.bf16.msra.mxu0 %v548
    %2177 = vmatprep.subr.bf16.mxu0 %v553
    %2178 = vmatpush1.bf16.msra.mxu0 %v552
    %2179 = vmatprep.subr.bf16.mxu0 %v557
    %2180 = vmatpush1.bf16.msra.mxu0 %v556
    %2181 = vmatprep.subr.bf16.mxu0 %v561
    %2182 = vmatpush1.bf16.msra.mxu0 %v560
    %2183 = vmatprep.subr.bf16.mxu0 0
    %2184 = vmatpush1.bf16.msra.mxu0 0
    %2185 = vmatprep.subr.bf16.mxu0 0
    %2186 = vmatpush1.bf16.msra.mxu0 0
    %2187 = vmatprep.subr.bf16.mxu0 0
    %2188 = vmatpush1.bf16.msra.mxu0 0
    %2189 = vmatprep.subr.bf16.mxu0 0
    %2190 = vmatpush1.bf16.msra.mxu0 0
    %2191 = vmatprep.subr.bf16.mxu0 0
    %2192 = vmatpush1.bf16.msra.mxu0 0
    %2193 = vmatprep.subr.bf16.mxu0 0
    %2194 = vmatpush1.bf16.msra.mxu0 0
    %2195 = vmatprep.subr.bf16.mxu0 0
    %2196 = vmatpush1.bf16.msra.mxu0 0
    %2197 = vmatprep.subr.bf16.mxu0 0
    %2198 = vmatpush1.bf16.msra.mxu0 0
    %2199 = vmatprep.mubr.bf16.mxu0 0
    %2200 = vmatmul.mubr.bf16.gmra.mrb[0].mxu0 %v2057
    %v2201 = vpop.f32.mrb[0].mxu0
    %v2202 = vadd.f32 0.0, %v2201
    %v2203 = vpop.f32.mrb[0].mxu0
    %v2204 = vadd.f32 0.0, %v2203
    %v2205 = vpop.f32.mrb[0].mxu0
    %v2206 = vpop.f32.mrb[0].mxu0
    %2207 = vdwg.mxu0
    %2208 = vmatprep.subr.bf16.mxu0 %v535
    %2209 = vmatpush1.bf16.msra.mxu0 %v534
    %2210 = vmatprep.subr.bf16.mxu0 %v539
    %2211 = vmatpush1.bf16.msra.mxu0 %v538
    %2212 = vmatprep.subr.bf16.mxu0 %v543
    %2213 = vmatpush1.bf16.msra.mxu0 %v542
    %2214 = vmatprep.subr.bf16.mxu0 %v547
    %2215 = vmatpush1.bf16.msra.mxu0 %v546
    %2216 = vmatprep.subr.bf16.mxu0 %v551
    %2217 = vmatpush1.bf16.msra.mxu0 %v550
    %2218 = vmatprep.subr.bf16.mxu0 %v555
    %2219 = vmatpush1.bf16.msra.mxu0 %v554
    %2220 = vmatprep.subr.bf16.mxu0 %v559
    %2221 = vmatpush1.bf16.msra.mxu0 %v558
    %2222 = vmatprep.subr.bf16.mxu0 %v563
    %2223 = vmatpush1.bf16.msra.mxu0 %v562
    %2224 = vmatprep.subr.bf16.mxu0 0
    %2225 = vmatpush1.bf16.msra.mxu0 0
    %2226 = vmatprep.subr.bf16.mxu0 0
    %2227 = vmatpush1.bf16.msra.mxu0 0
    %2228 = vmatprep.subr.bf16.mxu0 0
    %2229 = vmatpush1.bf16.msra.mxu0 0
    %2230 = vmatprep.subr.bf16.mxu0 0
    %2231 = vmatpush1.bf16.msra.mxu0 0
    %2232 = vmatprep.subr.bf16.mxu0 0
    %2233 = vmatpush1.bf16.msra.mxu0 0
    %2234 = vmatprep.subr.bf16.mxu0 0
    %2235 = vmatpush1.bf16.msra.mxu0 0
    %2236 = vmatprep.subr.bf16.mxu0 0
    %2237 = vmatpush1.bf16.msra.mxu0 0
    %2238 = vmatprep.subr.bf16.mxu0 0
    %2239 = vmatpush1.bf16.msra.mxu0 0
    %2240 = vmatprep.mubr.bf16.mxu0 0
    %2241 = vmatmul.mubr.bf16.gmra.mrb[0].mxu0 %v2057
    %v2242 = vpop.f32.mrb[0].mxu0
    %v2243 = vadd.f32 0.0, %v2242
    %v2244 = vpop.f32.mrb[0].mxu0
    %v2245 = vadd.f32 0.0, %v2244
    %v2246 = vpop.f32.mrb[0].mxu0
    %v2247 = vpop.f32.mrb[0].mxu0
    %2248 = vdwg.mxu0
    %v2249 = vadd.f32 %v2163, %v2202
    %v2250 = vadd.f32 %v2164, %v2204
    %v2251 = vadd.f32 %v2165, %v2243
    %v2252 = vadd.f32 %v2166, %v2245
    %v2253 = vmul.f32 %v2249, 0.5
    %v2254 = vtanh.pop %v2253
    %v2255 = vmul.f32 %v2254, 0.5
    %v2256 = vadd.f32 %v2255, 0.5
    %v2257 = vmul.f32 %v2250, 0.5
    %v2258 = vtanh.pop %v2257
    %v2259 = vmul.f32 %v2258, 0.5
    %v2260 = vadd.f32 %v2259, 0.5
    %v2261 = vtanh.pop %v2251
    %v2262 = vmul.f32 %v2252, 0.5
    %v2263 = vtanh.pop %v2262
    %v2264 = vmul.f32 %v2263, 0.5
    %v2265 = vadd.f32 %v2264, 0.5
    %v2266 = vmul.f32 %v2260, %v1971
    %v2267 = vmul.f32 %v2256, %v2261
    %v2268 = vadd.f32 %v2266, %v2267
    %v2269 = vtanh.pop %v2268
    %v2270 = vmul.f32 %v2265, %v2269
    %v2271 = vpack.c.bf16 %v2161, %v2161
    %2272 = vmatprep.subr.bf16.mxu0 %v829
    %2273 = vmatpush1.bf16.msra.mxu0 %v828
    %2274 = vmatprep.subr.bf16.mxu0 %v833
    %2275 = vmatpush1.bf16.msra.mxu0 %v832
    %2276 = vmatprep.subr.bf16.mxu0 %v837
    %2277 = vmatpush1.bf16.msra.mxu0 %v836
    %2278 = vmatprep.subr.bf16.mxu0 %v841
    %2279 = vmatpush1.bf16.msra.mxu0 %v840
    %2280 = vmatprep.subr.bf16.mxu0 %v845
    %2281 = vmatpush1.bf16.msra.mxu0 %v844
    %2282 = vmatprep.subr.bf16.mxu0 %v849
    %2283 = vmatpush1.bf16.msra.mxu0 %v848
    %2284 = vmatprep.subr.bf16.mxu0 %v853
    %2285 = vmatpush1.bf16.msra.mxu0 %v852
    %2286 = vmatprep.subr.bf16.mxu0 %v857
    %2287 = vmatpush1.bf16.msra.mxu0 %v856
    %2288 = vmatprep.subr.bf16.mxu0 0
    %2289 = vmatpush1.bf16.msra.mxu0 0
    %2290 = vmatprep.subr.bf16.mxu0 0
    %2291 = vmatpush1.bf16.msra.mxu0 0
    %2292 = vmatprep.subr.bf16.mxu0 0
    %2293 = vmatpush1.bf16.msra.mxu0 0
    %2294 = vmatprep.subr.bf16.mxu0 0
    %2295 = vmatpush1.bf16.msra.mxu0 0
    %2296 = vmatprep.subr.bf16.mxu0 0
    %2297 = vmatpush1.bf16.msra.mxu0 0
    %2298 = vmatprep.subr.bf16.mxu0 0
    %2299 = vmatpush1.bf16.msra.mxu0 0
    %2300 = vmatprep.subr.bf16.mxu0 0
    %2301 = vmatpush1.bf16.msra.mxu0 0
    %2302 = vmatprep.subr.bf16.mxu0 0
    %2303 = vmatpush1.bf16.msra.mxu0 0
    %2304 = vmatprep.mubr.bf16.mxu0 0
    %2305 = vmatmul.mubr.bf16.gmra.mrb[0].mxu0 %v2271
    %v2306 = vpop.f32.mrb[0].mxu0
    %v2307 = vadd.f32 0.0, %v2306
    %v2308 = vpop.f32.mrb[0].mxu0
    %v2309 = vadd.f32 0.0, %v2308
    %v2310 = vpop.f32.mrb[0].mxu0
    %v2311 = vpop.f32.mrb[0].mxu0
    %2312 = vdwg.mxu0
    %2313 = vmatprep.subr.bf16.mxu0 %v831
    %2314 = vmatpush1.bf16.msra.mxu0 %v830
    %2315 = vmatprep.subr.bf16.mxu0 %v835
    %2316 = vmatpush1.bf16.msra.mxu0 %v834
    %2317 = vmatprep.subr.bf16.mxu0 %v839
    %2318 = vmatpush1.bf16.msra.mxu0 %v838
    %2319 = vmatprep.subr.bf16.mxu0 %v843
    %2320 = vmatpush1.bf16.msra.mxu0 %v842
    %2321 = vmatprep.subr.bf16.mxu0 %v847
    %2322 = vmatpush1.bf16.msra.mxu0 %v846
    %2323 = vmatprep.subr.bf16.mxu0 %v851
    %2324 = vmatpush1.bf16.msra.mxu0 %v850
    %2325 = vmatprep.subr.bf16.mxu0 %v855
    %2326 = vmatpush1.bf16.msra.mxu0 %v854
    %2327 = vmatprep.subr.bf16.mxu0 %v859
    %2328 = vmatpush1.bf16.msra.mxu0 %v858
    %2329 = vmatprep.subr.bf16.mxu0 0
    %2330 = vmatpush1.bf16.msra.mxu0 0
    %2331 = vmatprep.subr.bf16.mxu0 0
    %2332 = vmatpush1.bf16.msra.mxu0 0
    %2333 = vmatprep.subr.bf16.mxu0 0
    %2334 = vmatpush1.bf16.msra.mxu0 0
    %2335 = vmatprep.subr.bf16.mxu0 0
    %2336 = vmatpush1.bf16.msra.mxu0 0
    %2337 = vmatprep.subr.bf16.mxu0 0
    %2338 = vmatpush1.bf16.msra.mxu0 0
    %2339 = vmatprep.subr.bf16.mxu0 0
    %2340 = vmatpush1.bf16.msra.mxu0 0
    %2341 = vmatprep.subr.bf16.mxu0 0
    %2342 = vmatpush1.bf16.msra.mxu0 0
    %2343 = vmatprep.subr.bf16.mxu0 0
    %2344 = vmatpush1.bf16.msra.mxu0 0
    %2345 = vmatprep.mubr.bf16.mxu0 0
    %2346 = vmatmul.mubr.bf16.gmra.mrb[0].mxu0 %v2271
    %v2347 = vpop.f32.mrb[0].mxu0
    %v2348 = vadd.f32 0.0, %v2347
    %v2349 = vpop.f32.mrb[0].mxu0
    %v2350 = vadd.f32 0.0, %v2349
    %v2351 = vpop.f32.mrb[0].mxu0
    %v2352 = vpop.f32.mrb[0].mxu0
    %2353 = vdwg.mxu0
    %v2354 = vpack.c.bf16 %v2270, %v2270
    %2355 = vmatprep.subr.bf16.mxu0 %v1104
    %2356 = vmatpush1.bf16.msra.mxu0 %v1103
    %2357 = vmatprep.subr.bf16.mxu0 %v1108
    %2358 = vmatpush1.bf16.msra.mxu0 %v1107
    %2359 = vmatprep.subr.bf16.mxu0 %v1112
    %2360 = vmatpush1.bf16.msra.mxu0 %v1111
    %2361 = vmatprep.subr.bf16.mxu0 %v1116
    %2362 = vmatpush1.bf16.msra.mxu0 %v1115
    %2363 = vmatprep.subr.bf16.mxu0 %v1120
    %2364 = vmatpush1.bf16.msra.mxu0 %v1119
    %2365 = vmatprep.subr.bf16.mxu0 %v1124
    %2366 = vmatpush1.bf16.msra.mxu0 %v1123
    %2367 = vmatprep.subr.bf16.mxu0 %v1128
    %2368 = vmatpush1.bf16.msra.mxu0 %v1127
    %2369 = vmatprep.subr.bf16.mxu0 %v1132
    %2370 = vmatpush1.bf16.msra.mxu0 %v1131
    %2371 = vmatprep.subr.bf16.mxu0 0
    %2372 = vmatpush1.bf16.msra.mxu0 0
    %2373 = vmatprep.subr.bf16.mxu0 0
    %2374 = vmatpush1.bf16.msra.mxu0 0
    %2375 = vmatprep.subr.bf16.mxu0 0
    %2376 = vmatpush1.bf16.msra.mxu0 0
    %2377 = vmatprep.subr.bf16.mxu0 0
    %2378 = vmatpush1.bf16.msra.mxu0 0
    %2379 = vmatprep.subr.bf16.mxu0 0
    %2380 = vmatpush1.bf16.msra.mxu0 0
    %2381 = vmatprep.subr.bf16.mxu0 0
    %2382 = vmatpush1.bf16.msra.mxu0 0
    %2383 = vmatprep.subr.bf16.mxu0 0
    %2384 = vmatpush1.bf16.msra.mxu0 0
    %2385 = vmatprep.subr.bf16.mxu0 0
    %2386 = vmatpush1.bf16.msra.mxu0 0
    %2387 = vmatprep.mubr.bf16.mxu0 0
    %2388 = vmatmul.mubr.bf16.gmra.mrb[0].mxu0 %v2354
    %v2389 = vpop.f32.mrb[0].mxu0
    %v2390 = vadd.f32 %v2307, %v2389
    %v2391 = vpop.f32.mrb[0].mxu0
    %v2392 = vadd.f32 %v2309, %v2391
    %v2393 = vpop.f32.mrb[0].mxu0
    %v2394 = vpop.f32.mrb[0].mxu0
    %2395 = vdwg.mxu0
    %2396 = vmatprep.subr.bf16.mxu0 %v1106
    %2397 = vmatpush1.bf16.msra.mxu0 %v1105
    %2398 = vmatprep.subr.bf16.mxu0 %v1110
    %2399 = vmatpush1.bf16.msra.mxu0 %v1109
    %2400 = vmatprep.subr.bf16.mxu0 %v1114
    %2401 = vmatpush1.bf16.msra.mxu0 %v1113
    %2402 = vmatprep.subr.bf16.mxu0 %v1118
    %2403 = vmatpush1.bf16.msra.mxu0 %v1117
    %2404 = vmatprep.subr.bf16.mxu0 %v1122
    %2405 = vmatpush1.bf16.msra.mxu0 %v1121
    %2406 = vmatprep.subr.bf16.mxu0 %v1126
    %2407 = vmatpush1.bf16.msra.mxu0 %v1125
    %2408 = vmatprep.subr.bf16.mxu0 %v1130
    %2409 = vmatpush1.bf16.msra.mxu0 %v1129
    %2410 = vmatprep.subr.bf16.mxu0 %v1134
    %2411 = vmatpush1.bf16.msra.mxu0 %v1133
    %2412 = vmatprep.subr.bf16.mxu0 0
    %2413 = vmatpush1.bf16.msra.mxu0 0
    %2414 = vmatprep.subr.bf16.mxu0 0
    %2415 = vmatpush1.bf16.msra.mxu0 0
    %2416 = vmatprep.subr.bf16.mxu0 0
    %2417 = vmatpush1.bf16.msra.mxu0 0
    %2418 = vmatprep.subr.bf16.mxu0 0
    %2419 = vmatpush1.bf16.msra.mxu0 0
    %2420 = vmatprep.subr.bf16.mxu0 0
    %2421 = vmatpush1.bf16.msra.mxu0 0
    %2422 = vmatprep.subr.bf16.mxu0 0
    %2423 = vmatpush1.bf16.msra.mxu0 0
    %2424 = vmatprep.subr.bf16.mxu0 0
    %2425 = vmatpush1.bf16.msra.mxu0 0
    %2426 = vmatprep.subr.bf16.mxu0 0
    %2427 = vmatpush1.bf16.msra.mxu0 0
    %2428 = vmatprep.mubr.bf16.mxu0 0
    %2429 = vmatmul.mubr.bf16.gmra.mrb[0].mxu0 %v2354
    %v2430 = vpop.f32.mrb[0].mxu0
    %v2431 = vadd.f32 %v2348, %v2430
    %v2432 = vpop.f32.mrb[0].mxu0
    %v2433 = vadd.f32 %v2350, %v2432
    %v2434 = vpop.f32.mrb[0].mxu0
    %v2435 = vpop.f32.mrb[0].mxu0
    %2436 = vdwg.mxu0
    %v2437 = vadd.f32 %v2390, %v383
    %v2438 = vadd.f32 %v2392, %v387
    %v2439 = vadd.f32 %v2431, %v391
    %v2440 = vadd.f32 %v2433, %v395
    %v2441 = vmul.f32 %v2437, 0.5
    %v2442 = vtanh.pop %v2441
    %v2443 = vmul.f32 %v2442, 0.5
    %v2444 = vadd.f32 %v2443, 0.5
    %v2445 = vmul.f32 %v2438, 0.5
    %v2446 = vtanh.pop %v2445
    %v2447 = vmul.f32 %v2446, 0.5
    %v2448 = vadd.f32 %v2447, 0.5
    %v2449 = vtanh.pop %v2439
    %v2450 = vmul.f32 %v2440, 0.5
    %v2451 = vtanh.pop %v2450
    %v2452 = vmul.f32 %v2451, 0.5
    %v2453 = vadd.f32 %v2452, 0.5
    %v2454 = vmul.f32 %v2448, %v2159
    %v2455 = vmul.f32 %v2444, %v2449
    %v2456 = vadd.f32 %v2454, %v2455
    %v2457 = vtanh.pop %v2456
    %v2458 = vmul.f32 %v2453, %v2457
    %v2459 = vadd.f32 %v2162, %v2458
    %v2460 = vld [vmem:[#allocation2 + $0xa0] sm:$0xff]
    %v2461 = vld [vmem:[#allocation2 + $0xa8] sm:$0xff]
    %v2462 = vld [vmem:[#allocation2 + $0xb0] sm:$0xff]
    %v2463 = vld [vmem:[#allocation2 + $0xb8] sm:$0xff]
    %2464 = vmatprep.subr.bf16.mxu0 %v533
    %2465 = vmatpush1.bf16.msra.mxu0 %v532
    %2466 = vmatprep.subr.bf16.mxu0 %v537
    %2467 = vmatpush1.bf16.msra.mxu0 %v536
    %2468 = vmatprep.subr.bf16.mxu0 %v541
    %2469 = vmatpush1.bf16.msra.mxu0 %v540
    %2470 = vmatprep.subr.bf16.mxu0 %v545
    %2471 = vmatpush1.bf16.msra.mxu0 %v544
    %2472 = vmatprep.subr.bf16.mxu0 %v549
    %2473 = vmatpush1.bf16.msra.mxu0 %v548
    %2474 = vmatprep.subr.bf16.mxu0 %v553
    %2475 = vmatpush1.bf16.msra.mxu0 %v552
    %2476 = vmatprep.subr.bf16.mxu0 %v557
    %2477 = vmatpush1.bf16.msra.mxu0 %v556
    %2478 = vmatprep.subr.bf16.mxu0 %v561
    %2479 = vmatpush1.bf16.msra.mxu0 %v560
    %2480 = vmatprep.subr.bf16.mxu0 0
    %2481 = vmatpush1.bf16.msra.mxu0 0
    %2482 = vmatprep.subr.bf16.mxu0 0
    %2483 = vmatpush1.bf16.msra.mxu0 0
    %2484 = vmatprep.subr.bf16.mxu0 0
    %2485 = vmatpush1.bf16.msra.mxu0 0
    %2486 = vmatprep.subr.bf16.mxu0 0
    %2487 = vmatpush1.bf16.msra.mxu0 0
    %2488 = vmatprep.subr.bf16.mxu0 0
    %2489 = vmatpush1.bf16.msra.mxu0 0
    %2490 = vmatprep.subr.bf16.mxu0 0
    %2491 = vmatpush1.bf16.msra.mxu0 0
    %2492 = vmatprep.subr.bf16.mxu0 0
    %2493 = vmatpush1.bf16.msra.mxu0 0
    %2494 = vmatprep.subr.bf16.mxu0 0
    %2495 = vmatpush1.bf16.msra.mxu0 0
    %2496 = vmatprep.mubr.bf16.mxu0 0
    %2497 = vmatmul.mubr.bf16.gmra.mrb[0].mxu0 %v2354
    %v2498 = vpop.f32.mrb[0].mxu0
    %v2499 = vadd.f32 0.0, %v2498
    %v2500 = vpop.f32.mrb[0].mxu0
    %v2501 = vadd.f32 0.0, %v2500
    %v2502 = vpop.f32.mrb[0].mxu0
    %v2503 = vpop.f32.mrb[0].mxu0
    %2504 = vdwg.mxu0
    %2505 = vmatprep.subr.bf16.mxu0 %v535
    %2506 = vmatpush1.bf16.msra.mxu0 %v534
    %2507 = vmatprep.subr.bf16.mxu0 %v539
    %2508 = vmatpush1.bf16.msra.mxu0 %v538
    %2509 = vmatprep.subr.bf16.mxu0 %v543
    %2510 = vmatpush1.bf16.msra.mxu0 %v542
    %2511 = vmatprep.subr.bf16.mxu0 %v547
    %2512 = vmatpush1.bf16.msra.mxu0 %v546
    %2513 = vmatprep.subr.bf16.mxu0 %v551
    %2514 = vmatpush1.bf16.msra.mxu0 %v550
    %2515 = vmatprep.subr.bf16.mxu0 %v555
    %2516 = vmatpush1.bf16.msra.mxu0 %v554
    %2517 = vmatprep.subr.bf16.mxu0 %v559
    %2518 = vmatpush1.bf16.msra.mxu0 %v558
    %2519 = vmatprep.subr.bf16.mxu0 %v563
    %2520 = vmatpush1.bf16.msra.mxu0 %v562
    %2521 = vmatprep.subr.bf16.mxu0 0
    %2522 = vmatpush1.bf16.msra.mxu0 0
    %2523 = vmatprep.subr.bf16.mxu0 0
    %2524 = vmatpush1.bf16.msra.mxu0 0
    %2525 = vmatprep.subr.bf16.mxu0 0
    %2526 = vmatpush1.bf16.msra.mxu0 0
    %2527 = vmatprep.subr.bf16.mxu0 0
    %2528 = vmatpush1.bf16.msra.mxu0 0
    %2529 = vmatprep.subr.bf16.mxu0 0
    %2530 = vmatpush1.bf16.msra.mxu0 0
    %2531 = vmatprep.subr.bf16.mxu0 0
    %2532 = vmatpush1.bf16.msra.mxu0 0
    %2533 = vmatprep.subr.bf16.mxu0 0
    %2534 = vmatpush1.bf16.msra.mxu0 0
    %2535 = vmatprep.subr.bf16.mxu0 0
    %2536 = vmatpush1.bf16.msra.mxu0 0
    %2537 = vmatprep.mubr.bf16.mxu0 0
    %2538 = vmatmul.mubr.bf16.gmra.mrb[0].mxu0 %v2354
    %v2539 = vpop.f32.mrb[0].mxu0
    %v2540 = vadd.f32 0.0, %v2539
    %v2541 = vpop.f32.mrb[0].mxu0
    %v2542 = vadd.f32 0.0, %v2541
    %v2543 = vpop.f32.mrb[0].mxu0
    %v2544 = vpop.f32.mrb[0].mxu0
    %2545 = vdwg.mxu0
    %v2546 = vadd.f32 %v2460, %v2499
    %v2547 = vadd.f32 %v2461, %v2501
    %v2548 = vadd.f32 %v2462, %v2540
    %v2549 = vadd.f32 %v2463, %v2542
    %v2550 = vmul.f32 %v2546, 0.5
    %v2551 = vtanh.pop %v2550
    %v2552 = vmul.f32 %v2551, 0.5
    %v2553 = vadd.f32 %v2552, 0.5
    %v2554 = vmul.f32 %v2547, 0.5
    %v2555 = vtanh.pop %v2554
    %v2556 = vmul.f32 %v2555, 0.5
    %v2557 = vadd.f32 %v2556, 0.5
    %v2558 = vtanh.pop %v2548
    %v2559 = vmul.f32 %v2549, 0.5
    %v2560 = vtanh.pop %v2559
    %v2561 = vmul.f32 %v2560, 0.5
    %v2562 = vadd.f32 %v2561, 0.5
    %v2563 = vmul.f32 %v2557, %v2268
    %v2564 = vmul.f32 %v2553, %v2558
    %v2565 = vadd.f32 %v2563, %v2564
    %v2566 = vtanh.pop %v2565
    %v2567 = vmul.f32 %v2562, %v2566
    %v2568 = vpack.c.bf16 %v2458, %v2458
    %2569 = vmatprep.subr.bf16.mxu0 %v829
    %2570 = vmatpush1.bf16.msra.mxu0 %v828
    %2571 = vmatprep.subr.bf16.mxu0 %v833
    %2572 = vmatpush1.bf16.msra.mxu0 %v832
    %2573 = vmatprep.subr.bf16.mxu0 %v837
    %2574 = vmatpush1.bf16.msra.mxu0 %v836
    %2575 = vmatprep.subr.bf16.mxu0 %v841
    %2576 = vmatpush1.bf16.msra.mxu0 %v840
    %2577 = vmatprep.subr.bf16.mxu0 %v845
    %2578 = vmatpush1.bf16.msra.mxu0 %v844
    %2579 = vmatprep.subr.bf16.mxu0 %v849
    %2580 = vmatpush1.bf16.msra.mxu0 %v848
    %2581 = vmatprep.subr.bf16.mxu0 %v853
    %2582 = vmatpush1.bf16.msra.mxu0 %v852
    %2583 = vmatprep.subr.bf16.mxu0 %v857
    %2584 = vmatpush1.bf16.msra.mxu0 %v856
    %2585 = vmatprep.subr.bf16.mxu0 0
    %2586 = vmatpush1.bf16.msra.mxu0 0
    %2587 = vmatprep.subr.bf16.mxu0 0
    %2588 = vmatpush1.bf16.msra.mxu0 0
    %2589 = vmatprep.subr.bf16.mxu0 0
    %2590 = vmatpush1.bf16.msra.mxu0 0
    %2591 = vmatprep.subr.bf16.mxu0 0
    %2592 = vmatpush1.bf16.msra.mxu0 0
    %2593 = vmatprep.subr.bf16.mxu0 0
    %2594 = vmatpush1.bf16.msra.mxu0 0
    %2595 = vmatprep.subr.bf16.mxu0 0
    %2596 = vmatpush1.bf16.msra.mxu0 0
    %2597 = vmatprep.subr.bf16.mxu0 0
    %2598 = vmatpush1.bf16.msra.mxu0 0
    %2599 = vmatprep.subr.bf16.mxu0 0
    %2600 = vmatpush1.bf16.msra.mxu0 0
    %2601 = vmatprep.mubr.bf16.mxu0 0
    %2602 = vmatmul.mubr.bf16.gmra.mrb[0].mxu0 %v2568
    %v2603 = vpop.f32.mrb[0].mxu0
    %v2604 = vadd.f32 0.0, %v2603
    %v2605 = vpop.f32.mrb[0].mxu0
    %v2606 = vadd.f32 0.0, %v2605
    %v2607 = vpop.f32.mrb[0].mxu0
    %v2608 = vpop.f32.mrb[0].mxu0
    %2609 = vdwg.mxu0
    %2610 = vmatprep.subr.bf16.mxu0 %v831
    %2611 = vmatpush1.bf16.msra.mxu0 %v830
    %2612 = vmatprep.subr.bf16.mxu0 %v835
    %2613 = vmatpush1.bf16.msra.mxu0 %v834
    %2614 = vmatprep.subr.bf16.mxu0 %v839
    %2615 = vmatpush1.bf16.msra.mxu0 %v838
    %2616 = vmatprep.subr.bf16.mxu0 %v843
    %2617 = vmatpush1.bf16.msra.mxu0 %v842
    %2618 = vmatprep.subr.bf16.mxu0 %v847
    %2619 = vmatpush1.bf16.msra.mxu0 %v846
    %2620 = vmatprep.subr.bf16.mxu0 %v851
    %2621 = vmatpush1.bf16.msra.mxu0 %v850
    %2622 = vmatprep.subr.bf16.mxu0 %v855
    %2623 = vmatpush1.bf16.msra.mxu0 %v854
    %2624 = vmatprep.subr.bf16.mxu0 %v859
    %2625 = vmatpush1.bf16.msra.mxu0 %v858
    %2626 = vmatprep.subr.bf16.mxu0 0
    %2627 = vmatpush1.bf16.msra.mxu0 0
    %2628 = vmatprep.subr.bf16.mxu0 0
    %2629 = vmatpush1.bf16.msra.mxu0 0
    %2630 = vmatprep.subr.bf16.mxu0 0
    %2631 = vmatpush1.bf16.msra.mxu0 0
    %2632 = vmatprep.subr.bf16.mxu0 0
    %2633 = vmatpush1.bf16.msra.mxu0 0
    %2634 = vmatprep.subr.bf16.mxu0 0
    %2635 = vmatpush1.bf16.msra.mxu0 0
    %2636 = vmatprep.subr.bf16.mxu0 0
    %2637 = vmatpush1.bf16.msra.mxu0 0
    %2638 = vmatprep.subr.bf16.mxu0 0
    %2639 = vmatpush1.bf16.msra.mxu0 0
    %2640 = vmatprep.subr.bf16.mxu0 0
    %2641 = vmatpush1.bf16.msra.mxu0 0
    %2642 = vmatprep.mubr.bf16.mxu0 0
    %2643 = vmatmul.mubr.bf16.gmra.mrb[0].mxu0 %v2568
    %v2644 = vpop.f32.mrb[0].mxu0
    %v2645 = vadd.f32 0.0, %v2644
    %v2646 = vpop.f32.mrb[0].mxu0
    %v2647 = vadd.f32 0.0, %v2646
    %v2648 = vpop.f32.mrb[0].mxu0
    %v2649 = vpop.f32.mrb[0].mxu0
    %2650 = vdwg.mxu0
    %v2651 = vpack.c.bf16 %v2567, %v2567
    %2652 = vmatprep.subr.bf16.mxu0 %v1104
    %2653 = vmatpush1.bf16.msra.mxu0 %v1103
    %2654 = vmatprep.subr.bf16.mxu0 %v1108
    %2655 = vmatpush1.bf16.msra.mxu0 %v1107
    %2656 = vmatprep.subr.bf16.mxu0 %v1112
    %2657 = vmatpush1.bf16.msra.mxu0 %v1111
    %2658 = vmatprep.subr.bf16.mxu0 %v1116
    %2659 = vmatpush1.bf16.msra.mxu0 %v1115
    %2660 = vmatprep.subr.bf16.mxu0 %v1120
    %2661 = vmatpush1.bf16.msra.mxu0 %v1119
    %2662 = vmatprep.subr.bf16.mxu0 %v1124
    %2663 = vmatpush1.bf16.msra.mxu0 %v1123
    %2664 = vmatprep.subr.bf16.mxu0 %v1128
    %2665 = vmatpush1.bf16.msra.mxu0 %v1127
    %2666 = vmatprep.subr.bf16.mxu0 %v1132
    %2667 = vmatpush1.bf16.msra.mxu0 %v1131
    %2668 = vmatprep.subr.bf16.mxu0 0
    %2669 = vmatpush1.bf16.msra.mxu0 0
    %2670 = vmatprep.subr.bf16.mxu0 0
    %2671 = vmatpush1.bf16.msra.mxu0 0
    %2672 = vmatprep.subr.bf16.mxu0 0
    %2673 = vmatpush1.bf16.msra.mxu0 0
    %2674 = vmatprep.subr.bf16.mxu0 0
    %2675 = vmatpush1.bf16.msra.mxu0 0
    %2676 = vmatprep.subr.bf16.mxu0 0
    %2677 = vmatpush1.bf16.msra.mxu0 0
    %2678 = vmatprep.subr.bf16.mxu0 0
    %2679 = vmatpush1.bf16.msra.mxu0 0
    %2680 = vmatprep.subr.bf16.mxu0 0
    %2681 = vmatpush1.bf16.msra.mxu0 0
    %2682 = vmatprep.subr.bf16.mxu0 0
    %2683 = vmatpush1.bf16.msra.mxu0 0
    %2684 = vmatprep.mubr.bf16.mxu0 0
    %2685 = vmatmul.mubr.bf16.gmra.mrb[0].mxu0 %v2651
    %v2686 = vpop.f32.mrb[0].mxu0
    %v2687 = vadd.f32 %v2604, %v2686
    %v2688 = vpop.f32.mrb[0].mxu0
    %v2689 = vadd.f32 %v2606, %v2688
    %v2690 = vpop.f32.mrb[0].mxu0
    %v2691 = vpop.f32.mrb[0].mxu0
    %2692 = vdwg.mxu0
    %2693 = vmatprep.subr.bf16.mxu0 %v1106
    %2694 = vmatpush1.bf16.msra.mxu0 %v1105
    %2695 = vmatprep.subr.bf16.mxu0 %v1110
    %2696 = vmatpush1.bf16.msra.mxu0 %v1109
    %2697 = vmatprep.subr.bf16.mxu0 %v1114
    %2698 = vmatpush1.bf16.msra.mxu0 %v1113
    %2699 = vmatprep.subr.bf16.mxu0 %v1118
    %2700 = vmatpush1.bf16.msra.mxu0 %v1117
    %2701 = vmatprep.subr.bf16.mxu0 %v1122
    %2702 = vmatpush1.bf16.msra.mxu0 %v1121
    %2703 = vmatprep.subr.bf16.mxu0 %v1126
    %2704 = vmatpush1.bf16.msra.mxu0 %v1125
    %2705 = vmatprep.subr.bf16.mxu0 %v1130
    %2706 = vmatpush1.bf16.msra.mxu0 %v1129
    %2707 = vmatprep.subr.bf16.mxu0 %v1134
    %2708 = vmatpush1.bf16.msra.mxu0 %v1133
    %2709 = vmatprep.subr.bf16.mxu0 0
    %2710 = vmatpush1.bf16.msra.mxu0 0
    %2711 = vmatprep.subr.bf16.mxu0 0
    %2712 = vmatpush1.bf16.msra.mxu0 0
    %2713 = vmatprep.subr.bf16.mxu0 0
    %2714 = vmatpush1.bf16.msra.mxu0 0
    %2715 = vmatprep.subr.bf16.mxu0 0
    %2716 = vmatpush1.bf16.msra.mxu0 0
    %2717 = vmatprep.subr.bf16.mxu0 0
    %2718 = vmatpush1.bf16.msra.mxu0 0
    %2719 = vmatprep.subr.bf16.mxu0 0
    %2720 = vmatpush1.bf16.msra.mxu0 0
    %2721 = vmatprep.subr.bf16.mxu0 0
    %2722 = vmatpush1.bf16.msra.mxu0 0
    %2723 = vmatprep.subr.bf16.mxu0 0
    %2724 = vmatpush1.bf16.msra.mxu0 0
    %2725 = vmatprep.mubr.bf16.mxu0 0
    %2726 = vmatmul.mubr.bf16.gmra.mrb[0].mxu0 %v2651
    %v2727 = vpop.f32.mrb[0].mxu0
    %v2728 = vadd.f32 %v2645, %v2727
    %v2729 = vpop.f32.mrb[0].mxu0
    %v2730 = vadd.f32 %v2647, %v2729
    %v2731 = vpop.f32.mrb[0].mxu0
    %v2732 = vpop.f32.mrb[0].mxu0
    %2733 = vdwg.mxu0
    %v2734 = vadd.f32 %v2687, %v383
    %v2735 = vadd.f32 %v2689, %v387
    %v2736 = vadd.f32 %v2728, %v391
    %v2737 = vadd.f32 %v2730, %v395
    %v2738 = vmul.f32 %v2734, 0.5
    %v2739 = vtanh.pop %v2738
    %v2740 = vmul.f32 %v2739, 0.5
    %v2741 = vadd.f32 %v2740, 0.5
    %v2742 = vmul.f32 %v2735, 0.5
    %v2743 = vtanh.pop %v2742
    %v2744 = vmul.f32 %v2743, 0.5
    %v2745 = vadd.f32 %v2744, 0.5
    %v2746 = vtanh.pop %v2736
    %v2747 = vmul.f32 %v2737, 0.5
    %v2748 = vtanh.pop %v2747
    %v2749 = vmul.f32 %v2748, 0.5
    %v2750 = vadd.f32 %v2749, 0.5
    %v2751 = vmul.f32 %v2745, %v2456
    %v2752 = vmul.f32 %v2741, %v2746
    %v2753 = vadd.f32 %v2751, %v2752
    %v2754 = vtanh.pop %v2753
    %v2755 = vmul.f32 %v2750, %v2754
    %v2756 = vadd.f32 %v2459, %v2755
    %v2757 = vld [vmem:[#allocation2 + $0xc0] sm:$0xff]
    %v2758 = vld [vmem:[#allocation2 + $0xc8] sm:$0xff]
    %v2759 = vld [vmem:[#allocation2 + $0xd0] sm:$0xff]
    %v2760 = vld [vmem:[#allocation2 + $0xd8] sm:$0xff]
    %2761 = vmatprep.subr.bf16.mxu0 %v533
    %2762 = vmatpush1.bf16.msra.mxu0 %v532
    %2763 = vmatprep.subr.bf16.mxu0 %v537
    %2764 = vmatpush1.bf16.msra.mxu0 %v536
    %2765 = vmatprep.subr.bf16.mxu0 %v541
    %2766 = vmatpush1.bf16.msra.mxu0 %v540
    %2767 = vmatprep.subr.bf16.mxu0 %v545
    %2768 = vmatpush1.bf16.msra.mxu0 %v544
    %2769 = vmatprep.subr.bf16.mxu0 %v549
    %2770 = vmatpush1.bf16.msra.mxu0 %v548
    %2771 = vmatprep.subr.bf16.mxu0 %v553
    %2772 = vmatpush1.bf16.msra.mxu0 %v552
    %2773 = vmatprep.subr.bf16.mxu0 %v557
    %2774 = vmatpush1.bf16.msra.mxu0 %v556
    %2775 = vmatprep.subr.bf16.mxu0 %v561
    %2776 = vmatpush1.bf16.msra.mxu0 %v560
    %2777 = vmatprep.subr.bf16.mxu0 0
    %2778 = vmatpush1.bf16.msra.mxu0 0
    %2779 = vmatprep.subr.bf16.mxu0 0
    %2780 = vmatpush1.bf16.msra.mxu0 0
    %2781 = vmatprep.subr.bf16.mxu0 0
    %2782 = vmatpush1.bf16.msra.mxu0 0
    %2783 = vmatprep.subr.bf16.mxu0 0
    %2784 = vmatpush1.bf16.msra.mxu0 0
    %2785 = vmatprep.subr.bf16.mxu0 0
    %2786 = vmatpush1.bf16.msra.mxu0 0
    %2787 = vmatprep.subr.bf16.mxu0 0
    %2788 = vmatpush1.bf16.msra.mxu0 0
    %2789 = vmatprep.subr.bf16.mxu0 0
    %2790 = vmatpush1.bf16.msra.mxu0 0
    %2791 = vmatprep.subr.bf16.mxu0 0
    %2792 = vmatpush1.bf16.msra.mxu0 0
    %2793 = vmatprep.mubr.bf16.mxu0 0
    %2794 = vmatmul.mubr.bf16.gmra.mrb[0].mxu0 %v2651
    %v2795 = vpop.f32.mrb[0].mxu0
    %v2796 = vadd.f32 0.0, %v2795
    %v2797 = vpop.f32.mrb[0].mxu0
    %v2798 = vadd.f32 0.0, %v2797
    %v2799 = vpop.f32.mrb[0].mxu0
    %v2800 = vpop.f32.mrb[0].mxu0
    %2801 = vdwg.mxu0
    %2802 = vmatprep.subr.bf16.mxu0 %v535
    %2803 = vmatpush1.bf16.msra.mxu0 %v534
    %2804 = vmatprep.subr.bf16.mxu0 %v539
    %2805 = vmatpush1.bf16.msra.mxu0 %v538
    %2806 = vmatprep.subr.bf16.mxu0 %v543
    %2807 = vmatpush1.bf16.msra.mxu0 %v542
    %2808 = vmatprep.subr.bf16.mxu0 %v547
    %2809 = vmatpush1.bf16.msra.mxu0 %v546
    %2810 = vmatprep.subr.bf16.mxu0 %v551
    %2811 = vmatpush1.bf16.msra.mxu0 %v550
    %2812 = vmatprep.subr.bf16.mxu0 %v555
    %2813 = vmatpush1.bf16.msra.mxu0 %v554
    %2814 = vmatprep.subr.bf16.mxu0 %v559
    %2815 = vmatpush1.bf16.msra.mxu0 %v558
    %2816 = vmatprep.subr.bf16.mxu0 %v563
    %2817 = vmatpush1.bf16.msra.mxu0 %v562
    %2818 = vmatprep.subr.bf16.mxu0 0
    %2819 = vmatpush1.bf16.msra.mxu0 0
    %2820 = vmatprep.subr.bf16.mxu0 0
    %2821 = vmatpush1.bf16.msra.mxu0 0
    %2822 = vmatprep.subr.bf16.mxu0 0
    %2823 = vmatpush1.bf16.msra.mxu0 0
    %2824 = vmatprep.subr.bf16.mxu0 0
    %2825 = vmatpush1.bf16.msra.mxu0 0
    %2826 = vmatprep.subr.bf16.mxu0 0
    %2827 = vmatpush1.bf16.msra.mxu0 0
    %2828 = vmatprep.subr.bf16.mxu0 0
    %2829 = vmatpush1.bf16.msra.mxu0 0
    %2830 = vmatprep.subr.bf16.mxu0 0
    %2831 = vmatpush1.bf16.msra.mxu0 0
    %2832 = vmatprep.subr.bf16.mxu0 0
    %2833 = vmatpush1.bf16.msra.mxu0 0
    %2834 = vmatprep.mubr.bf16.mxu0 0
    %2835 = vmatmul.mubr.bf16.gmra.mrb[0].mxu0 %v2651
    %v2836 = vpop.f32.mrb[0].mxu0
    %v2837 = vadd.f32 0.0, %v2836
    %v2838 = vpop.f32.mrb[0].mxu0
    %v2839 = vadd.f32 0.0, %v2838
    %v2840 = vpop.f32.mrb[0].mxu0
    %v2841 = vpop.f32.mrb[0].mxu0
    %2842 = vdwg.mxu0
    %v2843 = vadd.f32 %v2757, %v2796
    %v2844 = vadd.f32 %v2758, %v2798
    %v2845 = vadd.f32 %v2759, %v2837
    %v2846 = vadd.f32 %v2760, %v2839
    %v2847 = vmul.f32 %v2843, 0.5
    %v2848 = vtanh.pop %v2847
    %v2849 = vmul.f32 %v2848, 0.5
    %v2850 = vadd.f32 %v2849, 0.5
    %v2851 = vmul.f32 %v2844, 0.5
    %v2852 = vtanh.pop %v2851
    %v2853 = vmul.f32 %v2852, 0.5
    %v2854 = vadd.f32 %v2853, 0.5
    %v2855 = vtanh.pop %v2845
    %v2856 = vmul.f32 %v2846, 0.5
    %v2857 = vtanh.pop %v2856
    %v2858 = vmul.f32 %v2857, 0.5
    %v2859 = vadd.f32 %v2858, 0.5
    %v2860 = vmul.f32 %v2854, %v2565
    %v2861 = vmul.f32 %v2850, %v2855
    %v2862 = vadd.f32 %v2860, %v2861
    %v2863 = vtanh.pop %v2862
    %v2864 = vmul.f32 %v2859, %v2863
    %v2865 = vpack.c.bf16 %v2755, %v2755
    %2866 = vmatprep.subr.bf16.mxu0 %v829
    %2867 = vmatpush1.bf16.msra.mxu0 %v828
    %2868 = vmatprep.subr.bf16.mxu0 %v833
    %2869 = vmatpush1.bf16.msra.mxu0 %v832
    %2870 = vmatprep.subr.bf16.mxu0 %v837
    %2871 = vmatpush1.bf16.msra.mxu0 %v836
    %2872 = vmatprep.subr.bf16.mxu0 %v841
    %2873 = vmatpush1.bf16.msra.mxu0 %v840
    %2874 = vmatprep.subr.bf16.mxu0 %v845
    %2875 = vmatpush1.bf16.msra.mxu0 %v844
    %2876 = vmatprep.subr.bf16.mxu0 %v849
    %2877 = vmatpush1.bf16.msra.mxu0 %v848
    %2878 = vmatprep.subr.bf16.mxu0 %v853
    %2879 = vmatpush1.bf16.msra.mxu0 %v852
    %2880 = vmatprep.subr.bf16.mxu0 %v857
    %2881 = vmatpush1.bf16.msra.mxu0 %v856
    %2882 = vmatprep.subr.bf16.mxu0 0
    %2883 = vmatpush1.bf16.msra.mxu0 0
    %2884 = vmatprep.subr.bf16.mxu0 0
    %2885 = vmatpush1.bf16.msra.mxu0 0
    %2886 = vmatprep.subr.bf16.mxu0 0
    %2887 = vmatpush1.bf16.msra.mxu0 0
    %2888 = vmatprep.subr.bf16.mxu0 0
    %2889 = vmatpush1.bf16.msra.mxu0 0
    %2890 = vmatprep.subr.bf16.mxu0 0
    %2891 = vmatpush1.bf16.msra.mxu0 0
    %2892 = vmatprep.subr.bf16.mxu0 0
    %2893 = vmatpush1.bf16.msra.mxu0 0
    %2894 = vmatprep.subr.bf16.mxu0 0
    %2895 = vmatpush1.bf16.msra.mxu0 0
    %2896 = vmatprep.subr.bf16.mxu0 0
    %2897 = vmatpush1.bf16.msra.mxu0 0
    %2898 = vmatprep.mubr.bf16.mxu0 0
    %2899 = vmatmul.mubr.bf16.gmra.mrb[0].mxu0 %v2865
    %v2900 = vpop.f32.mrb[0].mxu0
    %v2901 = vadd.f32 0.0, %v2900
    %v2902 = vpop.f32.mrb[0].mxu0
    %v2903 = vadd.f32 0.0, %v2902
    %v2904 = vpop.f32.mrb[0].mxu0
    %v2905 = vpop.f32.mrb[0].mxu0
    %2906 = vdwg.mxu0
    %2907 = vmatprep.subr.bf16.mxu0 %v831
    %2908 = vmatpush1.bf16.msra.mxu0 %v830
    %2909 = vmatprep.subr.bf16.mxu0 %v835
    %2910 = vmatpush1.bf16.msra.mxu0 %v834
    %2911 = vmatprep.subr.bf16.mxu0 %v839
    %2912 = vmatpush1.bf16.msra.mxu0 %v838
    %2913 = vmatprep.subr.bf16.mxu0 %v843
    %2914 = vmatpush1.bf16.msra.mxu0 %v842
    %2915 = vmatprep.subr.bf16.mxu0 %v847
    %2916 = vmatpush1.bf16.msra.mxu0 %v846
    %2917 = vmatprep.subr.bf16.mxu0 %v851
    %2918 = vmatpush1.bf16.msra.mxu0 %v850
    %2919 = vmatprep.subr.bf16.mxu0 %v855
    %2920 = vmatpush1.bf16.msra.mxu0 %v854
    %2921 = vmatprep.subr.bf16.mxu0 %v859
    %2922 = vmatpush1.bf16.msra.mxu0 %v858
    %2923 = vmatprep.subr.bf16.mxu0 0
    %2924 = vmatpush1.bf16.msra.mxu0 0
    %2925 = vmatprep.subr.bf16.mxu0 0
    %2926 = vmatpush1.bf16.msra.mxu0 0
    %2927 = vmatprep.subr.bf16.mxu0 0
    %2928 = vmatpush1.bf16.msra.mxu0 0
    %2929 = vmatprep.subr.bf16.mxu0 0
    %2930 = vmatpush1.bf16.msra.mxu0 0
    %2931 = vmatprep.subr.bf16.mxu0 0
    %2932 = vmatpush1.bf16.msra.mxu0 0
    %2933 = vmatprep.subr.bf16.mxu0 0
    %2934 = vmatpush1.bf16.msra.mxu0 0
    %2935 = vmatprep.subr.bf16.mxu0 0
    %2936 = vmatpush1.bf16.msra.mxu0 0
    %2937 = vmatprep.subr.bf16.mxu0 0
    %2938 = vmatpush1.bf16.msra.mxu0 0
    %2939 = vmatprep.mubr.bf16.mxu0 0
    %2940 = vmatmul.mubr.bf16.gmra.mrb[0].mxu0 %v2865
    %v2941 = vpop.f32.mrb[0].mxu0
    %v2942 = vadd.f32 0.0, %v2941
    %v2943 = vpop.f32.mrb[0].mxu0
    %v2944 = vadd.f32 0.0, %v2943
    %v2945 = vpop.f32.mrb[0].mxu0
    %v2946 = vpop.f32.mrb[0].mxu0
    %2947 = vdwg.mxu0
    %v2948 = vpack.c.bf16 %v2864, %v2864
    %2949 = vmatprep.subr.bf16.mxu0 %v1104
    %2950 = vmatpush1.bf16.msra.mxu0 %v1103
    %2951 = vmatprep.subr.bf16.mxu0 %v1108
    %2952 = vmatpush1.bf16.msra.mxu0 %v1107
    %2953 = vmatprep.subr.bf16.mxu0 %v1112
    %2954 = vmatpush1.bf16.msra.mxu0 %v1111
    %2955 = vmatprep.subr.bf16.mxu0 %v1116
    %2956 = vmatpush1.bf16.msra.mxu0 %v1115
    %2957 = vmatprep.subr.bf16.mxu0 %v1120
    %2958 = vmatpush1.bf16.msra.mxu0 %v1119
    %2959 = vmatprep.subr.bf16.mxu0 %v1124
    %2960 = vmatpush1.bf16.msra.mxu0 %v1123
    %2961 = vmatprep.subr.bf16.mxu0 %v1128
    %2962 = vmatpush1.bf16.msra.mxu0 %v1127
    %2963 = vmatprep.subr.bf16.mxu0 %v1132
    %2964 = vmatpush1.bf16.msra.mxu0 %v1131
    %2965 = vmatprep.subr.bf16.mxu0 0
    %2966 = vmatpush1.bf16.msra.mxu0 0
    %2967 = vmatprep.subr.bf16.mxu0 0
    %2968 = vmatpush1.bf16.msra.mxu0 0
    %2969 = vmatprep.subr.bf16.mxu0 0
    %2970 = vmatpush1.bf16.msra.mxu0 0
    %2971 = vmatprep.subr.bf16.mxu0 0
    %2972 = vmatpush1.bf16.msra.mxu0 0
    %2973 = vmatprep.subr.bf16.mxu0 0
    %2974 = vmatpush1.bf16.msra.mxu0 0
    %2975 = vmatprep.subr.bf16.mxu0 0
    %2976 = vmatpush1.bf16.msra.mxu0 0
    %2977 = vmatprep.subr.bf16.mxu0 0
    %2978 = vmatpush1.bf16.msra.mxu0 0
    %2979 = vmatprep.subr.bf16.mxu0 0
    %2980 = vmatpush1.bf16.msra.mxu0 0
    %2981 = vmatprep.mubr.bf16.mxu0 0
    %2982 = vmatmul.mubr.bf16.gmra.mrb[0].mxu0 %v2948
    %v2983 = vpop.f32.mrb[0].mxu0
    %v2984 = vadd.f32 %v2901, %v2983
    %v2985 = vpop.f32.mrb[0].mxu0
    %v2986 = vadd.f32 %v2903, %v2985
    %v2987 = vpop.f32.mrb[0].mxu0
    %v2988 = vpop.f32.mrb[0].mxu0
    %2989 = vdwg.mxu0
    %2990 = vmatprep.subr.bf16.mxu0 %v1106
    %2991 = vmatpush1.bf16.msra.mxu0 %v1105
    %2992 = vmatprep.subr.bf16.mxu0 %v1110
    %2993 = vmatpush1.bf16.msra.mxu0 %v1109
    %2994 = vmatprep.subr.bf16.mxu0 %v1114
    %2995 = vmatpush1.bf16.msra.mxu0 %v1113
    %2996 = vmatprep.subr.bf16.mxu0 %v1118
    %2997 = vmatpush1.bf16.msra.mxu0 %v1117
    %2998 = vmatprep.subr.bf16.mxu0 %v1122
    %2999 = vmatpush1.bf16.msra.mxu0 %v1121
    %3000 = vmatprep.subr.bf16.mxu0 %v1126
    %3001 = vmatpush1.bf16.msra.mxu0 %v1125
    %3002 = vmatprep.subr.bf16.mxu0 %v1130
    %3003 = vmatpush1.bf16.msra.mxu0 %v1129
    %3004 = vmatprep.subr.bf16.mxu0 %v1134
    %3005 = vmatpush1.bf16.msra.mxu0 %v1133
    %3006 = vmatprep.subr.bf16.mxu0 0
    %3007 = vmatpush1.bf16.msra.mxu0 0
    %3008 = vmatprep.subr.bf16.mxu0 0
    %3009 = vmatpush1.bf16.msra.mxu0 0
    %3010 = vmatprep.subr.bf16.mxu0 0
    %3011 = vmatpush1.bf16.msra.mxu0 0
    %3012 = vmatprep.subr.bf16.mxu0 0
    %3013 = vmatpush1.bf16.msra.mxu0 0
    %3014 = vmatprep.subr.bf16.mxu0 0
    %3015 = vmatpush1.bf16.msra.mxu0 0
    %3016 = vmatprep.subr.bf16.mxu0 0
    %3017 = vmatpush1.bf16.msra.mxu0 0
    %3018 = vmatprep.subr.bf16.mxu0 0
    %3019 = vmatpush1.bf16.msra.mxu0 0
    %3020 = vmatprep.subr.bf16.mxu0 0
    %3021 = vmatpush1.bf16.msra.mxu0 0
    %3022 = vmatprep.mubr.bf16.mxu0 0
    %3023 = vmatmul.mubr.bf16.gmra.mrb[0].mxu0 %v2948
    %v3024 = vpop.f32.mrb[0].mxu0
    %v3025 = vadd.f32 %v2942, %v3024
    %v3026 = vpop.f32.mrb[0].mxu0
    %v3027 = vadd.f32 %v2944, %v3026
    %v3028 = vpop.f32.mrb[0].mxu0
    %v3029 = vpop.f32.mrb[0].mxu0
    %3030 = vdwg.mxu0
    %v3031 = vadd.f32 %v2984, %v383
    %v3032 = vadd.f32 %v2986, %v387
    %v3033 = vadd.f32 %v3025, %v391
    %v3034 = vadd.f32 %v3027, %v395
    %v3035 = vmul.f32 %v3031, 0.5
    %v3036 = vtanh.pop %v3035
    %v3037 = vmul.f32 %v3036, 0.5
    %v3038 = vadd.f32 %v3037, 0.5
    %v3039 = vmul.f32 %v3032, 0.5
    %v3040 = vtanh.pop %v3039
    %v3041 = vmul.f32 %v3040, 0.5
    %v3042 = vadd.f32 %v3041, 0.5
    %v3043 = vtanh.pop %v3033
    %v3044 = vmul.f32 %v3034, 0.5
    %v3045 = vtanh.pop %v3044
    %v3046 = vmul.f32 %v3045, 0.5
    %v3047 = vadd.f32 %v3046, 0.5
    %v3048 = vmul.f32 %v3042, %v2753
    %v3049 = vmul.f32 %v3038, %v3043
    %v3050 = vadd.f32 %v3048, %v3049
    %v3051 = vtanh.pop %v3050
    %v3052 = vmul.f32 %v3047, %v3051
    %v3053 = vadd.f32 %v2756, %v3052
    %v3054 = vld [vmem:[#allocation2 + $0xe0] sm:$0xff]
    %v3055 = vld [vmem:[#allocation2 + $0xe8] sm:$0xff]
    %v3056 = vld [vmem:[#allocation2 + $0xf0] sm:$0xff]
    %v3057 = vld [vmem:[#allocation2 + $0xf8] sm:$0xff]
    %3058 = vmatprep.subr.bf16.mxu0 %v533
    %3059 = vmatpush1.bf16.msra.mxu0 %v532
    %3060 = vmatprep.subr.bf16.mxu0 %v537
    %3061 = vmatpush1.bf16.msra.mxu0 %v536
    %3062 = vmatprep.subr.bf16.mxu0 %v541
    %3063 = vmatpush1.bf16.msra.mxu0 %v540
    %3064 = vmatprep.subr.bf16.mxu0 %v545
    %3065 = vmatpush1.bf16.msra.mxu0 %v544
    %3066 = vmatprep.subr.bf16.mxu0 %v549
    %3067 = vmatpush1.bf16.msra.mxu0 %v548
    %3068 = vmatprep.subr.bf16.mxu0 %v553
    %3069 = vmatpush1.bf16.msra.mxu0 %v552
    %3070 = vmatprep.subr.bf16.mxu0 %v557
    %3071 = vmatpush1.bf16.msra.mxu0 %v556
    %3072 = vmatprep.subr.bf16.mxu0 %v561
    %3073 = vmatpush1.bf16.msra.mxu0 %v560
    %3074 = vmatprep.subr.bf16.mxu0 0
    %3075 = vmatpush1.bf16.msra.mxu0 0
    %3076 = vmatprep.subr.bf16.mxu0 0
    %3077 = vmatpush1.bf16.msra.mxu0 0
    %3078 = vmatprep.subr.bf16.mxu0 0
    %3079 = vmatpush1.bf16.msra.mxu0 0
    %3080 = vmatprep.subr.bf16.mxu0 0
    %3081 = vmatpush1.bf16.msra.mxu0 0
    %3082 = vmatprep.subr.bf16.mxu0 0
    %3083 = vmatpush1.bf16.msra.mxu0 0
    %3084 = vmatprep.subr.bf16.mxu0 0
    %3085 = vmatpush1.bf16.msra.mxu0 0
    %3086 = vmatprep.subr.bf16.mxu0 0
    %3087 = vmatpush1.bf16.msra.mxu0 0
    %3088 = vmatprep.subr.bf16.mxu0 0
    %3089 = vmatpush1.bf16.msra.mxu0 0
    %3090 = vmatprep.mubr.bf16.mxu0 0
    %3091 = vmatmul.mubr.bf16.gmra.mrb[0].mxu0 %v2948
    %v3092 = vpop.f32.mrb[0].mxu0
    %v3093 = vadd.f32 0.0, %v3092
    %v3094 = vpop.f32.mrb[0].mxu0
    %v3095 = vadd.f32 0.0, %v3094
    %v3096 = vpop.f32.mrb[0].mxu0
    %v3097 = vpop.f32.mrb[0].mxu0
    %3098 = vdwg.mxu0
    %3099 = vmatprep.subr.bf16.mxu0 %v535
    %3100 = vmatpush1.bf16.msra.mxu0 %v534
    %3101 = vmatprep.subr.bf16.mxu0 %v539
    %3102 = vmatpush1.bf16.msra.mxu0 %v538
    %3103 = vmatprep.subr.bf16.mxu0 %v543
    %3104 = vmatpush1.bf16.msra.mxu0 %v542
    %3105 = vmatprep.subr.bf16.mxu0 %v547
    %3106 = vmatpush1.bf16.msra.mxu0 %v546
    %3107 = vmatprep.subr.bf16.mxu0 %v551
    %3108 = vmatpush1.bf16.msra.mxu0 %v550
    %3109 = vmatprep.subr.bf16.mxu0 %v555
    %3110 = vmatpush1.bf16.msra.mxu0 %v554
    %3111 = vmatprep.subr.bf16.mxu0 %v559
    %3112 = vmatpush1.bf16.msra.mxu0 %v558
    %3113 = vmatprep.subr.bf16.mxu0 %v563
    %3114 = vmatpush1.bf16.msra.mxu0 %v562
    %3115 = vmatprep.subr.bf16.mxu0 0
    %3116 = vmatpush1.bf16.msra.mxu0 0
    %3117 = vmatprep.subr.bf16.mxu0 0
    %3118 = vmatpush1.bf16.msra.mxu0 0
    %3119 = vmatprep.subr.bf16.mxu0 0
    %3120 = vmatpush1.bf16.msra.mxu0 0
    %3121 = vmatprep.subr.bf16.mxu0 0
    %3122 = vmatpush1.bf16.msra.mxu0 0
    %3123 = vmatprep.subr.bf16.mxu0 0
    %3124 = vmatpush1.bf16.msra.mxu0 0
    %3125 = vmatprep.subr.bf16.mxu0 0
    %3126 = vmatpush1.bf16.msra.mxu0 0
    %3127 = vmatprep.subr.bf16.mxu0 0
    %3128 = vmatpush1.bf16.msra.mxu0 0
    %3129 = vmatprep.subr.bf16.mxu0 0
    %3130 = vmatpush1.bf16.msra.mxu0 0
    %3131 = vmatprep.mubr.bf16.mxu0 0
    %3132 = vmatmul.mubr.bf16.gmra.mrb[0].mxu0 %v2948
    %v3133 = vpop.f32.mrb[0].mxu0
    %v3134 = vadd.f32 0.0, %v3133
    %v3135 = vpop.f32.mrb[0].mxu0
    %v3136 = vadd.f32 0.0, %v3135
    %v3137 = vpop.f32.mrb[0].mxu0
    %v3138 = vpop.f32.mrb[0].mxu0
    %3139 = vdwg.mxu0
    %v3140 = vadd.f32 %v3054, %v3093
    %v3141 = vadd.f32 %v3055, %v3095
    %v3142 = vadd.f32 %v3056, %v3134
    %v3143 = vadd.f32 %v3057, %v3136
    %v3144 = vmul.f32 %v3140, 0.5
    %v3145 = vtanh.pop %v3144
    %v3146 = vmul.f32 %v3145, 0.5
    %v3147 = vadd.f32 %v3146, 0.5
    %v3148 = vmul.f32 %v3141, 0.5
    %v3149 = vtanh.pop %v3148
    %v3150 = vmul.f32 %v3149, 0.5
    %v3151 = vadd.f32 %v3150, 0.5
    %v3152 = vtanh.pop %v3142
    %v3153 = vmul.f32 %v3143, 0.5
    %v3154 = vtanh.pop %v3153
    %v3155 = vmul.f32 %v3154, 0.5
    %v3156 = vadd.f32 %v3155, 0.5
    %v3157 = vmul.f32 %v3151, %v2862
    %v3158 = vmul.f32 %v3147, %v3152
    %v3159 = vadd.f32 %v3157, %v3158
    %v3160 = vtanh.pop %v3159
    %v3161 = vmul.f32 %v3156, %v3160
    %v3162 = vpack.c.bf16 %v3052, %v3052
    %3163 = vmatprep.subr.bf16.mxu0 %v829
    %3164 = vmatpush1.bf16.msra.mxu0 %v828
    %3165 = vmatprep.subr.bf16.mxu0 %v833
    %3166 = vmatpush1.bf16.msra.mxu0 %v832
    %3167 = vmatprep.subr.bf16.mxu0 %v837
    %3168 = vmatpush1.bf16.msra.mxu0 %v836
    %3169 = vmatprep.subr.bf16.mxu0 %v841
    %3170 = vmatpush1.bf16.msra.mxu0 %v840
    %3171 = vmatprep.subr.bf16.mxu0 %v845
    %3172 = vmatpush1.bf16.msra.mxu0 %v844
    %3173 = vmatprep.subr.bf16.mxu0 %v849
    %3174 = vmatpush1.bf16.msra.mxu0 %v848
    %3175 = vmatprep.subr.bf16.mxu0 %v853
    %3176 = vmatpush1.bf16.msra.mxu0 %v852
    %3177 = vmatprep.subr.bf16.mxu0 %v857
    %3178 = vmatpush1.bf16.msra.mxu0 %v856
    %3179 = vmatprep.subr.bf16.mxu0 0
    %3180 = vmatpush1.bf16.msra.mxu0 0
    %3181 = vmatprep.subr.bf16.mxu0 0
    %3182 = vmatpush1.bf16.msra.mxu0 0
    %3183 = vmatprep.subr.bf16.mxu0 0
    %3184 = vmatpush1.bf16.msra.mxu0 0
    %3185 = vmatprep.subr.bf16.mxu0 0
    %3186 = vmatpush1.bf16.msra.mxu0 0
    %3187 = vmatprep.subr.bf16.mxu0 0
    %3188 = vmatpush1.bf16.msra.mxu0 0
    %3189 = vmatprep.subr.bf16.mxu0 0
    %3190 = vmatpush1.bf16.msra.mxu0 0
    %3191 = vmatprep.subr.bf16.mxu0 0
    %3192 = vmatpush1.bf16.msra.mxu0 0
    %3193 = vmatprep.subr.bf16.mxu0 0
    %3194 = vmatpush1.bf16.msra.mxu0 0
    %3195 = vmatprep.mubr.bf16.mxu0 0
    %3196 = vmatmul.mubr.bf16.gmra.mrb[0].mxu0 %v3162
    %v3197 = vpop.f32.mrb[0].mxu0
    %v3198 = vadd.f32 0.0, %v3197
    %v3199 = vpop.f32.mrb[0].mxu0
    %v3200 = vadd.f32 0.0, %v3199
    %v3201 = vpop.f32.mrb[0].mxu0
    %v3202 = vpop.f32.mrb[0].mxu0
    %3203 = vdwg.mxu0
    %3204 = vmatprep.subr.bf16.mxu0 %v831
    %3205 = vmatpush1.bf16.msra.mxu0 %v830
    %3206 = vmatprep.subr.bf16.mxu0 %v835
    %3207 = vmatpush1.bf16.msra.mxu0 %v834
    %3208 = vmatprep.subr.bf16.mxu0 %v839
    %3209 = vmatpush1.bf16.msra.mxu0 %v838
    %3210 = vmatprep.subr.bf16.mxu0 %v843
    %3211 = vmatpush1.bf16.msra.mxu0 %v842
    %3212 = vmatprep.subr.bf16.mxu0 %v847
    %3213 = vmatpush1.bf16.msra.mxu0 %v846
    %3214 = vmatprep.subr.bf16.mxu0 %v851
    %3215 = vmatpush1.bf16.msra.mxu0 %v850
    %3216 = vmatprep.subr.bf16.mxu0 %v855
    %3217 = vmatpush1.bf16.msra.mxu0 %v854
    %3218 = vmatprep.subr.bf16.mxu0 %v859
    %3219 = vmatpush1.bf16.msra.mxu0 %v858
    %3220 = vmatprep.subr.bf16.mxu0 0
    %3221 = vmatpush1.bf16.msra.mxu0 0
    %3222 = vmatprep.subr.bf16.mxu0 0
    %3223 = vmatpush1.bf16.msra.mxu0 0
    %3224 = vmatprep.subr.bf16.mxu0 0
    %3225 = vmatpush1.bf16.msra.mxu0 0
    %3226 = vmatprep.subr.bf16.mxu0 0
    %3227 = vmatpush1.bf16.msra.mxu0 0
    %3228 = vmatprep.subr.bf16.mxu0 0
    %3229 = vmatpush1.bf16.msra.mxu0 0
    %3230 = vmatprep.subr.bf16.mxu0 0
    %3231 = vmatpush1.bf16.msra.mxu0 0
    %3232 = vmatprep.subr.bf16.mxu0 0
    %3233 = vmatpush1.bf16.msra.mxu0 0
    %3234 = vmatprep.subr.bf16.mxu0 0
    %3235 = vmatpush1.bf16.msra.mxu0 0
    %3236 = vmatprep.mubr.bf16.mxu0 0
    %3237 = vmatmul.mubr.bf16.gmra.mrb[0].mxu0 %v3162
    %v3238 = vpop.f32.mrb[0].mxu0
    %v3239 = vadd.f32 0.0, %v3238
    %v3240 = vpop.f32.mrb[0].mxu0
    %v3241 = vadd.f32 0.0, %v3240
    %v3242 = vpop.f32.mrb[0].mxu0
    %v3243 = vpop.f32.mrb[0].mxu0
    %3244 = vdwg.mxu0
    %v3245 = vpack.c.bf16 %v3161, %v3161
    %3246 = vmatprep.subr.bf16.mxu0 %v1104
    %3247 = vmatpush1.bf16.msra.mxu0 %v1103
    %3248 = vmatprep.subr.bf16.mxu0 %v1108
    %3249 = vmatpush1.bf16.msra.mxu0 %v1107
    %3250 = vmatprep.subr.bf16.mxu0 %v1112
    %3251 = vmatpush1.bf16.msra.mxu0 %v1111
    %3252 = vmatprep.subr.bf16.mxu0 %v1116
    %3253 = vmatpush1.bf16.msra.mxu0 %v1115
    %3254 = vmatprep.subr.bf16.mxu0 %v1120
    %3255 = vmatpush1.bf16.msra.mxu0 %v1119
    %3256 = vmatprep.subr.bf16.mxu0 %v1124
    %3257 = vmatpush1.bf16.msra.mxu0 %v1123
    %3258 = vmatprep.subr.bf16.mxu0 %v1128
    %3259 = vmatpush1.bf16.msra.mxu0 %v1127
    %3260 = vmatprep.subr.bf16.mxu0 %v1132
    %3261 = vmatpush1.bf16.msra.mxu0 %v1131
    %3262 = vmatprep.subr.bf16.mxu0 0
    %3263 = vmatpush1.bf16.msra.mxu0 0
    %3264 = vmatprep.subr.bf16.mxu0 0
    %3265 = vmatpush1.bf16.msra.mxu0 0
    %3266 = vmatprep.subr.bf16.mxu0 0
    %3267 = vmatpush1.bf16.msra.mxu0 0
    %3268 = vmatprep.subr.bf16.mxu0 0
    %3269 = vmatpush1.bf16.msra.mxu0 0
    %3270 = vmatprep.subr.bf16.mxu0 0
    %3271 = vmatpush1.bf16.msra.mxu0 0
    %3272 = vmatprep.subr.bf16.mxu0 0
    %3273 = vmatpush1.bf16.msra.mxu0 0
    %3274 = vmatprep.subr.bf16.mxu0 0
    %3275 = vmatpush1.bf16.msra.mxu0 0
    %3276 = vmatprep.subr.bf16.mxu0 0
    %3277 = vmatpush1.bf16.msra.mxu0 0
    %3278 = vmatprep.mubr.bf16.mxu0 0
    %3279 = vmatmul.mubr.bf16.gmra.mrb[0].mxu0 %v3245
    %v3280 = vpop.f32.mrb[0].mxu0
    %v3281 = vadd.f32 %v3198, %v3280
    %v3282 = vpop.f32.mrb[0].mxu0
    %v3283 = vadd.f32 %v3200, %v3282
    %v3284 = vpop.f32.mrb[0].mxu0
    %v3285 = vpop.f32.mrb[0].mxu0
    %3286 = vdwg.mxu0
    %3287 = vmatprep.subr.bf16.mxu0 %v1106
    %3288 = vmatpush1.bf16.msra.mxu0 %v1105
    %3289 = vmatprep.subr.bf16.mxu0 %v1110
    %3290 = vmatpush1.bf16.msra.mxu0 %v1109
    %3291 = vmatprep.subr.bf16.mxu0 %v1114
    %3292 = vmatpush1.bf16.msra.mxu0 %v1113
    %3293 = vmatprep.subr.bf16.mxu0 %v1118
    %3294 = vmatpush1.bf16.msra.mxu0 %v1117
    %3295 = vmatprep.subr.bf16.mxu0 %v1122
    %3296 = vmatpush1.bf16.msra.mxu0 %v1121
    %3297 = vmatprep.subr.bf16.mxu0 %v1126
    %3298 = vmatpush1.bf16.msra.mxu0 %v1125
    %3299 = vmatprep.subr.bf16.mxu0 %v1130
    %3300 = vmatpush1.bf16.msra.mxu0 %v1129
    %3301 = vmatprep.subr.bf16.mxu0 %v1134
    %3302 = vmatpush1.bf16.msra.mxu0 %v1133
    %3303 = vmatprep.subr.bf16.mxu0 0
    %3304 = vmatpush1.bf16.msra.mxu0 0
    %3305 = vmatprep.subr.bf16.mxu0 0
    %3306 = vmatpush1.bf16.msra.mxu0 0
    %3307 = vmatprep.subr.bf16.mxu0 0
    %3308 = vmatpush1.bf16.msra.mxu0 0
    %3309 = vmatprep.subr.bf16.mxu0 0
    %3310 = vmatpush1.bf16.msra.mxu0 0
    %3311 = vmatprep.subr.bf16.mxu0 0
    %3312 = vmatpush1.bf16.msra.mxu0 0
    %3313 = vmatprep.subr.bf16.mxu0 0
    %3314 = vmatpush1.bf16.msra.mxu0 0
    %3315 = vmatprep.subr.bf16.mxu0 0
    %3316 = vmatpush1.bf16.msra.mxu0 0
    %3317 = vmatprep.subr.bf16.mxu0 0
    %3318 = vmatpush1.bf16.msra.mxu0 0
    %3319 = vmatprep.mubr.bf16.mxu0 0
    %3320 = vmatmul.mubr.bf16.gmra.mrb[0].mxu0 %v3245
    %v3321 = vpop.f32.mrb[0].mxu0
    %v3322 = vadd.f32 %v3239, %v3321
    %v3323 = vpop.f32.mrb[0].mxu0
    %v3324 = vadd.f32 %v3241, %v3323
    %v3325 = vpop.f32.mrb[0].mxu0
    %v3326 = vpop.f32.mrb[0].mxu0
    %3327 = vdwg.mxu0
    %v3328 = vadd.f32 %v3281, %v383
    %v3329 = vadd.f32 %v3283, %v387
    %v3330 = vadd.f32 %v3322, %v391
    %v3331 = vadd.f32 %v3324, %v395
    %v3332 = vmul.f32 %v3328, 0.5
    %v3333 = vtanh.pop %v3332
    %v3334 = vmul.f32 %v3333, 0.5
    %v3335 = vadd.f32 %v3334, 0.5
    %v3336 = vmul.f32 %v3329, 0.5
    %v3337 = vtanh.pop %v3336
    %v3338 = vmul.f32 %v3337, 0.5
    %v3339 = vadd.f32 %v3338, 0.5
    %v3340 = vtanh.pop %v3330
    %v3341 = vmul.f32 %v3331, 0.5
    %v3342 = vtanh.pop %v3341
    %v3343 = vmul.f32 %v3342, 0.5
    %v3344 = vadd.f32 %v3343, 0.5
    %v3345 = vmul.f32 %v3339, %v3050
    %v3346 = vmul.f32 %v3335, %v3340
    %v3347 = vadd.f32 %v3345, %v3346
    %v3348 = vtanh.pop %v3347
    %v3349 = vmul.f32 %v3344, %v3348
    %v3350 = vadd.f32 %v3053, %v3349
    %v3351 = vld [vmem:[#allocation8] sm:$0xff]
    %v3352 = vld [vmem:[#allocation8 + $0x8] sm:$0xff]
    %v3353 = vld [vmem:[#allocation8 + $0x10] sm:$0xff]
    %v3354 = vld [vmem:[#allocation8 + $0x18] sm:$0xff]
    %v3355 = vld [vmem:[#allocation8 + $0x20] sm:$0xff]
    %v3356 = vld [vmem:[#allocation8 + $0x28] sm:$0xff]
    %v3357 = vld [vmem:[#allocation8 + $0x30] sm:$0xff]
    %v3358 = vld [vmem:[#allocation8 + $0x38] sm:$0xff]
    %v3359 = vld [vmem:[#allocation8 + $0x40] sm:$0xff]
    %v3360 = vld [vmem:[#allocation8 + $0x48] sm:$0xff]
    %v3361 = vld [vmem:[#allocation8 + $0x50] sm:$0xff]
    %v3362 = vld [vmem:[#allocation8 + $0x58] sm:$0xff]
    %v3363 = vld [vmem:[#allocation8 + $0x60] sm:$0xff]
    %v3364 = vld [vmem:[#allocation8 + $0x68] sm:$0xff]
    %v3365 = vld [vmem:[#allocation8 + $0x70] sm:$0xff]
    %v3366 = vld [vmem:[#allocation8 + $0x78] sm:$0xff]
    %v3367 = vld [vmem:[#allocation8 + $0x80] sm:$0xff]
    %v3368 = vld [vmem:[#allocation8 + $0x88] sm:$0xff]
    %v3369 = vld [vmem:[#allocation8 + $0x90] sm:$0xff]
    %v3370 = vld [vmem:[#allocation8 + $0x98] sm:$0xff]
    %v3371 = vld [vmem:[#allocation8 + $0xa0] sm:$0xff]
    %v3372 = vld [vmem:[#allocation8 + $0xa8] sm:$0xff]
    %v3373 = vld [vmem:[#allocation8 + $0xb0] sm:$0xff]
    %v3374 = vld [vmem:[#allocation8 + $0xb8] sm:$0xff]
    %v3375 = vld [vmem:[#allocation8 + $0xc0] sm:$0xff]
    %v3376 = vld [vmem:[#allocation8 + $0xc8] sm:$0xff]
    %v3377 = vld [vmem:[#allocation8 + $0xd0] sm:$0xff]
    %v3378 = vld [vmem:[#allocation8 + $0xd8] sm:$0xff]
    %v3379 = vld [vmem:[#allocation8 + $0xe0] sm:$0xff]
    %v3380 = vld [vmem:[#allocation8 + $0xe8] sm:$0xff]
    %v3381 = vld [vmem:[#allocation8 + $0xf0] sm:$0xff]
    %v3382 = vld [vmem:[#allocation8 + $0xf8] sm:$0xff]
    %v3383 = vld [vmem:[%s8] sm:$0x1]
    %v3385 = vlaneseq
    %v3386 = vshrl.u32 %v3385, 7
    %v3387 = vsub.s32 0, %v3386
    %v3388 = vrot.slane %v3383, %v3387
    %3390 = vmatprep.subr.mxu0 0.0
    %3391 = vmatpush1.msra.mxu0 %v3351
    %3392 = vmatprep.subr.mxu0 0.0
    %3393 = vmatpush1.msra.mxu0 %v3352
    %3394 = vmatprep.subr.mxu0 0.0
    %3395 = vmatpush1.msra.mxu0 %v3353
    %3396 = vmatprep.subr.mxu0 0.0
    %3397 = vmatpush1.msra.mxu0 %v3354
    %3398 = vmatprep.subr.mxu0 0.0
    %3399 = vmatpush1.msra.mxu0 %v3355
    %3400 = vmatprep.subr.mxu0 0.0
    %3401 = vmatpush1.msra.mxu0 %v3356
    %3402 = vmatprep.subr.mxu0 0.0
    %3403 = vmatpush1.msra.mxu0 %v3357
    %3404 = vmatprep.subr.mxu0 0.0
    %3405 = vmatpush1.msra.mxu0 %v3358
    %3406 = vmatprep.subr.mxu0 0.0
    %3407 = vmatpush1.msra.mxu0 %v3359
    %3408 = vmatprep.subr.mxu0 0.0
    %3409 = vmatpush1.msra.mxu0 %v3360
    %3410 = vmatprep.subr.mxu0 0.0
    %3411 = vmatpush1.msra.mxu0 %v3361
    %3412 = vmatprep.subr.mxu0 0.0
    %3413 = vmatpush1.msra.mxu0 %v3362
    %3414 = vmatprep.subr.mxu0 0.0
    %3415 = vmatpush1.msra.mxu0 %v3363
    %3416 = vmatprep.subr.mxu0 0.0
    %3417 = vmatpush1.msra.mxu0 %v3364
    %3418 = vmatprep.subr.mxu0 0.0
    %3419 = vmatpush1.msra.mxu0 %v3365
    %3420 = vmatprep.subr.mxu0 0.0
    %3421 = vmatpush1.msra.mxu0 %v3366
    %3422 = vmatprep.subr.mxu0 0.0
    %3423 = vmatpush1.msra.mxu0 %v3367
    %3424 = vmatprep.subr.mxu0 0.0
    %3425 = vmatpush1.msra.mxu0 %v3368
    %3426 = vmatprep.subr.mxu0 0.0
    %3427 = vmatpush1.msra.mxu0 %v3369
    %3428 = vmatprep.subr.mxu0 0.0
    %3429 = vmatpush1.msra.mxu0 %v3370
    %3430 = vmatprep.subr.mxu0 0.0
    %3431 = vmatpush1.msra.mxu0 %v3371
    %3432 = vmatprep.subr.mxu0 0.0
    %3433 = vmatpush1.msra.mxu0 %v3372
    %3434 = vmatprep.subr.mxu0 0.0
    %3435 = vmatpush1.msra.mxu0 %v3373
    %3436 = vmatprep.subr.mxu0 0.0
    %3437 = vmatpush1.msra.mxu0 %v3374
    %3438 = vmatprep.subr.mxu0 0.0
    %3439 = vmatpush1.msra.mxu0 %v3375
    %3440 = vmatprep.subr.mxu0 0.0
    %3441 = vmatpush1.msra.mxu0 %v3376
    %3442 = vmatprep.subr.mxu0 0.0
    %3443 = vmatpush1.msra.mxu0 %v3377
    %3444 = vmatprep.subr.mxu0 0.0
    %3445 = vmatpush1.msra.mxu0 %v3378
    %3446 = vmatprep.subr.mxu0 0.0
    %3447 = vmatpush1.msra.mxu0 %v3379
    %3448 = vmatprep.subr.mxu0 0.0
    %3449 = vmatpush1.msra.mxu0 %v3380
    %3450 = vmatprep.subr.mxu0 0.0
    %3451 = vmatpush1.msra.mxu0 %v3381
    %3452 = vmatprep.subr.mxu0 0.0
    %3453 = vmatpush1.msra.mxu0 %v3382
    %3454 = vmatprep.mubr.f32.mxu0 %v3350
    %3455 = vmatmul.mubr.f32.gmra.mrb[0].mxu0 %v3349
    %v3456 = vpop.f32.mrb[0].mxu0
    %v3457 = vadd.f32 %v3388, %v3456
    %v3458 = vpop.f32.mrb[0].mxu0
    %3459 = vdwg.mxu0
    %3460 = vst [vmem:[%s9] sm:$0xff] %v3457
    // Predicated region
    $region54: #{corner_lstm_pallas.1} parent=1 // pred_check
      _
    $region55: #{corner_lstm_pallas.1} parent=1 // pred_check_branch
      %3462 = sbr.rel (0) target = $region57
    $region56: #{corner_lstm_pallas.1} parent=1 // pred_region
      _
    $region57: #{corner_lstm_pallas.1} parent=1 // pred_fallthru
      _
    // Predicated region
    $region58: #{corner_lstm_pallas.1} parent=1 // pred_check
      _
    $region59: #{corner_lstm_pallas.1} parent=1 // pred_check_branch
      %3464 = sbr.rel (0) target = $region61
    $region60: #{corner_lstm_pallas.1} parent=1 // pred_region
      _
    $region61: #{corner_lstm_pallas.1} parent=1 // pred_fallthru
      _
    %3465 = vsyncpa [#allocation4], 1
    %3466 = vsyncpa [#allocation6], 1
    %3467 = vsyncpa [#allocation9], 1

</llo_original>
